<compile_context>
chip_gen: v7x
topology: tpu7x:2x2x1
jax: 0.10.0
libtpu: 0.0.40
codegen_flags: <defaults>
</compile_context>

<pallas_src>
import functools

import jax
import jax.numpy as jnp
from jax.experimental import pallas as pl
from jax.experimental.pallas import tpu as pltpu


def _softplus(v):
    # Stable softplus; identical formula in kernel wrapper and reference.
    return jnp.maximum(v, 0.0) + jnp.log(1.0 + jnp.exp(-jnp.abs(v)))


def _eprl_kernel(x_ref, w1_ref, b1_ref, w2_ref, b2_ref, w3_ref, b3_ref,
                 zpnT_ref, zpnm_ref, wm_ref, bm_ref, alpha_ref,
                 z_ref, att_ref, comb_ref):
    """One grid step == TB batch elements (TB = x_ref.shape[0])."""
    f32 = jnp.float32
    TB, S, xd = x_ref.shape
    Z = w3_ref.shape[1]

    # ---- encoder MLP: Linear -> ReLU -> (Dropout=id) -> Linear -> ReLU -> (Dropout=id) -> Linear
    #      All TB*S tokens per Linear as ONE big MXU matmul.
    x = x_ref[...].reshape(TB * S, xd)
    h = jnp.maximum(jnp.dot(x, w1_ref[...], preferred_element_type=f32) + b1_ref[...], 0.0)
    h = jnp.maximum(jnp.dot(h, w2_ref[...], preferred_element_type=f32) + b2_ref[...], 0.0)
    z = jnp.dot(h, w3_ref[...], preferred_element_type=f32) + b3_ref[...]       # (TB*S, Z)
    z3 = z.reshape(TB, S, Z)
    z_ref[...] = z3

    # ---- F.normalize(z, dim=1): per-(batch, feature) L2 norm over the token axis S.
    #      Segmented per batch element so folding B into one step never mixes batches.
    col_nrm = jnp.sqrt(jnp.sum(z3 * z3, axis=1, keepdims=True))                 # (TB, 1, Z)
    z_norm = z3 * pl.reciprocal(jnp.maximum(col_nrm, 1e-12), approx=False)      # (TB, S, Z)
    zbar = jnp.mean(z_norm, axis=1)                                             # (TB, Z)

    # ---- att: (matmul over Z then mean over S) == <mean_s z_norm, z_proxy_norm>.
    #      z_proxy_norm is batch-invariant and precomputed in the wrapper; here it is a
    #      single MXU (TB, Z) @ (Z, NC*M) matvec.  att_mean uses the precomputed
    #      per-class sample mean (mean commutes with the linear map) -> tiny MXU dot.
    att2 = jnp.dot(zbar, zpnT_ref[...], preferred_element_type=f32)             # (TB, NC*M)
    att_ref[0] = att2
    att_mean = jnp.dot(zbar, zpnm_ref[...], preferred_element_type=f32)         # (TB, NC)

    # ---- pseudo-label path
    e = jnp.exp(att_mean - jnp.max(att_mean, axis=1, keepdims=True))
    p_att = e * pl.reciprocal(jnp.sum(e, axis=1, keepdims=True), approx=False)  # (TB, NC)

    z_mean = jnp.mean(z_norm, axis=2)                                           # (TB, S)
    ez = jnp.exp(z_mean - jnp.max(z_mean, axis=1, keepdims=True))
    p_feat = ez * pl.reciprocal(jnp.sum(ez, axis=1, keepdims=True), approx=False)
    p_feat = jnp.maximum(p_feat, 0.0)                        # mlp_2d leading ReLU
    feat = jnp.dot(p_feat, wm_ref[...], preferred_element_type=f32) + bm_ref[...]   # (TB, NC)
    feat = jnp.maximum(feat, 0.0)                            # Dropout=id, trailing ReLU

    alpha = alpha_ref[0, 0]
    comb_ref[0] = alpha * p_att + (1.0 - alpha) * feat                          # (TB, NC)


def _num_megacore_tcs():
    """2 for chips with two TensorCores behind one device (v4/v5p/v7x), else 1."""
    try:
        kind = jax.devices()[0].device_kind.lower()
    except Exception:
        return 1
    return 2 if any(tag in kind for tag in ("v4", "v5p", "v7")) else 1


def _eprl_pallas_core(x, w1, b1, w2, b2, w3, b3, proxies, eps, wm_t, bm, alpha):
    B, S, xd = x.shape
    z2 = w1.shape[1]
    zd = w3.shape[1]
    NC, M, _ = eps.shape
    NCM = NC * M

    # ---- hoisted batch-invariant proxy math (computed once per call in XLA,
    #      not once per grid step inside the kernel).
    mu = proxies[:, :zd]
    sigma = _softplus(proxies[:, zd:])
    zp = mu[:, None, :] + sigma[:, None, :] * eps                               # (NC, M, Z)
    zp_nrm = jnp.maximum(jnp.sqrt(jnp.sum(zp * zp, axis=1, keepdims=True)), 1e-12)
    zpn = zp / zp_nrm                                                           # (NC, M, Z)
    zpnT = jnp.transpose(zpn, (2, 0, 1)).reshape(zd, NCM)                       # (Z, NC*M)
    zpn_meanT = jnp.transpose(jnp.mean(zpn, axis=1))                            # (Z, NC)

    b1r = b1.reshape(1, z2)
    b2r = b2.reshape(1, z2)
    b3r = b3.reshape(1, zd)
    wm = jnp.transpose(wm_t)                                                    # (S, NC)
    bmr = bm.reshape(1, NC)
    alpha11 = jnp.asarray(alpha, jnp.float32).reshape(1, 1)

    # ---- grid sizing: whole batch in one step on single-TC chips; >=2 steps on
    #      megacore chips so both TensorCores get work.  Resident footprint < 1 MiB.
    n_tc = _num_megacore_tcs()
    nsteps = min(B, n_tc) if n_tc > 1 else 1
    while B % nsteps:                                  # keep TB an exact divisor of B
        nsteps += 1
    TB = B // nsteps

    grid_spec = pltpu.PrefetchScalarGridSpec(
        num_scalar_prefetch=0,
        grid=(nsteps,),
        in_specs=[
            pl.BlockSpec((TB, S, xd), lambda i: (i, 0, 0)),      # x (per-step batch block)
            pl.BlockSpec((xd, z2), lambda i: (0, 0)),            # encoder weights/biases:
            pl.BlockSpec((1, z2), lambda i: (0, 0)),             #   constant index_maps ->
            pl.BlockSpec((z2, z2), lambda i: (0, 0)),            #   fetched once, resident
            pl.BlockSpec((1, z2), lambda i: (0, 0)),             #   in VMEM across steps
            pl.BlockSpec((z2, zd), lambda i: (0, 0)),
            pl.BlockSpec((1, zd), lambda i: (0, 0)),
            pl.BlockSpec((zd, NCM), lambda i: (0, 0)),           # precomputed z_proxy_norm^T
            pl.BlockSpec((zd, NC), lambda i: (0, 0)),            # its per-class sample mean
            pl.BlockSpec((S, NC), lambda i: (0, 0)),             # mlp_2d weight (S, NC)
            pl.BlockSpec((1, NC), lambda i: (0, 0)),             # mlp_2d bias
            pl.BlockSpec(memory_space=pltpu.MemorySpace.SMEM),   # alpha scalar (1, 1)
        ],
        out_specs=[
            pl.BlockSpec((TB, S, zd), lambda i: (i, 0, 0)),      # z
            pl.BlockSpec((1, TB, NCM), lambda i: (i, 0, 0)),     # att, lane-dense (NC*M lanes)
            pl.BlockSpec((1, TB, NC), lambda i: (i, 0, 0)),      # pseudo_labels_combined
        ],
    )
    out_shape = (
        jax.ShapeDtypeStruct((B, S, zd), jnp.float32),
        jax.ShapeDtypeStruct((nsteps, TB, NCM), jnp.float32),
        jax.ShapeDtypeStruct((nsteps, TB, NC), jnp.float32),
    )
    z, att_flat, comb = pl.pallas_call(
        _eprl_kernel,
        out_shape=out_shape,
        grid_spec=grid_spec,
        compiler_params=pltpu.CompilerParams(dimension_semantics=("parallel",)),
    )(x, w1, b1r, w2, b2r, w3, b3r, zpnT, zpn_meanT, wm, bmr, alpha11)

    att = att_flat.reshape(B, NC, M)       # free reshapes in XLA (nsteps*TB == B)
    combined = comb.reshape(B, NC)
    return z, att, combined


def eprl_forward(x, params, eps_proxy, *, self_topk=100):
    """EPRL.forward in eval mode -> (mu_topk, sigma_topk, proxy_loss, z_topk, entropy_loss)."""
    (w1, b1, w2, b2, w3, b3, proxies, wm_t, bm, alpha) = params
    B = x.shape[0]
    zd = w3.shape[1]
    NC, M, _ = eps_proxy.shape

    z, att, combined = _eprl_pallas_core(x, w1, b1, w2, b2, w3, b3,
                                         proxies, eps_proxy, wm_t, bm, alpha)

    # TODO(synk): the PyTorch eval path filters rows with confidence>0.5, a python-dict label
    # lookup and a variable-length masked_select; that is data-dependent-shape control flow
    # with no static-shape Pallas/JAX equivalent.  We implement the only case in which the
    # original code runs without error (all rows kept, identity proxies_dict): proxy = argmax.
    labels = jnp.argmax(combined, axis=1)                       # (B,)

    pos = jnp.take_along_axis(att, labels[:, None, None], axis=1)[:, 0, :]          # (B, M)
    cls = jnp.arange(NC)
    keyed = jnp.where(cls[None, :] == labels[:, None], NC, cls[None, :])
    neg_order = jnp.argsort(keyed, axis=1)[:, : NC - 1]                             # (B, NC-1)
    neg = jnp.take_along_axis(att, neg_order[:, :, None], axis=1).reshape(B, (NC - 1) * M)

    pos_mean = jnp.mean(jax.lax.top_k(pos, self_topk)[0], axis=1)
    neg_mean = jnp.mean(jax.lax.top_k(neg, self_topk)[0], axis=1)
    proxy_loss = jnp.mean(jnp.exp(-pos_mean + neg_mean))

    p = jax.nn.softmax(combined, axis=1)
    logp = jax.nn.log_softmax(combined, axis=1)
    entropy_loss = jnp.mean(-jnp.sum(p * logp, axis=1))

    mu_proxy = proxies[:, :zd]
    sigma_proxy = _softplus(proxies[:, zd:])
    mu_topk = jnp.broadcast_to(mu_proxy[None], (B, NC, zd))
    sigma_topk = jnp.broadcast_to(sigma_proxy[None], (B, NC, zd))
    return mu_topk, sigma_topk, proxy_loss, z, entropy_loss


def eprl_forward_ref(x, params, eps_proxy, *, self_topk=100):
    """Plain-JAX reference mirroring the PyTorch eval forward (full 4-D att tensor)."""
    (w1, b1, w2, b2, w3, b3, proxies, wm_t, bm, alpha) = params
    hp = jax.lax.Precision.HIGHEST
    B, S, _ = x.shape
    zd = w3.shape[1]
    NC, M, _ = eps_proxy.shape

    h = jnp.maximum(jnp.einsum('bsi,io->bso', x, w1, precision=hp) + b1, 0.0)
    h = jnp.maximum(jnp.einsum('bsi,io->bso', h, w2, precision=hp) + b2, 0.0)
    z = jnp.einsum('bsi,io->bso', h, w3, precision=hp) + b3                  # (B, S, Z)

    mu_proxy = proxies[:, :zd]
    sigma_proxy = _softplus(proxies[:, zd:])
    z_proxy = mu_proxy[:, None, :] + sigma_proxy[:, None, :] * eps_proxy     # (NC, M, Z)

    z_norm = z / jnp.maximum(jnp.sqrt(jnp.sum(z * z, axis=1, keepdims=True)), 1e-12)
    zp_norm = z_proxy / jnp.maximum(
        jnp.sqrt(jnp.sum(z_proxy * z_proxy, axis=1, keepdims=True)), 1e-12)

    att4 = jnp.einsum('bsd,cmd->bcsm', z_norm, zp_norm, precision=hp)        # (B, NC, S, M)
    att = jnp.mean(jnp.transpose(att4, (0, 2, 1, 3)), axis=1)                # (B, NC, M)

    att_mean = jnp.mean(att, axis=2)                                         # (B, NC)
    z_mean = jnp.mean(z_norm, axis=2)                                        # (B, S)
    p_att = jax.nn.softmax(att_mean, axis=1)
    p_feat = jnp.maximum(jax.nn.softmax(z_mean, axis=1), 0.0)
    feat = jnp.maximum(jnp.einsum('bs,cs->bc', p_feat, wm_t, precision=hp) + bm[None, :], 0.0)
    combined = alpha * p_att + (1 - alpha) * feat

    labels = jnp.argmax(combined, axis=1)
    pos = jnp.take_along_axis(att, labels[:, None, None], axis=1)[:, 0, :]
    cls = jnp.arange(NC)
    keyed = jnp.where(cls[None, :] == labels[:, None], NC, cls[None, :])
    neg_order = jnp.argsort(keyed, axis=1)[:, : NC - 1]
    neg = jnp.take_along_axis(att, neg_order[:, :, None], axis=1).reshape(B, (NC - 1) * M)
    pos_mean = jnp.mean(jax.lax.top_k(pos, self_topk)[0], axis=1)
    neg_mean = jnp.mean(jax.lax.top_k(neg, self_topk)[0], axis=1)
    proxy_loss = jnp.mean(jnp.exp(-pos_mean + neg_mean))

    p = jax.nn.softmax(combined, axis=1)
    logp = jax.nn.log_softmax(combined, axis=1)
    entropy_loss = jnp.mean(-jnp.sum(p * logp, axis=1))

    mu_topk = jnp.broadcast_to(mu_proxy[None], (B, NC, zd))
    sigma_topk = jnp.broadcast_to(sigma_proxy[None], (B, NC, zd))
    return mu_topk, sigma_topk, proxy_loss, z, entropy_loss


if __name__ == "__main__":
    # S=144 is implied by the module's mlp_2d = Linear(144, num_classes) branch.
    # z_dim / num_classes / sample_num are constructor args; chosen small & lane-aligned.
    # sample_num >= 100 so the forward's hard-coded topk=100 is well-defined; num_classes=2
    # so the module's proxies_dict {'0':0,'1':1} lookup is the identity.
    B, S, X_DIM = 2, 144, 32
    Z_DIM, NC, SAMPLE_NUM = 128, 2, 128

    key = jax.random.PRNGKey(0)
    ks = jax.random.split(key, 11)
    x = jax.random.normal(ks[0], (B, S, X_DIM), jnp.float32)

    # Deterministic synthetic parameters (no checkpoint).  Encoder Linear weights are stored
    # pre-transposed (in, out); mlp_2d weight is kept in torch layout (NC, S).
    w1 = 0.05 * jax.random.normal(ks[1], (X_DIM, 2 * Z_DIM), jnp.float32)
    b1 = 0.05 * jax.random.normal(ks[2], (2 * Z_DIM,), jnp.float32)
    w2 = 0.05 * jax.random.normal(ks[3], (2 * Z_DIM, 2 * Z_DIM), jnp.float32)
    b2 = 0.05 * jax.random.normal(ks[4], (2 * Z_DIM,), jnp.float32)
    w3 = 0.05 * jax.random.normal(ks[5], (2 * Z_DIM, Z_DIM), jnp.float32)
    b3 = 0.05 * jax.random.normal(ks[6], (Z_DIM,), jnp.float32)
    proxies = 0.1 * jax.random.normal(ks[7], (NC, 2 * Z_DIM), jnp.float32)   # xavier-style
    wm_t = 0.05 * jax.random.normal(ks[8], (NC, S), jnp.float32)
    bm = 0.05 * jax.random.normal(ks[9], (NC,), jnp.float32)
    alpha = jnp.float32(0.5)
    # Eval-mode gaussian_noise(seed): fixed standard-normal noise, passed explicitly.
    eps_proxy = jax.random.normal(ks[10], (NC, SAMPLE_NUM, Z_DIM), jnp.float32)

    params = (w1, b1, w2, b2, w3, b3, proxies, wm_t, bm, alpha)

    fwd = jax.jit(functools.partial(eprl_forward, self_topk=100))
    outs = jax.block_until_ready(fwd(x, params, eps_proxy))
    refs = eprl_forward_ref(x, params, eps_proxy, self_topk=100)

    names = ("mu_topk", "sigma_topk", "proxy_loss", "z_topk", "entropy_loss")
    for name, o, r in zip(names, outs, refs):
        assert o.shape == r.shape, f"{name}: shape {o.shape} vs {r.shape}"
        err = jnp.max(jnp.abs(o - r))
        assert jnp.allclose(o, r, atol=5e-5, rtol=5e-5), f"{name}: max abs err {err:.3e}"

    print("KERNEL_OK")
</pallas_src>

<mosaic_0001>
module attributes {stable_mosaic.version = 11 : i64} {
  func.func @_eprl_kernel(%arg0: i32, %arg1: memref<2x144x32xf32, #tpu.memory_space<vmem>>, %arg2: memref<32x256xf32, #tpu.memory_space<vmem>>, %arg3: memref<1x256xf32, #tpu.memory_space<vmem>>, %arg4: memref<256x256xf32, #tpu.memory_space<vmem>>, %arg5: memref<1x256xf32, #tpu.memory_space<vmem>>, %arg6: memref<256x128xf32, #tpu.memory_space<vmem>>, %arg7: memref<1x128xf32, #tpu.memory_space<vmem>>, %arg8: memref<128x256xf32, #tpu.memory_space<vmem>>, %arg9: memref<128x2xf32, #tpu.memory_space<vmem>>, %arg10: memref<144x2xf32, #tpu.memory_space<vmem>>, %arg11: memref<1x2xf32, #tpu.memory_space<vmem>>, %arg12: memref<1x1xf32, #tpu.memory_space<smem>>, %arg13: memref<2x144x128xf32, #tpu.memory_space<vmem>>, %arg14: memref<1x2x256xf32, #tpu.memory_space<vmem>>, %arg15: memref<1x2x2xf32, #tpu.memory_space<vmem>>) attributes {dimension_semantics = [#tpu.dimension_semantics<parallel>], iteration_bounds = array<i64: 1>, scalar_prefetch = 0 : i64, scratch_operands = 0 : i64, tpu.core_type = #tpu.core_type<tc>, window_params = [{transform_indices = @transform_0, window_bounds = array<i64: 2, 144, 32>}, {pipeline_mode = #tpu.pipeline_mode<synchronous>, transform_indices = @transform_1, window_bounds = array<i64: 32, 256>}, {pipeline_mode = #tpu.pipeline_mode<synchronous>, transform_indices = @transform_2, window_bounds = array<i64: 1, 256>}, {pipeline_mode = #tpu.pipeline_mode<synchronous>, transform_indices = @transform_3, window_bounds = array<i64: 256, 256>}, {pipeline_mode = #tpu.pipeline_mode<synchronous>, transform_indices = @transform_4, window_bounds = array<i64: 1, 256>}, {pipeline_mode = #tpu.pipeline_mode<synchronous>, transform_indices = @transform_5, window_bounds = array<i64: 256, 128>}, {pipeline_mode = #tpu.pipeline_mode<synchronous>, transform_indices = @transform_6, window_bounds = array<i64: 1, 128>}, {pipeline_mode = #tpu.pipeline_mode<synchronous>, transform_indices = @transform_7, window_bounds = array<i64: 128, 256>}, {pipeline_mode = #tpu.pipeline_mode<synchronous>, transform_indices = @transform_8, window_bounds = array<i64: 128, 2>}, {pipeline_mode = #tpu.pipeline_mode<synchronous>, transform_indices = @transform_9, window_bounds = array<i64: 144, 2>}, {pipeline_mode = #tpu.pipeline_mode<synchronous>, transform_indices = @transform_10, window_bounds = array<i64: 1, 2>}, {transform_indices = @transform_11, window_bounds = array<i64: 1, 1>}, {transform_indices = @transform_12, window_bounds = array<i64: 2, 144, 128>}, {transform_indices = @transform_13, window_bounds = array<i64: 1, 2, 256>}, {transform_indices = @transform_14, window_bounds = array<i64: 1, 2, 2>}]} {
    %c0 = arith.constant 0 : index
    %c0_0 = arith.constant 0 : index
    %c0_1 = arith.constant 0 : index
    %0 = vector.load %arg1[%c0, %c0_0, %c0_1] : memref<2x144x32xf32, #tpu.memory_space<vmem>>, vector<2x144x32xf32>
    %1 = vector.shape_cast %0 : vector<2x144x32xf32> to vector<288x32xf32>
    %c0_2 = arith.constant 0 : index
    %c0_3 = arith.constant 0 : index
    %2 = vector.load %arg2[%c0_2, %c0_3] : memref<32x256xf32, #tpu.memory_space<vmem>>, vector<32x256xf32>
    %cst = arith.constant dense<0.000000e+00> : vector<288x256xf32>
    %3 = tpu.matmul %1, %2, %cst {dimension_numbers = #tpu.dot_dimension_numbers<[1], [0], [0], [1], [0, 0, 1, 1], [], []>} : vector<288x32xf32>, vector<32x256xf32>, vector<288x256xf32> -> vector<288x256xf32>
    %c0_4 = arith.constant 0 : index
    %c0_5 = arith.constant 0 : index
    %4 = vector.load %arg3[%c0_4, %c0_5] : memref<1x256xf32, #tpu.memory_space<vmem>>, vector<1x256xf32>
    %5 = vector.broadcast %4 : vector<1x256xf32> to vector<288x256xf32>
    %6 = arith.addf %3, %5 : vector<288x256xf32>
    %cst_6 = arith.constant 0.000000e+00 : f32
    %7 = vector.broadcast %cst_6 : f32 to vector<288x256xf32>
    %8 = arith.maximumf %6, %7 : vector<288x256xf32>
    %c0_7 = arith.constant 0 : index
    %c0_8 = arith.constant 0 : index
    %9 = vector.load %arg4[%c0_7, %c0_8] : memref<256x256xf32, #tpu.memory_space<vmem>>, vector<256x256xf32>
    %cst_9 = arith.constant dense<0.000000e+00> : vector<288x256xf32>
    %10 = tpu.matmul %8, %9, %cst_9 {dimension_numbers = #tpu.dot_dimension_numbers<[1], [0], [0], [1], [0, 0, 1, 1], [], []>} : vector<288x256xf32>, vector<256x256xf32>, vector<288x256xf32> -> vector<288x256xf32>
    %c0_10 = arith.constant 0 : index
    %c0_11 = arith.constant 0 : index
    %11 = vector.load %arg5[%c0_10, %c0_11] : memref<1x256xf32, #tpu.memory_space<vmem>>, vector<1x256xf32>
    %12 = vector.broadcast %11 : vector<1x256xf32> to vector<288x256xf32>
    %13 = arith.addf %10, %12 : vector<288x256xf32>
    %cst_12 = arith.constant 0.000000e+00 : f32
    %14 = vector.broadcast %cst_12 : f32 to vector<288x256xf32>
    %15 = arith.maximumf %13, %14 : vector<288x256xf32>
    %c0_13 = arith.constant 0 : index
    %c0_14 = arith.constant 0 : index
    %16 = vector.load %arg6[%c0_13, %c0_14] : memref<256x128xf32, #tpu.memory_space<vmem>>, vector<256x128xf32>
    %cst_15 = arith.constant dense<0.000000e+00> : vector<288x128xf32>
    %17 = tpu.matmul %15, %16, %cst_15 {dimension_numbers = #tpu.dot_dimension_numbers<[1], [0], [0], [1], [0, 0, 1, 1], [], []>} : vector<288x256xf32>, vector<256x128xf32>, vector<288x128xf32> -> vector<288x128xf32>
    %c0_16 = arith.constant 0 : index
    %c0_17 = arith.constant 0 : index
    %18 = vector.load %arg7[%c0_16, %c0_17] : memref<1x128xf32, #tpu.memory_space<vmem>>, vector<1x128xf32>
    %19 = vector.broadcast %18 : vector<1x128xf32> to vector<288x128xf32>
    %20 = arith.addf %17, %19 : vector<288x128xf32>
    %21 = vector.shape_cast %20 : vector<288x128xf32> to vector<2x144x128xf32>
    %c0_18 = arith.constant 0 : index
    %c0_19 = arith.constant 0 : index
    %c0_20 = arith.constant 0 : index
    %22 = vector.load %arg13[%c0_18, %c0_19, %c0_20] : memref<2x144x128xf32, #tpu.memory_space<vmem>>, vector<2x144x128xf32>
    tpu.vector_store %arg13[%c0_18, %c0_19, %c0_20], %21 {strides = array<i32>} : memref<2x144x128xf32, #tpu.memory_space<vmem>>, vector<2x144x128xf32>,
    %23 = arith.mulf %21, %21 : vector<2x144x128xf32>
    %cst_21 = arith.constant dense<0.000000e+00> : vector<2x128xf32>
    %24 = vector.multi_reduction <add>, %23, %cst_21 [1] : vector<2x144x128xf32> to vector<2x128xf32>
    %25 = vector.shape_cast %24 : vector<2x128xf32> to vector<2x1x128xf32>
    %26 = math.sqrt %25 : vector<2x1x128xf32>
    %cst_22 = arith.constant 9.99999996E-13 : f32
    %27 = vector.broadcast %cst_22 : f32 to vector<2x1x128xf32>
    %28 = arith.maximumf %26, %27 : vector<2x1x128xf32>
    %29 = tpu.reciprocal %28 : vector<2x1x128xf32> -> vector<2x1x128xf32>
    %30 = vector.broadcast %29 : vector<2x1x128xf32> to vector<2x144x128xf32>
    %31 = arith.mulf %21, %30 : vector<2x144x128xf32>
    %cst_23 = arith.constant dense<0.000000e+00> : vector<2x128xf32>
    %32 = vector.multi_reduction <add>, %31, %cst_23 [1] : vector<2x144x128xf32> to vector<2x128xf32>
    %cst_24 = arith.constant 1.440000e+02 : f32
    %33 = vector.broadcast %cst_24 : f32 to vector<2x128xf32>
    %34 = arith.divf %32, %33 : vector<2x128xf32>
    %c0_25 = arith.constant 0 : index
    %c0_26 = arith.constant 0 : index
    %35 = vector.load %arg8[%c0_25, %c0_26] : memref<128x256xf32, #tpu.memory_space<vmem>>, vector<128x256xf32>
    %cst_27 = arith.constant dense<0.000000e+00> : vector<2x256xf32>
    %36 = tpu.matmul %34, %35, %cst_27 {dimension_numbers = #tpu.dot_dimension_numbers<[1], [0], [0], [1], [0, 0, 1, 1], [], []>} : vector<2x128xf32>, vector<128x256xf32>, vector<2x256xf32> -> vector<2x256xf32>
    %c0_28 = arith.constant 0 : index
    %c0_29 = arith.constant 0 : index
    %c0_30 = arith.constant 0 : index
    %37 = vector.load %arg14[%c0_28, %c0_29, %c0_30] : memref<1x2x256xf32, #tpu.memory_space<vmem>>, vector<1x2x256xf32>
    %38 = vector.shape_cast %37 : vector<1x2x256xf32> to vector<2x256xf32>
    %39 = vector.shape_cast %36 : vector<2x256xf32> to vector<1x2x256xf32>
    tpu.vector_store %arg14[%c0_28, %c0_29, %c0_30], %39 {strides = array<i32>} : memref<1x2x256xf32, #tpu.memory_space<vmem>>, vector<1x2x256xf32>,
    %c0_31 = arith.constant 0 : index
    %c0_32 = arith.constant 0 : index
    %40 = vector.load %arg9[%c0_31, %c0_32] : memref<128x2xf32, #tpu.memory_space<vmem>>, vector<128x2xf32>
    %cst_33 = arith.constant dense<0.000000e+00> : vector<2x2xf32>
    %41 = tpu.matmul %34, %40, %cst_33 {dimension_numbers = #tpu.dot_dimension_numbers<[1], [0], [0], [1], [0, 0, 1, 1], [], []>} : vector<2x128xf32>, vector<128x2xf32>, vector<2x2xf32> -> vector<2x2xf32>
    %cst_34 = arith.constant dense<0xFF800000> : vector<2xf32>
    %42 = vector.multi_reduction <maximumf>, %41, %cst_34 [1] : vector<2x2xf32> to vector<2xf32>
    %43 = vector.shape_cast %42 : vector<2xf32> to vector<2x1xf32>
    %44 = vector.broadcast %43 : vector<2x1xf32> to vector<2x2xf32>
    %45 = arith.subf %41, %44 : vector<2x2xf32>
    %46 = math.exp %45 : vector<2x2xf32>
    %cst_35 = arith.constant dense<0.000000e+00> : vector<2xf32>
    %47 = vector.multi_reduction <add>, %46, %cst_35 [1] : vector<2x2xf32> to vector<2xf32>
    %48 = vector.shape_cast %47 : vector<2xf32> to vector<2x1xf32>
    %49 = tpu.reciprocal %48 : vector<2x1xf32> -> vector<2x1xf32>
    %50 = vector.broadcast %49 : vector<2x1xf32> to vector<2x2xf32>
    %51 = arith.mulf %46, %50 : vector<2x2xf32>
    %cst_36 = arith.constant dense<0.000000e+00> : vector<2x144xf32>
    %52 = vector.multi_reduction <add>, %31, %cst_36 [2] : vector<2x144x128xf32> to vector<2x144xf32>
    %cst_37 = arith.constant 1.280000e+02 : f32
    %53 = vector.broadcast %cst_37 : f32 to vector<2x144xf32>
    %54 = arith.divf %52, %53 : vector<2x144xf32>
    %cst_38 = arith.constant dense<0xFF800000> : vector<2xf32>
    %55 = vector.multi_reduction <maximumf>, %54, %cst_38 [1] : vector<2x144xf32> to vector<2xf32>
    %56 = vector.shape_cast %55 : vector<2xf32> to vector<2x1xf32>
    %57 = vector.broadcast %56 : vector<2x1xf32> to vector<2x144xf32>
    %58 = arith.subf %54, %57 : vector<2x144xf32>
    %59 = math.exp %58 : vector<2x144xf32>
    %cst_39 = arith.constant dense<0.000000e+00> : vector<2xf32>
    %60 = vector.multi_reduction <add>, %59, %cst_39 [1] : vector<2x144xf32> to vector<2xf32>
    %61 = vector.shape_cast %60 : vector<2xf32> to vector<2x1xf32>
    %62 = tpu.reciprocal %61 : vector<2x1xf32> -> vector<2x1xf32>
    %63 = vector.broadcast %62 : vector<2x1xf32> to vector<2x144xf32>
    %64 = arith.mulf %59, %63 : vector<2x144xf32>
    %cst_40 = arith.constant 0.000000e+00 : f32
    %65 = vector.broadcast %cst_40 : f32 to vector<2x144xf32>
    %66 = arith.maximumf %64, %65 : vector<2x144xf32>
    %c0_41 = arith.constant 0 : index
    %c0_42 = arith.constant 0 : index
    %67 = vector.load %arg10[%c0_41, %c0_42] : memref<144x2xf32, #tpu.memory_space<vmem>>, vector<144x2xf32>
    %cst_43 = arith.constant dense<0.000000e+00> : vector<2x2xf32>
    %68 = tpu.matmul %66, %67, %cst_43 {dimension_numbers = #tpu.dot_dimension_numbers<[1], [0], [0], [1], [0, 0, 1, 1], [], []>} : vector<2x144xf32>, vector<144x2xf32>, vector<2x2xf32> -> vector<2x2xf32>
    %c0_44 = arith.constant 0 : index
    %c0_45 = arith.constant 0 : index
    %69 = vector.load %arg11[%c0_44, %c0_45] : memref<1x2xf32, #tpu.memory_space<vmem>>, vector<1x2xf32>
    %70 = vector.broadcast %69 : vector<1x2xf32> to vector<2x2xf32>
    %71 = arith.addf %68, %70 : vector<2x2xf32>
    %cst_46 = arith.constant 0.000000e+00 : f32
    %72 = vector.broadcast %cst_46 : f32 to vector<2x2xf32>
    %73 = arith.maximumf %71, %72 : vector<2x2xf32>
    %c0_47 = arith.constant 0 : index
    %c0_48 = arith.constant 0 : index
    %74 = memref.load %arg12[%c0_47, %c0_48] : memref<1x1xf32, #tpu.memory_space<smem>>
    %75 = vector.broadcast %74 : f32 to vector<2x2xf32>
    %76 = arith.mulf %75, %51 : vector<2x2xf32>
    %cst_49 = arith.constant 1.000000e+00 : f32
    %77 = arith.subf %cst_49, %74 : f32
    %78 = vector.broadcast %77 : f32 to vector<2x2xf32>
    %79 = arith.mulf %78, %73 : vector<2x2xf32>
    %80 = arith.addf %76, %79 : vector<2x2xf32>
    %c0_50 = arith.constant 0 : index
    %c0_51 = arith.constant 0 : index
    %c0_52 = arith.constant 0 : index
    %81 = vector.load %arg15[%c0_50, %c0_51, %c0_52] : memref<1x2x2xf32, #tpu.memory_space<vmem>>, vector<1x2x2xf32>
    %82 = vector.shape_cast %81 : vector<1x2x2xf32> to vector<2x2xf32>
    %83 = vector.shape_cast %80 : vector<2x2xf32> to vector<1x2x2xf32>
    tpu.vector_store %arg15[%c0_50, %c0_51, %c0_52], %83 {strides = array<i32>} : memref<1x2x2xf32, #tpu.memory_space<vmem>>, vector<1x2x2xf32>,
    return
  }
  func.func @transform_0(%arg0: i32) -> (i32, i32, i32) {
    %c0_i32 = arith.constant 0 : i32
    %c0_i32_0 = arith.constant 0 : i32
    %c0_i32_1 = arith.constant 0 : i32
    return %arg0, %c0_i32, %c0_i32_0 : i32, i32, i32
  }
  func.func @transform_1(%arg0: i32) -> (i32, i32) {
    %c0_i32 = arith.constant 0 : i32
    %c0_i32_0 = arith.constant 0 : i32
    %c0_i32_1 = arith.constant 0 : i32
    return %c0_i32, %c0_i32_0 : i32, i32
  }
  func.func @transform_2(%arg0: i32) -> (i32, i32) {
    %c0_i32 = arith.constant 0 : i32
    %c0_i32_0 = arith.constant 0 : i32
    %c0_i32_1 = arith.constant 0 : i32
    return %c0_i32, %c0_i32_0 : i32, i32
  }
  func.func @transform_3(%arg0: i32) -> (i32, i32) {
    %c0_i32 = arith.constant 0 : i32
    %c0_i32_0 = arith.constant 0 : i32
    %c0_i32_1 = arith.constant 0 : i32
    return %c0_i32, %c0_i32_0 : i32, i32
  }
  func.func @transform_4(%arg0: i32) -> (i32, i32) {
    %c0_i32 = arith.constant 0 : i32
    %c0_i32_0 = arith.constant 0 : i32
    %c0_i32_1 = arith.constant 0 : i32
    return %c0_i32, %c0_i32_0 : i32, i32
  }
  func.func @transform_5(%arg0: i32) -> (i32, i32) {
    %c0_i32 = arith.constant 0 : i32
    %c0_i32_0 = arith.constant 0 : i32
    %c0_i32_1 = arith.constant 0 : i32
    return %c0_i32, %c0_i32_0 : i32, i32
  }
  func.func @transform_6(%arg0: i32) -> (i32, i32) {
    %c0_i32 = arith.constant 0 : i32
    %c0_i32_0 = arith.constant 0 : i32
    %c0_i32_1 = arith.constant 0 : i32
    return %c0_i32, %c0_i32_0 : i32, i32
  }
  func.func @transform_7(%arg0: i32) -> (i32, i32) {
    %c0_i32 = arith.constant 0 : i32
    %c0_i32_0 = arith.constant 0 : i32
    %c0_i32_1 = arith.constant 0 : i32
    return %c0_i32, %c0_i32_0 : i32, i32
  }
  func.func @transform_8(%arg0: i32) -> (i32, i32) {
    %c0_i32 = arith.constant 0 : i32
    %c0_i32_0 = arith.constant 0 : i32
    %c0_i32_1 = arith.constant 0 : i32
    return %c0_i32, %c0_i32_0 : i32, i32
  }
  func.func @transform_9(%arg0: i32) -> (i32, i32) {
    %c0_i32 = arith.constant 0 : i32
    %c0_i32_0 = arith.constant 0 : i32
    %c0_i32_1 = arith.constant 0 : i32
    return %c0_i32, %c0_i32_0 : i32, i32
  }
  func.func @transform_10(%arg0: i32) -> (i32, i32) {
    %c0_i32 = arith.constant 0 : i32
    %c0_i32_0 = arith.constant 0 : i32
    %c0_i32_1 = arith.constant 0 : i32
    return %c0_i32, %c0_i32_0 : i32, i32
  }
  func.func @transform_11(%arg0: i32) -> (i32, i32) {
    %c0_i32 = arith.constant 0 : i32
    %c0_i32_0 = arith.constant 0 : i32
    %c0_i32_1 = arith.constant 0 : i32
    return %c0_i32, %c0_i32_0 : i32, i32
  }
  func.func @transform_12(%arg0: i32) -> (i32, i32, i32) {
    %c0_i32 = arith.constant 0 : i32
    %c0_i32_0 = arith.constant 0 : i32
    %c0_i32_1 = arith.constant 0 : i32
    return %arg0, %c0_i32, %c0_i32_0 : i32, i32, i32
  }
  func.func @transform_13(%arg0: i32) -> (i32, i32, i32) {
    %c0_i32 = arith.constant 0 : i32
    %c0_i32_0 = arith.constant 0 : i32
    %c0_i32_1 = arith.constant 0 : i32
    return %arg0, %c0_i32, %c0_i32_0 : i32, i32, i32
  }
  func.func @transform_14(%arg0: i32) -> (i32, i32, i32) {
    %c0_i32 = arith.constant 0 : i32
    %c0_i32_0 = arith.constant 0 : i32
    %c0_i32_1 = arith.constant 0 : i32
    return %arg0, %c0_i32, %c0_i32_0 : i32, i32, i32
  }
}

</mosaic_0001>

<llo_original>
// kernel: eprl_forward.1
$region0: #{eprl_forward.1}
  #allocation0 [shape = 'u32[]', space=smem, size = 0x4, offset = 0x4, fixed_abs, tag = 'smem constant byte address 0x4 - core index']
  #allocation1 [shape = 'u32[144,128]{1,0:T(1,128)}', space=vmem, size = 0x12000, scoped, tag = 'internal scratch']
  #allocation2 [shape = 'f32[1,1]{1,0:T(1,128)S(6)}', space=smem, size = 0x200, scoped, tag = 'scoped memory for eprl_forward.1']
  %s0 = inlined_call_operand.vmem [shape: f32[2,144,32], index: 0, kind: input, shape index: {}]
  %s1 = inlined_call_operand.vmem [shape: f32[32,256], index: 1, kind: input, shape index: {}]
  %s2 = inlined_call_operand.vmem [shape: f32[1,256], index: 2, kind: input, shape index: {}]
  %s3 = inlined_call_operand.vmem [shape: f32[256,256], index: 3, kind: input, shape index: {}]
  %s4 = inlined_call_operand.vmem [shape: f32[1,256], index: 4, kind: input, shape index: {}]
  %s5 = inlined_call_operand.vmem [shape: f32[256,128], index: 5, kind: input, shape index: {}]
  %s6 = inlined_call_operand.vmem [shape: f32[1,128], index: 6, kind: input, shape index: {}]
  %s7 = inlined_call_operand.vmem [shape: f32[128,256], index: 7, kind: input, shape index: {}]
  %s8 = inlined_call_operand.vmem [shape: f32[128,2], index: 8, kind: input, shape index: {}]
  %s9 = inlined_call_operand.vmem [shape: f32[144,2], index: 9, kind: input, shape index: {}]
  %s10 = inlined_call_operand.vmem [shape: f32[1,2], index: 10, kind: input, shape index: {}]
  %s11 = inlined_call_operand.<no memory space> [shape: f32[1,1], index: 11, kind: input, shape index: {}]
  %s12 = inlined_call_operand.hbm [shape: f32[2,144,128], index: 12, kind: output, shape index: {0}]
  %s13 = inlined_call_operand.vmem [shape: f32[1,2,256], index: 13, kind: output, shape index: {1}]
  %s14 = inlined_call_operand.vmem [shape: f32[1,2,2], index: 14, kind: output, shape index: {2}]
  %15 = xla_tuple %s12, %s13, %s14
  %s16 = sld [smem:[#allocation0]]
  $region74: #{eprl_forward.1} parent=0
    _
  %s18 = ssub.s32 1, %s16
  %s19 = scalar_select 0, %s18, %s16
  %20 = sst [smem:[#allocation2]] %s11
  $region1: #{eprl_forward.1} parent=0
    #allocation3 [shape = 'u8[147456]{0}', space=vmem, size = 0x24000, scoped, tag = 'output window, operand 0, single buffered']
    #allocation4 [shape = 's32[1]{0}', space=sflag, size = 0x4, scoped, tag = 'scoped memory for eprl_forward.1']
    %21 = vsyncpa [#allocation4], 0
    // Predicated region
    $region2: #{eprl_forward.1} parent=1 // pred_check
      _
    $region3: #{eprl_forward.1} parent=1 // pred_check_branch
      %23 = sbr.rel (0) target = $region5
    $region4: #{eprl_forward.1} parent=1 // pred_region
      _
    $region5: #{eprl_forward.1} parent=1 // pred_fallthru
      _
    // Predicated region
    $region6: #{eprl_forward.1} parent=1 // pred_check
      _
    $region7: #{eprl_forward.1} parent=1 // pred_check_branch
      %25 = sbr.rel (0) target = $region9
    $region8: #{eprl_forward.1} parent=1 // pred_region
      _
    $region9: #{eprl_forward.1} parent=1 // pred_fallthru
      _
    // Predicated region
    $region10: #{eprl_forward.1} parent=1 // pred_check
      _
    $region11: #{eprl_forward.1} parent=1 // pred_check_branch
      %27 = sbr.rel (0) target = $region13
    $region12: #{eprl_forward.1} parent=1 // pred_region
      _
    $region13: #{eprl_forward.1} parent=1 // pred_fallthru
      _
    // Predicated region
    $region14: #{eprl_forward.1} parent=1 // pred_check
      _
    $region15: #{eprl_forward.1} parent=1 // pred_check_branch
      %29 = sbr.rel (0) target = $region17
    $region16: #{eprl_forward.1} parent=1 // pred_region
      _
    $region17: #{eprl_forward.1} parent=1 // pred_fallthru
      _
    // Predicated region
    $region18: #{eprl_forward.1} parent=1 // pred_check
      _
    $region19: #{eprl_forward.1} parent=1 // pred_check_branch
      %31 = sbr.rel (0) target = $region21
    $region20: #{eprl_forward.1} parent=1 // pred_region
      _
    $region21: #{eprl_forward.1} parent=1 // pred_fallthru
      _
    // Predicated region
    $region22: #{eprl_forward.1} parent=1 // pred_check
      _
    $region23: #{eprl_forward.1} parent=1 // pred_check_branch
      %33 = sbr.rel (0) target = $region25
    $region24: #{eprl_forward.1} parent=1 // pred_region
      _
    $region25: #{eprl_forward.1} parent=1 // pred_fallthru
      _
    // Predicated region
    $region26: #{eprl_forward.1} parent=1 // pred_check
      _
    $region27: #{eprl_forward.1} parent=1 // pred_check_branch
      %35 = sbr.rel (0) target = $region29
    $region28: #{eprl_forward.1} parent=1 // pred_region
      _
    $region29: #{eprl_forward.1} parent=1 // pred_fallthru
      _
    // Predicated region
    $region30: #{eprl_forward.1} parent=1 // pred_check
      _
    $region31: #{eprl_forward.1} parent=1 // pred_check_branch
      %37 = sbr.rel (0) target = $region33
    $region32: #{eprl_forward.1} parent=1 // pred_region
      _
    $region33: #{eprl_forward.1} parent=1 // pred_fallthru
      _
    // Predicated region
    $region34: #{eprl_forward.1} parent=1 // pred_check
      _
    $region35: #{eprl_forward.1} parent=1 // pred_check_branch
      %39 = sbr.rel (0) target = $region37
    $region36: #{eprl_forward.1} parent=1 // pred_region
      _
    $region37: #{eprl_forward.1} parent=1 // pred_fallthru
      _
    // Predicated region
    $region38: #{eprl_forward.1} parent=1 // pred_check
      _
    $region39: #{eprl_forward.1} parent=1 // pred_check_branch
      %41 = sbr.rel (0) target = $region41
    $region40: #{eprl_forward.1} parent=1 // pred_region
      _
    $region41: #{eprl_forward.1} parent=1 // pred_fallthru
      _
    // Predicated region
    $region42: #{eprl_forward.1} parent=1 // pred_check
      _
    $region43: #{eprl_forward.1} parent=1 // pred_check_branch
      %43 = sbr.rel (0) target = $region45
    $region44: #{eprl_forward.1} parent=1 // pred_region
      _
    $region45: #{eprl_forward.1} parent=1 // pred_fallthru
      _
    // Predicated region
    $region46: #{eprl_forward.1} parent=1 // pred_check
      _
    $region47: #{eprl_forward.1} parent=1 // pred_check_branch
      %45 = sbr.rel (0) target = $region49
    $region48: #{eprl_forward.1} parent=1 // pred_region
      _
    $region49: #{eprl_forward.1} parent=1 // pred_fallthru
      _
    %v46 = vld [vmem:[%s0] sm:$0xff]
    %v47 = vld [vmem:[%s0 + $0x8] sm:$0xff]
    %v48 = vld [vmem:[%s0 + $0x10] sm:$0xff]
    %v49 = vld [vmem:[%s0 + $0x18] sm:$0xff]
    %v50 = vld [vmem:[%s0 + $0x20] sm:$0xff]
    %v51 = vld [vmem:[%s0 + $0x28] sm:$0xff]
    %v52 = vld [vmem:[%s0 + $0x30] sm:$0xff]
    %v53 = vld [vmem:[%s0 + $0x38] sm:$0xff]
    %v54 = vld [vmem:[%s0 + $0x40] sm:$0xff]
    %v55 = vld [vmem:[%s0 + $0x48] sm:$0xff]
    %v56 = vld [vmem:[%s0 + $0x50] sm:$0xff]
    %v57 = vld [vmem:[%s0 + $0x58] sm:$0xff]
    %v58 = vld [vmem:[%s0 + $0x60] sm:$0xff]
    %v59 = vld [vmem:[%s0 + $0x68] sm:$0xff]
    %v60 = vld [vmem:[%s0 + $0x70] sm:$0xff]
    %v61 = vld [vmem:[%s0 + $0x78] sm:$0xff]
    %v62 = vld [vmem:[%s0 + $0x80] sm:$0xff]
    %v63 = vld [vmem:[%s0 + $0x88] sm:$0xff]
    %v64 = vld [vmem:[%s0 + $0x90] sm:$0xff]
    %v65 = vld [vmem:[%s0 + $0x98] sm:$0xff]
    %v66 = vld [vmem:[%s0 + $0xa0] sm:$0xff]
    %v67 = vld [vmem:[%s0 + $0xa8] sm:$0xff]
    %v68 = vld [vmem:[%s0 + $0xb0] sm:$0xff]
    %v69 = vld [vmem:[%s0 + $0xb8] sm:$0xff]
    %v70 = vld [vmem:[%s0 + $0xc0] sm:$0xff]
    %v71 = vld [vmem:[%s0 + $0xc8] sm:$0xff]
    %v72 = vld [vmem:[%s0 + $0xd0] sm:$0xff]
    %v73 = vld [vmem:[%s0 + $0xd8] sm:$0xff]
    %v74 = vld [vmem:[%s0 + $0xe0] sm:$0xff]
    %v75 = vld [vmem:[%s0 + $0xe8] sm:$0xff]
    %v76 = vld [vmem:[%s0 + $0xf0] sm:$0xff]
    %v77 = vld [vmem:[%s0 + $0xf8] sm:$0xff]
    %v78 = vld [vmem:[%s0 + $0x100] sm:$0xff]
    %v79 = vld [vmem:[%s0 + $0x108] sm:$0xff]
    %v80 = vld [vmem:[%s0 + $0x110] sm:$0xff]
    %v81 = vld [vmem:[%s0 + $0x118] sm:$0xff]
    %v82 = vld [vmem:[%s1] sm:$0xff]
    %v83 = vld [vmem:[%s1 + $0x8] sm:$0xff]
    %v84 = vld [vmem:[%s1 + $0x10] sm:$0xff]
    %v85 = vld [vmem:[%s1 + $0x18] sm:$0xff]
    %v86 = vld [vmem:[%s1 + $0x20] sm:$0xff]
    %v87 = vld [vmem:[%s1 + $0x28] sm:$0xff]
    %v88 = vld [vmem:[%s1 + $0x30] sm:$0xff]
    %v89 = vld [vmem:[%s1 + $0x38] sm:$0xff]
    %v90 = vld [vmem:[%s2] sm:$0x3]
    %v92 = vlaneseq
    %v93 = vshrl.u32 %v92, 7
    %v94 = vsub.s32 0, %v93
    %v95 = vrot.slane %v90, %v94
    %v96 = vlaneseq
    %v97 = vshrl.u32 %v96, 7
    %v98 = vsub.s32 1, %v97
    %v99 = vrot.slane %v90, %v98
    %vm102 = vcmask 261120
    %v104 = vsel %vm102, %v46, 0
    %v107 = vsel %vm102, %v47, 0
    %v110 = vsel %vm102, %v48, 0
    %v113 = vsel %vm102, %v49, 0
    %v116 = vsel %vm102, %v50, 0
    %v119 = vsel %vm102, %v51, 0
    %v122 = vsel %vm102, %v52, 0
    %v125 = vsel %vm102, %v53, 0
    %v128 = vsel %vm102, %v54, 0
    %v131 = vsel %vm102, %v55, 0
    %v134 = vsel %vm102, %v56, 0
    %v137 = vsel %vm102, %v57, 0
    %v140 = vsel %vm102, %v58, 0
    %v143 = vsel %vm102, %v59, 0
    %v146 = vsel %vm102, %v60, 0
    %v149 = vsel %vm102, %v61, 0
    %v152 = vsel %vm102, %v62, 0
    %v155 = vsel %vm102, %v63, 0
    %v158 = vsel %vm102, %v64, 0
    %v161 = vsel %vm102, %v65, 0
    %v164 = vsel %vm102, %v66, 0
    %v167 = vsel %vm102, %v67, 0
    %v170 = vsel %vm102, %v68, 0
    %v173 = vsel %vm102, %v69, 0
    %v176 = vsel %vm102, %v70, 0
    %v179 = vsel %vm102, %v71, 0
    %v182 = vsel %vm102, %v72, 0
    %v185 = vsel %vm102, %v73, 0
    %v188 = vsel %vm102, %v74, 0
    %v191 = vsel %vm102, %v75, 0
    %v194 = vsel %vm102, %v76, 0
    %v197 = vsel %vm102, %v77, 0
    %v200 = vsel %vm102, %v78, 0
    %v203 = vsel %vm102, %v79, 0
    %v206 = vsel %vm102, %v80, 0
    %v209 = vsel %vm102, %v81, 0
    %211 = vmatprep.subr.mxu0 %v83
    %212 = vmatpush1.msra.mxu0 %v82
    %213 = vmatprep.subr.mxu0 %v85
    %214 = vmatpush1.msra.mxu0 %v84
    %215 = vmatprep.subr.mxu0 %v87
    %216 = vmatpush1.msra.mxu0 %v86
    %217 = vmatprep.subr.mxu0 %v89
    %218 = vmatpush1.msra.mxu0 %v88
    %219 = vmatprep.subr.mxu0 0.0
    %220 = vmatpush1.msra.mxu0 0.0
    %221 = vmatprep.subr.mxu0 0.0
    %222 = vmatpush1.msra.mxu0 0.0
    %223 = vmatprep.subr.mxu0 0.0
    %224 = vmatpush1.msra.mxu0 0.0
    %225 = vmatprep.subr.mxu0 0.0
    %226 = vmatpush1.msra.mxu0 0.0
    %227 = vmatprep.subr.mxu0 0.0
    %228 = vmatpush1.msra.mxu0 0.0
    %229 = vmatprep.subr.mxu0 0.0
    %230 = vmatpush1.msra.mxu0 0.0
    %231 = vmatprep.subr.mxu0 0.0
    %232 = vmatpush1.msra.mxu0 0.0
    %233 = vmatprep.subr.mxu0 0.0
    %234 = vmatpush1.msra.mxu0 0.0
    %235 = vmatprep.subr.mxu0 0.0
    %236 = vmatpush1.msra.mxu0 0.0
    %237 = vmatprep.subr.mxu0 0.0
    %238 = vmatpush1.msra.mxu0 0.0
    %239 = vmatprep.subr.mxu0 0.0
    %240 = vmatpush1.msra.mxu0 0.0
    %241 = vmatprep.subr.mxu0 0.0
    %242 = vmatpush1.msra.mxu0 0.0
    %243 = vmatprep.subr.mxu0 0.0
    %244 = vmatpush1.msra.mxu0 0.0
    %245 = vmatprep.subr.mxu0 0.0
    %246 = vmatpush1.msra.mxu0 0.0
    %247 = vmatprep.subr.mxu0 0.0
    %248 = vmatpush1.msra.mxu0 0.0
    %249 = vmatprep.subr.mxu0 0.0
    %250 = vmatpush1.msra.mxu0 0.0
    %251 = vmatprep.subr.mxu0 0.0
    %252 = vmatpush1.msra.mxu0 0.0
    %253 = vmatprep.subr.mxu0 0.0
    %254 = vmatpush1.msra.mxu0 0.0
    %255 = vmatprep.subr.mxu0 0.0
    %256 = vmatpush1.msra.mxu0 0.0
    %257 = vmatprep.subr.mxu0 0.0
    %258 = vmatpush1.msra.mxu0 0.0
    %259 = vmatprep.subr.mxu0 0.0
    %260 = vmatpush1.msra.mxu0 0.0
    %261 = vmatprep.subr.mxu0 0.0
    %262 = vmatpush1.msra.mxu0 0.0
    %263 = vmatprep.subr.mxu0 0.0
    %264 = vmatpush1.msra.mxu0 0.0
    %265 = vmatprep.subr.mxu0 0.0
    %266 = vmatpush1.msra.mxu0 0.0
    %267 = vmatprep.subr.mxu0 0.0
    %268 = vmatpush1.msra.mxu0 0.0
    %269 = vmatprep.subr.mxu0 0.0
    %270 = vmatpush1.msra.mxu0 0.0
    %271 = vmatprep.subr.mxu0 0.0
    %272 = vmatpush1.msra.mxu0 0.0
    %273 = vmatprep.subr.mxu0 0.0
    %274 = vmatpush1.msra.mxu0 0.0
    %275 = vmatprep.mubr.f32.mxu0 0.0
    %276 = vmatmul.mubr.f32.gmra.mrb[0].mxu0 %v104
    %v277 = vpop.f32.mrb[0].mxu0
    %v278 = vadd.f32 %v95, %v277
    %v279 = vpop.f32.mrb[0].mxu0
    %v280 = vadd.f32 %v99, %v279
    %281 = vmatprep.mubr.f32.mxu0 0.0
    %282 = vmatmul.mubr.f32.gmra.mrb[0].mxu0 %v107
    %v283 = vpop.f32.mrb[0].mxu0
    %v284 = vadd.f32 %v95, %v283
    %v285 = vpop.f32.mrb[0].mxu0
    %v286 = vadd.f32 %v99, %v285
    %287 = vmatprep.mubr.f32.mxu0 0.0
    %288 = vmatmul.mubr.f32.gmra.mrb[0].mxu0 %v110
    %v289 = vpop.f32.mrb[0].mxu0
    %v290 = vadd.f32 %v95, %v289
    %v291 = vpop.f32.mrb[0].mxu0
    %v292 = vadd.f32 %v99, %v291
    %293 = vmatprep.mubr.f32.mxu0 0.0
    %294 = vmatmul.mubr.f32.gmra.mrb[0].mxu0 %v113
    %v295 = vpop.f32.mrb[0].mxu0
    %v296 = vadd.f32 %v95, %v295
    %v297 = vpop.f32.mrb[0].mxu0
    %v298 = vadd.f32 %v99, %v297
    %299 = vmatprep.mubr.f32.mxu0 0.0
    %300 = vmatmul.mubr.f32.gmra.mrb[0].mxu0 %v116
    %v301 = vpop.f32.mrb[0].mxu0
    %v302 = vadd.f32 %v95, %v301
    %v303 = vpop.f32.mrb[0].mxu0
    %v304 = vadd.f32 %v99, %v303
    %305 = vmatprep.mubr.f32.mxu0 0.0
    %306 = vmatmul.mubr.f32.gmra.mrb[0].mxu0 %v119
    %v307 = vpop.f32.mrb[0].mxu0
    %v308 = vadd.f32 %v95, %v307
    %v309 = vpop.f32.mrb[0].mxu0
    %v310 = vadd.f32 %v99, %v309
    %311 = vmatprep.mubr.f32.mxu0 0.0
    %312 = vmatmul.mubr.f32.gmra.mrb[0].mxu0 %v122
    %v313 = vpop.f32.mrb[0].mxu0
    %v314 = vadd.f32 %v95, %v313
    %v315 = vpop.f32.mrb[0].mxu0
    %v316 = vadd.f32 %v99, %v315
    %317 = vmatprep.mubr.f32.mxu0 0.0
    %318 = vmatmul.mubr.f32.gmra.mrb[0].mxu0 %v125
    %v319 = vpop.f32.mrb[0].mxu0
    %v320 = vadd.f32 %v95, %v319
    %v321 = vpop.f32.mrb[0].mxu0
    %v322 = vadd.f32 %v99, %v321
    %323 = vmatprep.mubr.f32.mxu0 0.0
    %324 = vmatmul.mubr.f32.gmra.mrb[0].mxu0 %v128
    %v325 = vpop.f32.mrb[0].mxu0
    %v326 = vadd.f32 %v95, %v325
    %v327 = vpop.f32.mrb[0].mxu0
    %v328 = vadd.f32 %v99, %v327
    %329 = vmatprep.mubr.f32.mxu0 0.0
    %330 = vmatmul.mubr.f32.gmra.mrb[0].mxu0 %v131
    %v331 = vpop.f32.mrb[0].mxu0
    %v332 = vadd.f32 %v95, %v331
    %v333 = vpop.f32.mrb[0].mxu0
    %v334 = vadd.f32 %v99, %v333
    %335 = vmatprep.mubr.f32.mxu0 0.0
    %336 = vmatmul.mubr.f32.gmra.mrb[0].mxu0 %v134
    %v337 = vpop.f32.mrb[0].mxu0
    %v338 = vadd.f32 %v95, %v337
    %v339 = vpop.f32.mrb[0].mxu0
    %v340 = vadd.f32 %v99, %v339
    %341 = vmatprep.mubr.f32.mxu0 0.0
    %342 = vmatmul.mubr.f32.gmra.mrb[0].mxu0 %v137
    %v343 = vpop.f32.mrb[0].mxu0
    %v344 = vadd.f32 %v95, %v343
    %v345 = vpop.f32.mrb[0].mxu0
    %v346 = vadd.f32 %v99, %v345
    %347 = vmatprep.mubr.f32.mxu0 0.0
    %348 = vmatmul.mubr.f32.gmra.mrb[0].mxu0 %v140
    %v349 = vpop.f32.mrb[0].mxu0
    %v350 = vadd.f32 %v95, %v349
    %v351 = vpop.f32.mrb[0].mxu0
    %v352 = vadd.f32 %v99, %v351
    %353 = vmatprep.mubr.f32.mxu0 0.0
    %354 = vmatmul.mubr.f32.gmra.mrb[0].mxu0 %v143
    %v355 = vpop.f32.mrb[0].mxu0
    %v356 = vadd.f32 %v95, %v355
    %v357 = vpop.f32.mrb[0].mxu0
    %v358 = vadd.f32 %v99, %v357
    %359 = vmatprep.mubr.f32.mxu0 0.0
    %360 = vmatmul.mubr.f32.gmra.mrb[0].mxu0 %v146
    %v361 = vpop.f32.mrb[0].mxu0
    %v362 = vadd.f32 %v95, %v361
    %v363 = vpop.f32.mrb[0].mxu0
    %v364 = vadd.f32 %v99, %v363
    %365 = vmatprep.mubr.f32.mxu0 0.0
    %366 = vmatmul.mubr.f32.gmra.mrb[0].mxu0 %v149
    %v367 = vpop.f32.mrb[0].mxu0
    %v368 = vadd.f32 %v95, %v367
    %v369 = vpop.f32.mrb[0].mxu0
    %v370 = vadd.f32 %v99, %v369
    %371 = vmatprep.mubr.f32.mxu0 0.0
    %372 = vmatmul.mubr.f32.gmra.mrb[0].mxu0 %v152
    %v373 = vpop.f32.mrb[0].mxu0
    %v374 = vadd.f32 %v95, %v373
    %v375 = vpop.f32.mrb[0].mxu0
    %v376 = vadd.f32 %v99, %v375
    %377 = vmatprep.mubr.f32.mxu0 0.0
    %378 = vmatmul.mubr.f32.gmra.mrb[0].mxu0 %v155
    %v379 = vpop.f32.mrb[0].mxu0
    %v380 = vadd.f32 %v95, %v379
    %v381 = vpop.f32.mrb[0].mxu0
    %v382 = vadd.f32 %v99, %v381
    %383 = vmatprep.mubr.f32.mxu0 0.0
    %384 = vmatmul.mubr.f32.gmra.mrb[0].mxu0 %v158
    %v385 = vpop.f32.mrb[0].mxu0
    %v386 = vadd.f32 %v95, %v385
    %v387 = vpop.f32.mrb[0].mxu0
    %v388 = vadd.f32 %v99, %v387
    %389 = vmatprep.mubr.f32.mxu0 0.0
    %390 = vmatmul.mubr.f32.gmra.mrb[0].mxu0 %v161
    %v391 = vpop.f32.mrb[0].mxu0
    %v392 = vadd.f32 %v95, %v391
    %v393 = vpop.f32.mrb[0].mxu0
    %v394 = vadd.f32 %v99, %v393
    %395 = vmatprep.mubr.f32.mxu0 0.0
    %396 = vmatmul.mubr.f32.gmra.mrb[0].mxu0 %v164
    %v397 = vpop.f32.mrb[0].mxu0
    %v398 = vadd.f32 %v95, %v397
    %v399 = vpop.f32.mrb[0].mxu0
    %v400 = vadd.f32 %v99, %v399
    %401 = vmatprep.mubr.f32.mxu0 0.0
    %402 = vmatmul.mubr.f32.gmra.mrb[0].mxu0 %v167
    %v403 = vpop.f32.mrb[0].mxu0
    %v404 = vadd.f32 %v95, %v403
    %v405 = vpop.f32.mrb[0].mxu0
    %v406 = vadd.f32 %v99, %v405
    %407 = vmatprep.mubr.f32.mxu0 0.0
    %408 = vmatmul.mubr.f32.gmra.mrb[0].mxu0 %v170
    %v409 = vpop.f32.mrb[0].mxu0
    %v410 = vadd.f32 %v95, %v409
    %v411 = vpop.f32.mrb[0].mxu0
    %v412 = vadd.f32 %v99, %v411
    %413 = vmatprep.mubr.f32.mxu0 0.0
    %414 = vmatmul.mubr.f32.gmra.mrb[0].mxu0 %v173
    %v415 = vpop.f32.mrb[0].mxu0
    %v416 = vadd.f32 %v95, %v415
    %v417 = vpop.f32.mrb[0].mxu0
    %v418 = vadd.f32 %v99, %v417
    %419 = vmatprep.mubr.f32.mxu0 0.0
    %420 = vmatmul.mubr.f32.gmra.mrb[0].mxu0 %v176
    %v421 = vpop.f32.mrb[0].mxu0
    %v422 = vadd.f32 %v95, %v421
    %v423 = vpop.f32.mrb[0].mxu0
    %v424 = vadd.f32 %v99, %v423
    %425 = vmatprep.mubr.f32.mxu0 0.0
    %426 = vmatmul.mubr.f32.gmra.mrb[0].mxu0 %v179
    %v427 = vpop.f32.mrb[0].mxu0
    %v428 = vadd.f32 %v95, %v427
    %v429 = vpop.f32.mrb[0].mxu0
    %v430 = vadd.f32 %v99, %v429
    %431 = vmatprep.mubr.f32.mxu0 0.0
    %432 = vmatmul.mubr.f32.gmra.mrb[0].mxu0 %v182
    %v433 = vpop.f32.mrb[0].mxu0
    %v434 = vadd.f32 %v95, %v433
    %v435 = vpop.f32.mrb[0].mxu0
    %v436 = vadd.f32 %v99, %v435
    %437 = vmatprep.mubr.f32.mxu0 0.0
    %438 = vmatmul.mubr.f32.gmra.mrb[0].mxu0 %v185
    %v439 = vpop.f32.mrb[0].mxu0
    %v440 = vadd.f32 %v95, %v439
    %v441 = vpop.f32.mrb[0].mxu0
    %v442 = vadd.f32 %v99, %v441
    %443 = vmatprep.mubr.f32.mxu0 0.0
    %444 = vmatmul.mubr.f32.gmra.mrb[0].mxu0 %v188
    %v445 = vpop.f32.mrb[0].mxu0
    %v446 = vadd.f32 %v95, %v445
    %v447 = vpop.f32.mrb[0].mxu0
    %v448 = vadd.f32 %v99, %v447
    %449 = vmatprep.mubr.f32.mxu0 0.0
    %450 = vmatmul.mubr.f32.gmra.mrb[0].mxu0 %v191
    %v451 = vpop.f32.mrb[0].mxu0
    %v452 = vadd.f32 %v95, %v451
    %v453 = vpop.f32.mrb[0].mxu0
    %v454 = vadd.f32 %v99, %v453
    %455 = vmatprep.mubr.f32.mxu0 0.0
    %456 = vmatmul.mubr.f32.gmra.mrb[0].mxu0 %v194
    %v457 = vpop.f32.mrb[0].mxu0
    %v458 = vadd.f32 %v95, %v457
    %v459 = vpop.f32.mrb[0].mxu0
    %v460 = vadd.f32 %v99, %v459
    %461 = vmatprep.mubr.f32.mxu0 0.0
    %462 = vmatmul.mubr.f32.gmra.mrb[0].mxu0 %v197
    %v463 = vpop.f32.mrb[0].mxu0
    %v464 = vadd.f32 %v95, %v463
    %v465 = vpop.f32.mrb[0].mxu0
    %v466 = vadd.f32 %v99, %v465
    %467 = vmatprep.mubr.f32.mxu0 0.0
    %468 = vmatmul.mubr.f32.gmra.mrb[0].mxu0 %v200
    %v469 = vpop.f32.mrb[0].mxu0
    %v470 = vadd.f32 %v95, %v469
    %v471 = vpop.f32.mrb[0].mxu0
    %v472 = vadd.f32 %v99, %v471
    %473 = vmatprep.mubr.f32.mxu0 0.0
    %474 = vmatmul.mubr.f32.gmra.mrb[0].mxu0 %v203
    %v475 = vpop.f32.mrb[0].mxu0
    %v476 = vadd.f32 %v95, %v475
    %v477 = vpop.f32.mrb[0].mxu0
    %v478 = vadd.f32 %v99, %v477
    %479 = vmatprep.mubr.f32.mxu0 0.0
    %480 = vmatmul.mubr.f32.gmra.mrb[0].mxu0 %v206
    %v481 = vpop.f32.mrb[0].mxu0
    %v482 = vadd.f32 %v95, %v481
    %v483 = vpop.f32.mrb[0].mxu0
    %v484 = vadd.f32 %v99, %v483
    %485 = vmatprep.mubr.f32.mxu0 0.0
    %486 = vmatmul.mubr.f32.gmra.mrb[0].mxu0 %v209
    %v487 = vpop.f32.mrb[0].mxu0
    %v488 = vadd.f32 %v95, %v487
    %v489 = vpop.f32.mrb[0].mxu0
    %v490 = vadd.f32 %v99, %v489
    %491 = vdwg.mxu0
    %v492 = vmax.f32 %v278, 0.0
    %v493 = vmax.f32 %v280, 0.0
    %v494 = vmax.f32 %v284, 0.0
    %v495 = vmax.f32 %v286, 0.0
    %v496 = vmax.f32 %v290, 0.0
    %v497 = vmax.f32 %v292, 0.0
    %v498 = vmax.f32 %v296, 0.0
    %v499 = vmax.f32 %v298, 0.0
    %v500 = vmax.f32 %v302, 0.0
    %v501 = vmax.f32 %v304, 0.0
    %v502 = vmax.f32 %v308, 0.0
    %v503 = vmax.f32 %v310, 0.0
    %v504 = vmax.f32 %v314, 0.0
    %v505 = vmax.f32 %v316, 0.0
    %v506 = vmax.f32 %v320, 0.0
    %v507 = vmax.f32 %v322, 0.0
    %v508 = vmax.f32 %v326, 0.0
    %v509 = vmax.f32 %v328, 0.0
    %v510 = vmax.f32 %v332, 0.0
    %v511 = vmax.f32 %v334, 0.0
    %v512 = vmax.f32 %v338, 0.0
    %v513 = vmax.f32 %v340, 0.0
    %v514 = vmax.f32 %v344, 0.0
    %v515 = vmax.f32 %v346, 0.0
    %v516 = vmax.f32 %v350, 0.0
    %v517 = vmax.f32 %v352, 0.0
    %v518 = vmax.f32 %v356, 0.0
    %v519 = vmax.f32 %v358, 0.0
    %v520 = vmax.f32 %v362, 0.0
    %v521 = vmax.f32 %v364, 0.0
    %v522 = vmax.f32 %v368, 0.0
    %v523 = vmax.f32 %v370, 0.0
    %v524 = vmax.f32 %v374, 0.0
    %v525 = vmax.f32 %v376, 0.0
    %v526 = vmax.f32 %v380, 0.0
    %v527 = vmax.f32 %v382, 0.0
    %v528 = vmax.f32 %v386, 0.0
    %v529 = vmax.f32 %v388, 0.0
    %v530 = vmax.f32 %v392, 0.0
    %v531 = vmax.f32 %v394, 0.0
    %v532 = vmax.f32 %v398, 0.0
    %v533 = vmax.f32 %v400, 0.0
    %v534 = vmax.f32 %v404, 0.0
    %v535 = vmax.f32 %v406, 0.0
    %v536 = vmax.f32 %v410, 0.0
    %v537 = vmax.f32 %v412, 0.0
    %v538 = vmax.f32 %v416, 0.0
    %v539 = vmax.f32 %v418, 0.0
    %v540 = vmax.f32 %v422, 0.0
    %v541 = vmax.f32 %v424, 0.0
    %v542 = vmax.f32 %v428, 0.0
    %v543 = vmax.f32 %v430, 0.0
    %v544 = vmax.f32 %v434, 0.0
    %v545 = vmax.f32 %v436, 0.0
    %v546 = vmax.f32 %v440, 0.0
    %v547 = vmax.f32 %v442, 0.0
    %v548 = vmax.f32 %v446, 0.0
    %v549 = vmax.f32 %v448, 0.0
    %v550 = vmax.f32 %v452, 0.0
    %v551 = vmax.f32 %v454, 0.0
    %v552 = vmax.f32 %v458, 0.0
    %v553 = vmax.f32 %v460, 0.0
    %v554 = vmax.f32 %v464, 0.0
    %v555 = vmax.f32 %v466, 0.0
    %v556 = vmax.f32 %v470, 0.0
    %v557 = vmax.f32 %v472, 0.0
    %v558 = vmax.f32 %v476, 0.0
    %v559 = vmax.f32 %v478, 0.0
    %v560 = vmax.f32 %v482, 0.0
    %v561 = vmax.f32 %v484, 0.0
    %v562 = vmax.f32 %v488, 0.0
    %v563 = vmax.f32 %v490, 0.0
    %v564 = vld [vmem:[%s3] sm:$0xff]
    %v565 = vld [vmem:[%s3 + $0x8] sm:$0xff]
    %v566 = vld [vmem:[%s3 + $0x10] sm:$0xff]
    %v567 = vld [vmem:[%s3 + $0x18] sm:$0xff]
    %v568 = vld [vmem:[%s3 + $0x20] sm:$0xff]
    %v569 = vld [vmem:[%s3 + $0x28] sm:$0xff]
    %v570 = vld [vmem:[%s3 + $0x30] sm:$0xff]
    %v571 = vld [vmem:[%s3 + $0x38] sm:$0xff]
    %v572 = vld [vmem:[%s3 + $0x40] sm:$0xff]
    %v573 = vld [vmem:[%s3 + $0x48] sm:$0xff]
    %v574 = vld [vmem:[%s3 + $0x50] sm:$0xff]
    %v575 = vld [vmem:[%s3 + $0x58] sm:$0xff]
    %v576 = vld [vmem:[%s3 + $0x60] sm:$0xff]
    %v577 = vld [vmem:[%s3 + $0x68] sm:$0xff]
    %v578 = vld [vmem:[%s3 + $0x70] sm:$0xff]
    %v579 = vld [vmem:[%s3 + $0x78] sm:$0xff]
    %v580 = vld [vmem:[%s3 + $0x80] sm:$0xff]
    %v581 = vld [vmem:[%s3 + $0x88] sm:$0xff]
    %v582 = vld [vmem:[%s3 + $0x90] sm:$0xff]
    %v583 = vld [vmem:[%s3 + $0x98] sm:$0xff]
    %v584 = vld [vmem:[%s3 + $0xa0] sm:$0xff]
    %v585 = vld [vmem:[%s3 + $0xa8] sm:$0xff]
    %v586 = vld [vmem:[%s3 + $0xb0] sm:$0xff]
    %v587 = vld [vmem:[%s3 + $0xb8] sm:$0xff]
    %v588 = vld [vmem:[%s3 + $0xc0] sm:$0xff]
    %v589 = vld [vmem:[%s3 + $0xc8] sm:$0xff]
    %v590 = vld [vmem:[%s3 + $0xd0] sm:$0xff]
    %v591 = vld [vmem:[%s3 + $0xd8] sm:$0xff]
    %v592 = vld [vmem:[%s3 + $0xe0] sm:$0xff]
    %v593 = vld [vmem:[%s3 + $0xe8] sm:$0xff]
    %v594 = vld [vmem:[%s3 + $0xf0] sm:$0xff]
    %v595 = vld [vmem:[%s3 + $0xf8] sm:$0xff]
    %v596 = vld [vmem:[%s3 + $0x100] sm:$0xff]
    %v597 = vld [vmem:[%s3 + $0x108] sm:$0xff]
    %v598 = vld [vmem:[%s3 + $0x110] sm:$0xff]
    %v599 = vld [vmem:[%s3 + $0x118] sm:$0xff]
    %v600 = vld [vmem:[%s3 + $0x120] sm:$0xff]
    %v601 = vld [vmem:[%s3 + $0x128] sm:$0xff]
    %v602 = vld [vmem:[%s3 + $0x130] sm:$0xff]
    %v603 = vld [vmem:[%s3 + $0x138] sm:$0xff]
    %v604 = vld [vmem:[%s3 + $0x140] sm:$0xff]
    %v605 = vld [vmem:[%s3 + $0x148] sm:$0xff]
    %v606 = vld [vmem:[%s3 + $0x150] sm:$0xff]
    %v607 = vld [vmem:[%s3 + $0x158] sm:$0xff]
    %v608 = vld [vmem:[%s3 + $0x160] sm:$0xff]
    %v609 = vld [vmem:[%s3 + $0x168] sm:$0xff]
    %v610 = vld [vmem:[%s3 + $0x170] sm:$0xff]
    %v611 = vld [vmem:[%s3 + $0x178] sm:$0xff]
    %v612 = vld [vmem:[%s3 + $0x180] sm:$0xff]
    %v613 = vld [vmem:[%s3 + $0x188] sm:$0xff]
    %v614 = vld [vmem:[%s3 + $0x190] sm:$0xff]
    %v615 = vld [vmem:[%s3 + $0x198] sm:$0xff]
    %v616 = vld [vmem:[%s3 + $0x1a0] sm:$0xff]
    %v617 = vld [vmem:[%s3 + $0x1a8] sm:$0xff]
    %v618 = vld [vmem:[%s3 + $0x1b0] sm:$0xff]
    %v619 = vld [vmem:[%s3 + $0x1b8] sm:$0xff]
    %v620 = vld [vmem:[%s3 + $0x1c0] sm:$0xff]
    %v621 = vld [vmem:[%s3 + $0x1c8] sm:$0xff]
    %v622 = vld [vmem:[%s3 + $0x1d0] sm:$0xff]
    %v623 = vld [vmem:[%s3 + $0x1d8] sm:$0xff]
    %v624 = vld [vmem:[%s3 + $0x1e0] sm:$0xff]
    %v625 = vld [vmem:[%s3 + $0x1e8] sm:$0xff]
    %v626 = vld [vmem:[%s3 + $0x1f0] sm:$0xff]
    %v627 = vld [vmem:[%s3 + $0x1f8] sm:$0xff]
    %v628 = vld [vmem:[%s4] sm:$0x3]
    %v630 = vlaneseq
    %v631 = vshrl.u32 %v630, 7
    %v632 = vsub.s32 0, %v631
    %v633 = vrot.slane %v628, %v632
    %v634 = vlaneseq
    %v635 = vshrl.u32 %v634, 7
    %v636 = vsub.s32 1, %v635
    %v637 = vrot.slane %v628, %v636
    %640 = vmatprep.subr.mxu0 %v565
    %641 = vmatpush1.msra.mxu0 %v564
    %642 = vmatprep.subr.mxu0 %v567
    %643 = vmatpush1.msra.mxu0 %v566
    %644 = vmatprep.subr.mxu0 %v569
    %645 = vmatpush1.msra.mxu0 %v568
    %646 = vmatprep.subr.mxu0 %v571
    %647 = vmatpush1.msra.mxu0 %v570
    %648 = vmatprep.subr.mxu0 %v573
    %649 = vmatpush1.msra.mxu0 %v572
    %650 = vmatprep.subr.mxu0 %v575
    %651 = vmatpush1.msra.mxu0 %v574
    %652 = vmatprep.subr.mxu0 %v577
    %653 = vmatpush1.msra.mxu0 %v576
    %654 = vmatprep.subr.mxu0 %v579
    %655 = vmatpush1.msra.mxu0 %v578
    %656 = vmatprep.subr.mxu0 %v581
    %657 = vmatpush1.msra.mxu0 %v580
    %658 = vmatprep.subr.mxu0 %v583
    %659 = vmatpush1.msra.mxu0 %v582
    %660 = vmatprep.subr.mxu0 %v585
    %661 = vmatpush1.msra.mxu0 %v584
    %662 = vmatprep.subr.mxu0 %v587
    %663 = vmatpush1.msra.mxu0 %v586
    %664 = vmatprep.subr.mxu0 %v589
    %665 = vmatpush1.msra.mxu0 %v588
    %666 = vmatprep.subr.mxu0 %v591
    %667 = vmatpush1.msra.mxu0 %v590
    %668 = vmatprep.subr.mxu0 %v593
    %669 = vmatpush1.msra.mxu0 %v592
    %670 = vmatprep.subr.mxu0 %v595
    %671 = vmatpush1.msra.mxu0 %v594
    %672 = vmatprep.subr.mxu0 %v597
    %673 = vmatpush1.msra.mxu0 %v596
    %674 = vmatprep.subr.mxu0 %v599
    %675 = vmatpush1.msra.mxu0 %v598
    %676 = vmatprep.subr.mxu0 %v601
    %677 = vmatpush1.msra.mxu0 %v600
    %678 = vmatprep.subr.mxu0 %v603
    %679 = vmatpush1.msra.mxu0 %v602
    %680 = vmatprep.subr.mxu0 %v605
    %681 = vmatpush1.msra.mxu0 %v604
    %682 = vmatprep.subr.mxu0 %v607
    %683 = vmatpush1.msra.mxu0 %v606
    %684 = vmatprep.subr.mxu0 %v609
    %685 = vmatpush1.msra.mxu0 %v608
    %686 = vmatprep.subr.mxu0 %v611
    %687 = vmatpush1.msra.mxu0 %v610
    %688 = vmatprep.subr.mxu0 %v613
    %689 = vmatpush1.msra.mxu0 %v612
    %690 = vmatprep.subr.mxu0 %v615
    %691 = vmatpush1.msra.mxu0 %v614
    %692 = vmatprep.subr.mxu0 %v617
    %693 = vmatpush1.msra.mxu0 %v616
    %694 = vmatprep.subr.mxu0 %v619
    %695 = vmatpush1.msra.mxu0 %v618
    %696 = vmatprep.subr.mxu0 %v621
    %697 = vmatpush1.msra.mxu0 %v620
    %698 = vmatprep.subr.mxu0 %v623
    %699 = vmatpush1.msra.mxu0 %v622
    %700 = vmatprep.subr.mxu0 %v625
    %701 = vmatpush1.msra.mxu0 %v624
    %702 = vmatprep.subr.mxu0 %v627
    %703 = vmatpush1.msra.mxu0 %v626
    %704 = vmatprep.mubr.f32.mxu0 %v493
    %705 = vmatmul.mubr.f32.gmra.mrb[0].mxu0 %v492
    %v706 = vpop.f32.mrb[0].mxu0
    %v707 = vadd.f32 %v633, %v706
    %v708 = vpop.f32.mrb[0].mxu0
    %v709 = vadd.f32 %v637, %v708
    %710 = vmatprep.mubr.f32.mxu0 %v495
    %711 = vmatmul.mubr.f32.gmra.mrb[0].mxu0 %v494
    %v712 = vpop.f32.mrb[0].mxu0
    %v713 = vadd.f32 %v633, %v712
    %v714 = vpop.f32.mrb[0].mxu0
    %v715 = vadd.f32 %v637, %v714
    %716 = vmatprep.mubr.f32.mxu0 %v497
    %717 = vmatmul.mubr.f32.gmra.mrb[0].mxu0 %v496
    %v718 = vpop.f32.mrb[0].mxu0
    %v719 = vadd.f32 %v633, %v718
    %v720 = vpop.f32.mrb[0].mxu0
    %v721 = vadd.f32 %v637, %v720
    %722 = vmatprep.mubr.f32.mxu0 %v499
    %723 = vmatmul.mubr.f32.gmra.mrb[0].mxu0 %v498
    %v724 = vpop.f32.mrb[0].mxu0
    %v725 = vadd.f32 %v633, %v724
    %v726 = vpop.f32.mrb[0].mxu0
    %v727 = vadd.f32 %v637, %v726
    %728 = vmatprep.mubr.f32.mxu0 %v501
    %729 = vmatmul.mubr.f32.gmra.mrb[0].mxu0 %v500
    %v730 = vpop.f32.mrb[0].mxu0
    %v731 = vadd.f32 %v633, %v730
    %v732 = vpop.f32.mrb[0].mxu0
    %v733 = vadd.f32 %v637, %v732
    %734 = vmatprep.mubr.f32.mxu0 %v503
    %735 = vmatmul.mubr.f32.gmra.mrb[0].mxu0 %v502
    %v736 = vpop.f32.mrb[0].mxu0
    %v737 = vadd.f32 %v633, %v736
    %v738 = vpop.f32.mrb[0].mxu0
    %v739 = vadd.f32 %v637, %v738
    %740 = vmatprep.mubr.f32.mxu0 %v505
    %741 = vmatmul.mubr.f32.gmra.mrb[0].mxu0 %v504
    %v742 = vpop.f32.mrb[0].mxu0
    %v743 = vadd.f32 %v633, %v742
    %v744 = vpop.f32.mrb[0].mxu0
    %v745 = vadd.f32 %v637, %v744
    %746 = vmatprep.mubr.f32.mxu0 %v507
    %747 = vmatmul.mubr.f32.gmra.mrb[0].mxu0 %v506
    %v748 = vpop.f32.mrb[0].mxu0
    %v749 = vadd.f32 %v633, %v748
    %v750 = vpop.f32.mrb[0].mxu0
    %v751 = vadd.f32 %v637, %v750
    %752 = vmatprep.mubr.f32.mxu0 %v509
    %753 = vmatmul.mubr.f32.gmra.mrb[0].mxu0 %v508
    %v754 = vpop.f32.mrb[0].mxu0
    %v755 = vadd.f32 %v633, %v754
    %v756 = vpop.f32.mrb[0].mxu0
    %v757 = vadd.f32 %v637, %v756
    %758 = vmatprep.mubr.f32.mxu0 %v511
    %759 = vmatmul.mubr.f32.gmra.mrb[0].mxu0 %v510
    %v760 = vpop.f32.mrb[0].mxu0
    %v761 = vadd.f32 %v633, %v760
    %v762 = vpop.f32.mrb[0].mxu0
    %v763 = vadd.f32 %v637, %v762
    %764 = vmatprep.mubr.f32.mxu0 %v513
    %765 = vmatmul.mubr.f32.gmra.mrb[0].mxu0 %v512
    %v766 = vpop.f32.mrb[0].mxu0
    %v767 = vadd.f32 %v633, %v766
    %v768 = vpop.f32.mrb[0].mxu0
    %v769 = vadd.f32 %v637, %v768
    %770 = vmatprep.mubr.f32.mxu0 %v515
    %771 = vmatmul.mubr.f32.gmra.mrb[0].mxu0 %v514
    %v772 = vpop.f32.mrb[0].mxu0
    %v773 = vadd.f32 %v633, %v772
    %v774 = vpop.f32.mrb[0].mxu0
    %v775 = vadd.f32 %v637, %v774
    %776 = vmatprep.mubr.f32.mxu0 %v517
    %777 = vmatmul.mubr.f32.gmra.mrb[0].mxu0 %v516
    %v778 = vpop.f32.mrb[0].mxu0
    %v779 = vadd.f32 %v633, %v778
    %v780 = vpop.f32.mrb[0].mxu0
    %v781 = vadd.f32 %v637, %v780
    %782 = vmatprep.mubr.f32.mxu0 %v519
    %783 = vmatmul.mubr.f32.gmra.mrb[0].mxu0 %v518
    %v784 = vpop.f32.mrb[0].mxu0
    %v785 = vadd.f32 %v633, %v784
    %v786 = vpop.f32.mrb[0].mxu0
    %v787 = vadd.f32 %v637, %v786
    %788 = vmatprep.mubr.f32.mxu0 %v521
    %789 = vmatmul.mubr.f32.gmra.mrb[0].mxu0 %v520
    %v790 = vpop.f32.mrb[0].mxu0
    %v791 = vadd.f32 %v633, %v790
    %v792 = vpop.f32.mrb[0].mxu0
    %v793 = vadd.f32 %v637, %v792
    %794 = vmatprep.mubr.f32.mxu0 %v523
    %795 = vmatmul.mubr.f32.gmra.mrb[0].mxu0 %v522
    %v796 = vpop.f32.mrb[0].mxu0
    %v797 = vadd.f32 %v633, %v796
    %v798 = vpop.f32.mrb[0].mxu0
    %v799 = vadd.f32 %v637, %v798
    %800 = vmatprep.mubr.f32.mxu0 %v525
    %801 = vmatmul.mubr.f32.gmra.mrb[0].mxu0 %v524
    %v802 = vpop.f32.mrb[0].mxu0
    %v803 = vadd.f32 %v633, %v802
    %v804 = vpop.f32.mrb[0].mxu0
    %v805 = vadd.f32 %v637, %v804
    %806 = vmatprep.mubr.f32.mxu0 %v527
    %807 = vmatmul.mubr.f32.gmra.mrb[0].mxu0 %v526
    %v808 = vpop.f32.mrb[0].mxu0
    %v809 = vadd.f32 %v633, %v808
    %v810 = vpop.f32.mrb[0].mxu0
    %v811 = vadd.f32 %v637, %v810
    %812 = vmatprep.mubr.f32.mxu0 %v529
    %813 = vmatmul.mubr.f32.gmra.mrb[0].mxu0 %v528
    %v814 = vpop.f32.mrb[0].mxu0
    %v815 = vadd.f32 %v633, %v814
    %v816 = vpop.f32.mrb[0].mxu0
    %v817 = vadd.f32 %v637, %v816
    %818 = vmatprep.mubr.f32.mxu0 %v531
    %819 = vmatmul.mubr.f32.gmra.mrb[0].mxu0 %v530
    %v820 = vpop.f32.mrb[0].mxu0
    %v821 = vadd.f32 %v633, %v820
    %v822 = vpop.f32.mrb[0].mxu0
    %v823 = vadd.f32 %v637, %v822
    %824 = vmatprep.mubr.f32.mxu0 %v533
    %825 = vmatmul.mubr.f32.gmra.mrb[0].mxu0 %v532
    %v826 = vpop.f32.mrb[0].mxu0
    %v827 = vadd.f32 %v633, %v826
    %v828 = vpop.f32.mrb[0].mxu0
    %v829 = vadd.f32 %v637, %v828
    %830 = vmatprep.mubr.f32.mxu0 %v535
    %831 = vmatmul.mubr.f32.gmra.mrb[0].mxu0 %v534
    %v832 = vpop.f32.mrb[0].mxu0
    %v833 = vadd.f32 %v633, %v832
    %v834 = vpop.f32.mrb[0].mxu0
    %v835 = vadd.f32 %v637, %v834
    %836 = vmatprep.mubr.f32.mxu0 %v537
    %837 = vmatmul.mubr.f32.gmra.mrb[0].mxu0 %v536
    %v838 = vpop.f32.mrb[0].mxu0
    %v839 = vadd.f32 %v633, %v838
    %v840 = vpop.f32.mrb[0].mxu0
    %v841 = vadd.f32 %v637, %v840
    %842 = vmatprep.mubr.f32.mxu0 %v539
    %843 = vmatmul.mubr.f32.gmra.mrb[0].mxu0 %v538
    %v844 = vpop.f32.mrb[0].mxu0
    %v845 = vadd.f32 %v633, %v844
    %v846 = vpop.f32.mrb[0].mxu0
    %v847 = vadd.f32 %v637, %v846
    %848 = vmatprep.mubr.f32.mxu0 %v541
    %849 = vmatmul.mubr.f32.gmra.mrb[0].mxu0 %v540
    %v850 = vpop.f32.mrb[0].mxu0
    %v851 = vadd.f32 %v633, %v850
    %v852 = vpop.f32.mrb[0].mxu0
    %v853 = vadd.f32 %v637, %v852
    %854 = vmatprep.mubr.f32.mxu0 %v543
    %855 = vmatmul.mubr.f32.gmra.mrb[0].mxu0 %v542
    %v856 = vpop.f32.mrb[0].mxu0
    %v857 = vadd.f32 %v633, %v856
    %v858 = vpop.f32.mrb[0].mxu0
    %v859 = vadd.f32 %v637, %v858
    %860 = vmatprep.mubr.f32.mxu0 %v545
    %861 = vmatmul.mubr.f32.gmra.mrb[0].mxu0 %v544
    %v862 = vpop.f32.mrb[0].mxu0
    %v863 = vadd.f32 %v633, %v862
    %v864 = vpop.f32.mrb[0].mxu0
    %v865 = vadd.f32 %v637, %v864
    %866 = vmatprep.mubr.f32.mxu0 %v547
    %867 = vmatmul.mubr.f32.gmra.mrb[0].mxu0 %v546
    %v868 = vpop.f32.mrb[0].mxu0
    %v869 = vadd.f32 %v633, %v868
    %v870 = vpop.f32.mrb[0].mxu0
    %v871 = vadd.f32 %v637, %v870
    %872 = vmatprep.mubr.f32.mxu0 %v549
    %873 = vmatmul.mubr.f32.gmra.mrb[0].mxu0 %v548
    %v874 = vpop.f32.mrb[0].mxu0
    %v875 = vadd.f32 %v633, %v874
    %v876 = vpop.f32.mrb[0].mxu0
    %v877 = vadd.f32 %v637, %v876
    %878 = vmatprep.mubr.f32.mxu0 %v551
    %879 = vmatmul.mubr.f32.gmra.mrb[0].mxu0 %v550
    %v880 = vpop.f32.mrb[0].mxu0
    %v881 = vadd.f32 %v633, %v880
    %v882 = vpop.f32.mrb[0].mxu0
    %v883 = vadd.f32 %v637, %v882
    %884 = vmatprep.mubr.f32.mxu0 %v553
    %885 = vmatmul.mubr.f32.gmra.mrb[0].mxu0 %v552
    %v886 = vpop.f32.mrb[0].mxu0
    %v887 = vadd.f32 %v633, %v886
    %v888 = vpop.f32.mrb[0].mxu0
    %v889 = vadd.f32 %v637, %v888
    %890 = vmatprep.mubr.f32.mxu0 %v555
    %891 = vmatmul.mubr.f32.gmra.mrb[0].mxu0 %v554
    %v892 = vpop.f32.mrb[0].mxu0
    %v893 = vadd.f32 %v633, %v892
    %v894 = vpop.f32.mrb[0].mxu0
    %v895 = vadd.f32 %v637, %v894
    %896 = vmatprep.mubr.f32.mxu0 %v557
    %897 = vmatmul.mubr.f32.gmra.mrb[0].mxu0 %v556
    %v898 = vpop.f32.mrb[0].mxu0
    %v899 = vadd.f32 %v633, %v898
    %v900 = vpop.f32.mrb[0].mxu0
    %v901 = vadd.f32 %v637, %v900
    %902 = vmatprep.mubr.f32.mxu0 %v559
    %903 = vmatmul.mubr.f32.gmra.mrb[0].mxu0 %v558
    %v904 = vpop.f32.mrb[0].mxu0
    %v905 = vadd.f32 %v633, %v904
    %v906 = vpop.f32.mrb[0].mxu0
    %v907 = vadd.f32 %v637, %v906
    %908 = vmatprep.mubr.f32.mxu0 %v561
    %909 = vmatmul.mubr.f32.gmra.mrb[0].mxu0 %v560
    %v910 = vpop.f32.mrb[0].mxu0
    %v911 = vadd.f32 %v633, %v910
    %v912 = vpop.f32.mrb[0].mxu0
    %v913 = vadd.f32 %v637, %v912
    %914 = vmatprep.mubr.f32.mxu0 %v563
    %915 = vmatmul.mubr.f32.gmra.mrb[0].mxu0 %v562
    %v916 = vpop.f32.mrb[0].mxu0
    %v917 = vadd.f32 %v633, %v916
    %v918 = vpop.f32.mrb[0].mxu0
    %v919 = vadd.f32 %v637, %v918
    %920 = vdwg.mxu0
    %v921 = vmax.f32 %v707, 0.0
    %v922 = vmax.f32 %v709, 0.0
    %v923 = vmax.f32 %v713, 0.0
    %v924 = vmax.f32 %v715, 0.0
    %v925 = vmax.f32 %v719, 0.0
    %v926 = vmax.f32 %v721, 0.0
    %v927 = vmax.f32 %v725, 0.0
    %v928 = vmax.f32 %v727, 0.0
    %v929 = vmax.f32 %v731, 0.0
    %v930 = vmax.f32 %v733, 0.0
    %v931 = vmax.f32 %v737, 0.0
    %v932 = vmax.f32 %v739, 0.0
    %v933 = vmax.f32 %v743, 0.0
    %v934 = vmax.f32 %v745, 0.0
    %v935 = vmax.f32 %v749, 0.0
    %v936 = vmax.f32 %v751, 0.0
    %v937 = vmax.f32 %v755, 0.0
    %v938 = vmax.f32 %v757, 0.0
    %v939 = vmax.f32 %v761, 0.0
    %v940 = vmax.f32 %v763, 0.0
    %v941 = vmax.f32 %v767, 0.0
    %v942 = vmax.f32 %v769, 0.0
    %v943 = vmax.f32 %v773, 0.0
    %v944 = vmax.f32 %v775, 0.0
    %v945 = vmax.f32 %v779, 0.0
    %v946 = vmax.f32 %v781, 0.0
    %v947 = vmax.f32 %v785, 0.0
    %v948 = vmax.f32 %v787, 0.0
    %v949 = vmax.f32 %v791, 0.0
    %v950 = vmax.f32 %v793, 0.0
    %v951 = vmax.f32 %v797, 0.0
    %v952 = vmax.f32 %v799, 0.0
    %v953 = vmax.f32 %v803, 0.0
    %v954 = vmax.f32 %v805, 0.0
    %v955 = vmax.f32 %v809, 0.0
    %v956 = vmax.f32 %v811, 0.0
    %v957 = vmax.f32 %v815, 0.0
    %v958 = vmax.f32 %v817, 0.0
    %v959 = vmax.f32 %v821, 0.0
    %v960 = vmax.f32 %v823, 0.0
    %v961 = vmax.f32 %v827, 0.0
    %v962 = vmax.f32 %v829, 0.0
    %v963 = vmax.f32 %v833, 0.0
    %v964 = vmax.f32 %v835, 0.0
    %v965 = vmax.f32 %v839, 0.0
    %v966 = vmax.f32 %v841, 0.0
    %v967 = vmax.f32 %v845, 0.0
    %v968 = vmax.f32 %v847, 0.0
    %v969 = vmax.f32 %v851, 0.0
    %v970 = vmax.f32 %v853, 0.0
    %v971 = vmax.f32 %v857, 0.0
    %v972 = vmax.f32 %v859, 0.0
    %v973 = vmax.f32 %v863, 0.0
    %v974 = vmax.f32 %v865, 0.0
    %v975 = vmax.f32 %v869, 0.0
    %v976 = vmax.f32 %v871, 0.0
    %v977 = vmax.f32 %v875, 0.0
    %v978 = vmax.f32 %v877, 0.0
    %v979 = vmax.f32 %v881, 0.0
    %v980 = vmax.f32 %v883, 0.0
    %v981 = vmax.f32 %v887, 0.0
    %v982 = vmax.f32 %v889, 0.0
    %v983 = vmax.f32 %v893, 0.0
    %v984 = vmax.f32 %v895, 0.0
    %v985 = vmax.f32 %v899, 0.0
    %v986 = vmax.f32 %v901, 0.0
    %v987 = vmax.f32 %v905, 0.0
    %v988 = vmax.f32 %v907, 0.0
    %v989 = vmax.f32 %v911, 0.0
    %v990 = vmax.f32 %v913, 0.0
    %v991 = vmax.f32 %v917, 0.0
    %v992 = vmax.f32 %v919, 0.0
    %v993 = vld [vmem:[%s5] sm:$0xff]
    %v994 = vld [vmem:[%s5 + $0x8] sm:$0xff]
    %v995 = vld [vmem:[%s5 + $0x10] sm:$0xff]
    %v996 = vld [vmem:[%s5 + $0x18] sm:$0xff]
    %v997 = vld [vmem:[%s5 + $0x20] sm:$0xff]
    %v998 = vld [vmem:[%s5 + $0x28] sm:$0xff]
    %v999 = vld [vmem:[%s5 + $0x30] sm:$0xff]
    %v1000 = vld [vmem:[%s5 + $0x38] sm:$0xff]
    %v1001 = vld [vmem:[%s5 + $0x40] sm:$0xff]
    %v1002 = vld [vmem:[%s5 + $0x48] sm:$0xff]
    %v1003 = vld [vmem:[%s5 + $0x50] sm:$0xff]
    %v1004 = vld [vmem:[%s5 + $0x58] sm:$0xff]
    %v1005 = vld [vmem:[%s5 + $0x60] sm:$0xff]
    %v1006 = vld [vmem:[%s5 + $0x68] sm:$0xff]
    %v1007 = vld [vmem:[%s5 + $0x70] sm:$0xff]
    %v1008 = vld [vmem:[%s5 + $0x78] sm:$0xff]
    %v1009 = vld [vmem:[%s5 + $0x80] sm:$0xff]
    %v1010 = vld [vmem:[%s5 + $0x88] sm:$0xff]
    %v1011 = vld [vmem:[%s5 + $0x90] sm:$0xff]
    %v1012 = vld [vmem:[%s5 + $0x98] sm:$0xff]
    %v1013 = vld [vmem:[%s5 + $0xa0] sm:$0xff]
    %v1014 = vld [vmem:[%s5 + $0xa8] sm:$0xff]
    %v1015 = vld [vmem:[%s5 + $0xb0] sm:$0xff]
    %v1016 = vld [vmem:[%s5 + $0xb8] sm:$0xff]
    %v1017 = vld [vmem:[%s5 + $0xc0] sm:$0xff]
    %v1018 = vld [vmem:[%s5 + $0xc8] sm:$0xff]
    %v1019 = vld [vmem:[%s5 + $0xd0] sm:$0xff]
    %v1020 = vld [vmem:[%s5 + $0xd8] sm:$0xff]
    %v1021 = vld [vmem:[%s5 + $0xe0] sm:$0xff]
    %v1022 = vld [vmem:[%s5 + $0xe8] sm:$0xff]
    %v1023 = vld [vmem:[%s5 + $0xf0] sm:$0xff]
    %v1024 = vld [vmem:[%s5 + $0xf8] sm:$0xff]
    %v1025 = vld [vmem:[%s6] sm:$0x1]
    %v1027 = vlaneseq
    %v1028 = vshrl.u32 %v1027, 7
    %v1029 = vsub.s32 0, %v1028
    %v1030 = vrot.slane %v1025, %v1029
    %1032 = vmatprep.subr.mxu0 0.0
    %1033 = vmatpush1.msra.mxu0 %v993
    %1034 = vmatprep.subr.mxu0 0.0
    %1035 = vmatpush1.msra.mxu0 %v994
    %1036 = vmatprep.subr.mxu0 0.0
    %1037 = vmatpush1.msra.mxu0 %v995
    %1038 = vmatprep.subr.mxu0 0.0
    %1039 = vmatpush1.msra.mxu0 %v996
    %1040 = vmatprep.subr.mxu0 0.0
    %1041 = vmatpush1.msra.mxu0 %v997
    %1042 = vmatprep.subr.mxu0 0.0
    %1043 = vmatpush1.msra.mxu0 %v998
    %1044 = vmatprep.subr.mxu0 0.0
    %1045 = vmatpush1.msra.mxu0 %v999
    %1046 = vmatprep.subr.mxu0 0.0
    %1047 = vmatpush1.msra.mxu0 %v1000
    %1048 = vmatprep.subr.mxu0 0.0
    %1049 = vmatpush1.msra.mxu0 %v1001
    %1050 = vmatprep.subr.mxu0 0.0
    %1051 = vmatpush1.msra.mxu0 %v1002
    %1052 = vmatprep.subr.mxu0 0.0
    %1053 = vmatpush1.msra.mxu0 %v1003
    %1054 = vmatprep.subr.mxu0 0.0
    %1055 = vmatpush1.msra.mxu0 %v1004
    %1056 = vmatprep.subr.mxu0 0.0
    %1057 = vmatpush1.msra.mxu0 %v1005
    %1058 = vmatprep.subr.mxu0 0.0
    %1059 = vmatpush1.msra.mxu0 %v1006
    %1060 = vmatprep.subr.mxu0 0.0
    %1061 = vmatpush1.msra.mxu0 %v1007
    %1062 = vmatprep.subr.mxu0 0.0
    %1063 = vmatpush1.msra.mxu0 %v1008
    %1064 = vmatprep.subr.mxu0 0.0
    %1065 = vmatpush1.msra.mxu0 %v1009
    %1066 = vmatprep.subr.mxu0 0.0
    %1067 = vmatpush1.msra.mxu0 %v1010
    %1068 = vmatprep.subr.mxu0 0.0
    %1069 = vmatpush1.msra.mxu0 %v1011
    %1070 = vmatprep.subr.mxu0 0.0
    %1071 = vmatpush1.msra.mxu0 %v1012
    %1072 = vmatprep.subr.mxu0 0.0
    %1073 = vmatpush1.msra.mxu0 %v1013
    %1074 = vmatprep.subr.mxu0 0.0
    %1075 = vmatpush1.msra.mxu0 %v1014
    %1076 = vmatprep.subr.mxu0 0.0
    %1077 = vmatpush1.msra.mxu0 %v1015
    %1078 = vmatprep.subr.mxu0 0.0
    %1079 = vmatpush1.msra.mxu0 %v1016
    %1080 = vmatprep.subr.mxu0 0.0
    %1081 = vmatpush1.msra.mxu0 %v1017
    %1082 = vmatprep.subr.mxu0 0.0
    %1083 = vmatpush1.msra.mxu0 %v1018
    %1084 = vmatprep.subr.mxu0 0.0
    %1085 = vmatpush1.msra.mxu0 %v1019
    %1086 = vmatprep.subr.mxu0 0.0
    %1087 = vmatpush1.msra.mxu0 %v1020
    %1088 = vmatprep.subr.mxu0 0.0
    %1089 = vmatpush1.msra.mxu0 %v1021
    %1090 = vmatprep.subr.mxu0 0.0
    %1091 = vmatpush1.msra.mxu0 %v1022
    %1092 = vmatprep.subr.mxu0 0.0
    %1093 = vmatpush1.msra.mxu0 %v1023
    %1094 = vmatprep.subr.mxu0 0.0
    %1095 = vmatpush1.msra.mxu0 %v1024
    %1096 = vmatprep.mubr.f32.mxu0 %v922
    %1097 = vmatmul.mubr.f32.gmra.mrb[0].mxu0 %v921
    %v1098 = vpop.f32.mrb[0].mxu0
    %v1099 = vadd.f32 %v1030, %v1098
    %v1100 = vpop.f32.mrb[0].mxu0
    %1101 = vmatprep.mubr.f32.mxu0 %v924
    %1102 = vmatmul.mubr.f32.gmra.mrb[0].mxu0 %v923
    %v1103 = vpop.f32.mrb[0].mxu0
    %v1104 = vadd.f32 %v1030, %v1103
    %v1105 = vpop.f32.mrb[0].mxu0
    %1106 = vmatprep.mubr.f32.mxu0 %v926
    %1107 = vmatmul.mubr.f32.gmra.mrb[0].mxu0 %v925
    %v1108 = vpop.f32.mrb[0].mxu0
    %v1109 = vadd.f32 %v1030, %v1108
    %v1110 = vpop.f32.mrb[0].mxu0
    %1111 = vmatprep.mubr.f32.mxu0 %v928
    %1112 = vmatmul.mubr.f32.gmra.mrb[0].mxu0 %v927
    %v1113 = vpop.f32.mrb[0].mxu0
    %v1114 = vadd.f32 %v1030, %v1113
    %v1115 = vpop.f32.mrb[0].mxu0
    %1116 = vmatprep.mubr.f32.mxu0 %v930
    %1117 = vmatmul.mubr.f32.gmra.mrb[0].mxu0 %v929
    %v1118 = vpop.f32.mrb[0].mxu0
    %v1119 = vadd.f32 %v1030, %v1118
    %v1120 = vpop.f32.mrb[0].mxu0
    %1121 = vmatprep.mubr.f32.mxu0 %v932
    %1122 = vmatmul.mubr.f32.gmra.mrb[0].mxu0 %v931
    %v1123 = vpop.f32.mrb[0].mxu0
    %v1124 = vadd.f32 %v1030, %v1123
    %v1125 = vpop.f32.mrb[0].mxu0
    %1126 = vmatprep.mubr.f32.mxu0 %v934
    %1127 = vmatmul.mubr.f32.gmra.mrb[0].mxu0 %v933
    %v1128 = vpop.f32.mrb[0].mxu0
    %v1129 = vadd.f32 %v1030, %v1128
    %v1130 = vpop.f32.mrb[0].mxu0
    %1131 = vmatprep.mubr.f32.mxu0 %v936
    %1132 = vmatmul.mubr.f32.gmra.mrb[0].mxu0 %v935
    %v1133 = vpop.f32.mrb[0].mxu0
    %v1134 = vadd.f32 %v1030, %v1133
    %v1135 = vpop.f32.mrb[0].mxu0
    %1136 = vmatprep.mubr.f32.mxu0 %v938
    %1137 = vmatmul.mubr.f32.gmra.mrb[0].mxu0 %v937
    %v1138 = vpop.f32.mrb[0].mxu0
    %v1139 = vadd.f32 %v1030, %v1138
    %v1140 = vpop.f32.mrb[0].mxu0
    %1141 = vmatprep.mubr.f32.mxu0 %v940
    %1142 = vmatmul.mubr.f32.gmra.mrb[0].mxu0 %v939
    %v1143 = vpop.f32.mrb[0].mxu0
    %v1144 = vadd.f32 %v1030, %v1143
    %v1145 = vpop.f32.mrb[0].mxu0
    %1146 = vmatprep.mubr.f32.mxu0 %v942
    %1147 = vmatmul.mubr.f32.gmra.mrb[0].mxu0 %v941
    %v1148 = vpop.f32.mrb[0].mxu0
    %v1149 = vadd.f32 %v1030, %v1148
    %v1150 = vpop.f32.mrb[0].mxu0
    %1151 = vmatprep.mubr.f32.mxu0 %v944
    %1152 = vmatmul.mubr.f32.gmra.mrb[0].mxu0 %v943
    %v1153 = vpop.f32.mrb[0].mxu0
    %v1154 = vadd.f32 %v1030, %v1153
    %v1155 = vpop.f32.mrb[0].mxu0
    %1156 = vmatprep.mubr.f32.mxu0 %v946
    %1157 = vmatmul.mubr.f32.gmra.mrb[0].mxu0 %v945
    %v1158 = vpop.f32.mrb[0].mxu0
    %v1159 = vadd.f32 %v1030, %v1158
    %v1160 = vpop.f32.mrb[0].mxu0
    %1161 = vmatprep.mubr.f32.mxu0 %v948
    %1162 = vmatmul.mubr.f32.gmra.mrb[0].mxu0 %v947
    %v1163 = vpop.f32.mrb[0].mxu0
    %v1164 = vadd.f32 %v1030, %v1163
    %v1165 = vpop.f32.mrb[0].mxu0
    %1166 = vmatprep.mubr.f32.mxu0 %v950
    %1167 = vmatmul.mubr.f32.gmra.mrb[0].mxu0 %v949
    %v1168 = vpop.f32.mrb[0].mxu0
    %v1169 = vadd.f32 %v1030, %v1168
    %v1170 = vpop.f32.mrb[0].mxu0
    %1171 = vmatprep.mubr.f32.mxu0 %v952
    %1172 = vmatmul.mubr.f32.gmra.mrb[0].mxu0 %v951
    %v1173 = vpop.f32.mrb[0].mxu0
    %v1174 = vadd.f32 %v1030, %v1173
    %v1175 = vpop.f32.mrb[0].mxu0
    %1176 = vmatprep.mubr.f32.mxu0 %v954
    %1177 = vmatmul.mubr.f32.gmra.mrb[0].mxu0 %v953
    %v1178 = vpop.f32.mrb[0].mxu0
    %v1179 = vadd.f32 %v1030, %v1178
    %v1180 = vpop.f32.mrb[0].mxu0
    %1181 = vmatprep.mubr.f32.mxu0 %v956
    %1182 = vmatmul.mubr.f32.gmra.mrb[0].mxu0 %v955
    %v1183 = vpop.f32.mrb[0].mxu0
    %v1184 = vadd.f32 %v1030, %v1183
    %v1185 = vpop.f32.mrb[0].mxu0
    %1186 = vmatprep.mubr.f32.mxu0 %v958
    %1187 = vmatmul.mubr.f32.gmra.mrb[0].mxu0 %v957
    %v1188 = vpop.f32.mrb[0].mxu0
    %v1189 = vadd.f32 %v1030, %v1188
    %v1190 = vpop.f32.mrb[0].mxu0
    %1191 = vmatprep.mubr.f32.mxu0 %v960
    %1192 = vmatmul.mubr.f32.gmra.mrb[0].mxu0 %v959
    %v1193 = vpop.f32.mrb[0].mxu0
    %v1194 = vadd.f32 %v1030, %v1193
    %v1195 = vpop.f32.mrb[0].mxu0
    %1196 = vmatprep.mubr.f32.mxu0 %v962
    %1197 = vmatmul.mubr.f32.gmra.mrb[0].mxu0 %v961
    %v1198 = vpop.f32.mrb[0].mxu0
    %v1199 = vadd.f32 %v1030, %v1198
    %v1200 = vpop.f32.mrb[0].mxu0
    %1201 = vmatprep.mubr.f32.mxu0 %v964
    %1202 = vmatmul.mubr.f32.gmra.mrb[0].mxu0 %v963
    %v1203 = vpop.f32.mrb[0].mxu0
    %v1204 = vadd.f32 %v1030, %v1203
    %v1205 = vpop.f32.mrb[0].mxu0
    %1206 = vmatprep.mubr.f32.mxu0 %v966
    %1207 = vmatmul.mubr.f32.gmra.mrb[0].mxu0 %v965
    %v1208 = vpop.f32.mrb[0].mxu0
    %v1209 = vadd.f32 %v1030, %v1208
    %v1210 = vpop.f32.mrb[0].mxu0
    %1211 = vmatprep.mubr.f32.mxu0 %v968
    %1212 = vmatmul.mubr.f32.gmra.mrb[0].mxu0 %v967
    %v1213 = vpop.f32.mrb[0].mxu0
    %v1214 = vadd.f32 %v1030, %v1213
    %v1215 = vpop.f32.mrb[0].mxu0
    %1216 = vmatprep.mubr.f32.mxu0 %v970
    %1217 = vmatmul.mubr.f32.gmra.mrb[0].mxu0 %v969
    %v1218 = vpop.f32.mrb[0].mxu0
    %v1219 = vadd.f32 %v1030, %v1218
    %v1220 = vpop.f32.mrb[0].mxu0
    %1221 = vmatprep.mubr.f32.mxu0 %v972
    %1222 = vmatmul.mubr.f32.gmra.mrb[0].mxu0 %v971
    %v1223 = vpop.f32.mrb[0].mxu0
    %v1224 = vadd.f32 %v1030, %v1223
    %v1225 = vpop.f32.mrb[0].mxu0
    %1226 = vmatprep.mubr.f32.mxu0 %v974
    %1227 = vmatmul.mubr.f32.gmra.mrb[0].mxu0 %v973
    %v1228 = vpop.f32.mrb[0].mxu0
    %v1229 = vadd.f32 %v1030, %v1228
    %v1230 = vpop.f32.mrb[0].mxu0
    %1231 = vmatprep.mubr.f32.mxu0 %v976
    %1232 = vmatmul.mubr.f32.gmra.mrb[0].mxu0 %v975
    %v1233 = vpop.f32.mrb[0].mxu0
    %v1234 = vadd.f32 %v1030, %v1233
    %v1235 = vpop.f32.mrb[0].mxu0
    %1236 = vmatprep.mubr.f32.mxu0 %v978
    %1237 = vmatmul.mubr.f32.gmra.mrb[0].mxu0 %v977
    %v1238 = vpop.f32.mrb[0].mxu0
    %v1239 = vadd.f32 %v1030, %v1238
    %v1240 = vpop.f32.mrb[0].mxu0
    %1241 = vmatprep.mubr.f32.mxu0 %v980
    %1242 = vmatmul.mubr.f32.gmra.mrb[0].mxu0 %v979
    %v1243 = vpop.f32.mrb[0].mxu0
    %v1244 = vadd.f32 %v1030, %v1243
    %v1245 = vpop.f32.mrb[0].mxu0
    %1246 = vmatprep.mubr.f32.mxu0 %v982
    %1247 = vmatmul.mubr.f32.gmra.mrb[0].mxu0 %v981
    %v1248 = vpop.f32.mrb[0].mxu0
    %v1249 = vadd.f32 %v1030, %v1248
    %v1250 = vpop.f32.mrb[0].mxu0
    %1251 = vmatprep.mubr.f32.mxu0 %v984
    %1252 = vmatmul.mubr.f32.gmra.mrb[0].mxu0 %v983
    %v1253 = vpop.f32.mrb[0].mxu0
    %v1254 = vadd.f32 %v1030, %v1253
    %v1255 = vpop.f32.mrb[0].mxu0
    %1256 = vmatprep.mubr.f32.mxu0 %v986
    %1257 = vmatmul.mubr.f32.gmra.mrb[0].mxu0 %v985
    %v1258 = vpop.f32.mrb[0].mxu0
    %v1259 = vadd.f32 %v1030, %v1258
    %v1260 = vpop.f32.mrb[0].mxu0
    %1261 = vmatprep.mubr.f32.mxu0 %v988
    %1262 = vmatmul.mubr.f32.gmra.mrb[0].mxu0 %v987
    %v1263 = vpop.f32.mrb[0].mxu0
    %v1264 = vadd.f32 %v1030, %v1263
    %v1265 = vpop.f32.mrb[0].mxu0
    %1266 = vmatprep.mubr.f32.mxu0 %v990
    %1267 = vmatmul.mubr.f32.gmra.mrb[0].mxu0 %v989
    %v1268 = vpop.f32.mrb[0].mxu0
    %v1269 = vadd.f32 %v1030, %v1268
    %v1270 = vpop.f32.mrb[0].mxu0
    %1271 = vmatprep.mubr.f32.mxu0 %v992
    %1272 = vmatmul.mubr.f32.gmra.mrb[0].mxu0 %v991
    %v1273 = vpop.f32.mrb[0].mxu0
    %v1274 = vadd.f32 %v1030, %v1273
    %v1275 = vpop.f32.mrb[0].mxu0
    %1276 = vdwg.mxu0
    %1277 = vst [vmem:[#allocation3] sm:$0xff] %v1099
    %1278 = vst [vmem:[#allocation3 + $0x8] sm:$0xff] %v1104
    %1279 = vst [vmem:[#allocation3 + $0x10] sm:$0xff] %v1109
    %1280 = vst [vmem:[#allocation3 + $0x18] sm:$0xff] %v1114
    %1281 = vst [vmem:[#allocation3 + $0x20] sm:$0xff] %v1119
    %1282 = vst [vmem:[#allocation3 + $0x28] sm:$0xff] %v1124
    %1283 = vst [vmem:[#allocation3 + $0x30] sm:$0xff] %v1129
    %1284 = vst [vmem:[#allocation3 + $0x38] sm:$0xff] %v1134
    %1285 = vst [vmem:[#allocation3 + $0x40] sm:$0xff] %v1139
    %1286 = vst [vmem:[#allocation3 + $0x48] sm:$0xff] %v1144
    %1287 = vst [vmem:[#allocation3 + $0x50] sm:$0xff] %v1149
    %1288 = vst [vmem:[#allocation3 + $0x58] sm:$0xff] %v1154
    %1289 = vst [vmem:[#allocation3 + $0x60] sm:$0xff] %v1159
    %1290 = vst [vmem:[#allocation3 + $0x68] sm:$0xff] %v1164
    %1291 = vst [vmem:[#allocation3 + $0x70] sm:$0xff] %v1169
    %1292 = vst [vmem:[#allocation3 + $0x78] sm:$0xff] %v1174
    %1293 = vst [vmem:[#allocation3 + $0x80] sm:$0xff] %v1179
    %1294 = vst [vmem:[#allocation3 + $0x88] sm:$0xff] %v1184
    %1295 = vst [vmem:[#allocation3 + $0x90] sm:$0xff] %v1189
    %1296 = vst [vmem:[#allocation3 + $0x98] sm:$0xff] %v1194
    %1297 = vst [vmem:[#allocation3 + $0xa0] sm:$0xff] %v1199
    %1298 = vst [vmem:[#allocation3 + $0xa8] sm:$0xff] %v1204
    %1299 = vst [vmem:[#allocation3 + $0xb0] sm:$0xff] %v1209
    %1300 = vst [vmem:[#allocation3 + $0xb8] sm:$0xff] %v1214
    %1301 = vst [vmem:[#allocation3 + $0xc0] sm:$0xff] %v1219
    %1302 = vst [vmem:[#allocation3 + $0xc8] sm:$0xff] %v1224
    %1303 = vst [vmem:[#allocation3 + $0xd0] sm:$0xff] %v1229
    %1304 = vst [vmem:[#allocation3 + $0xd8] sm:$0xff] %v1234
    %1305 = vst [vmem:[#allocation3 + $0xe0] sm:$0xff] %v1239
    %1306 = vst [vmem:[#allocation3 + $0xe8] sm:$0xff] %v1244
    %1307 = vst [vmem:[#allocation3 + $0xf0] sm:$0xff] %v1249
    %1308 = vst [vmem:[#allocation3 + $0xf8] sm:$0xff] %v1254
    %1309 = vst [vmem:[#allocation3 + $0x100] sm:$0xff] %v1259
    %1310 = vst [vmem:[#allocation3 + $0x108] sm:$0xff] %v1264
    %1311 = vst [vmem:[#allocation3 + $0x110] sm:$0xff] %v1269
    %1312 = vst [vmem:[#allocation3 + $0x118] sm:$0xff] %v1274
    %v1313 = vmul.f32 %v1099, %v1099
    %v1314 = vmul.f32 %v1104, %v1104
    %v1315 = vmul.f32 %v1109, %v1109
    %v1316 = vmul.f32 %v1114, %v1114
    %v1317 = vmul.f32 %v1119, %v1119
    %v1318 = vmul.f32 %v1124, %v1124
    %v1319 = vmul.f32 %v1129, %v1129
    %v1320 = vmul.f32 %v1134, %v1134
    %v1321 = vmul.f32 %v1139, %v1139
    %v1322 = vmul.f32 %v1144, %v1144
    %v1323 = vmul.f32 %v1149, %v1149
    %v1324 = vmul.f32 %v1154, %v1154
    %v1325 = vmul.f32 %v1159, %v1159
    %v1326 = vmul.f32 %v1164, %v1164
    %v1327 = vmul.f32 %v1169, %v1169
    %v1328 = vmul.f32 %v1174, %v1174
    %v1329 = vmul.f32 %v1179, %v1179
    %v1330 = vmul.f32 %v1184, %v1184
    %v1331 = vmul.f32 %v1189, %v1189
    %v1332 = vmul.f32 %v1194, %v1194
    %v1333 = vmul.f32 %v1199, %v1199
    %v1334 = vmul.f32 %v1204, %v1204
    %v1335 = vmul.f32 %v1209, %v1209
    %v1336 = vmul.f32 %v1214, %v1214
    %v1337 = vmul.f32 %v1219, %v1219
    %v1338 = vmul.f32 %v1224, %v1224
    %v1339 = vmul.f32 %v1229, %v1229
    %v1340 = vmul.f32 %v1234, %v1234
    %v1341 = vmul.f32 %v1239, %v1239
    %v1342 = vmul.f32 %v1244, %v1244
    %v1343 = vmul.f32 %v1249, %v1249
    %v1344 = vmul.f32 %v1254, %v1254
    %v1345 = vmul.f32 %v1259, %v1259
    %v1346 = vmul.f32 %v1264, %v1264
    %v1347 = vmul.f32 %v1269, %v1269
    %v1348 = vmul.f32 %v1274, %v1274
    %v1349 = vadd.f32 %v1313, %v1314
    %v1350 = vadd.f32 %v1349, %v1315
    %v1351 = vadd.f32 %v1350, %v1316
    %v1352 = vadd.f32 %v1351, %v1317
    %v1353 = vadd.f32 %v1352, %v1318
    %v1354 = vadd.f32 %v1353, %v1319
    %v1355 = vadd.f32 %v1354, %v1320
    %v1356 = vadd.f32 %v1355, %v1321
    %v1357 = vadd.f32 %v1356, %v1322
    %v1358 = vadd.f32 %v1357, %v1323
    %v1359 = vadd.f32 %v1358, %v1324
    %v1360 = vadd.f32 %v1359, %v1325
    %v1361 = vadd.f32 %v1360, %v1326
    %v1362 = vadd.f32 %v1361, %v1327
    %v1363 = vadd.f32 %v1362, %v1328
    %v1364 = vadd.f32 %v1363, %v1329
    %v1365 = vadd.f32 %v1364, %v1330
    %v1366 = vrot.slane %v1365, 4
    %v1367 = vadd.f32 %v1365, %v1366
    %v1368 = vrot.slane %v1367, 2
    %v1369 = vadd.f32 %v1367, %v1368
    %v1370 = vrot.slane %v1369, 1
    %v1371 = vadd.f32 %v1369, %v1370
    %v1372 = vadd.f32 %v1331, %v1332
    %v1373 = vadd.f32 %v1372, %v1333
    %v1374 = vadd.f32 %v1373, %v1334
    %v1375 = vadd.f32 %v1374, %v1335
    %v1376 = vadd.f32 %v1375, %v1336
    %v1377 = vadd.f32 %v1376, %v1337
    %v1378 = vadd.f32 %v1377, %v1338
    %v1379 = vadd.f32 %v1378, %v1339
    %v1380 = vadd.f32 %v1379, %v1340
    %v1381 = vadd.f32 %v1380, %v1341
    %v1382 = vadd.f32 %v1381, %v1342
    %v1383 = vadd.f32 %v1382, %v1343
    %v1384 = vadd.f32 %v1383, %v1344
    %v1385 = vadd.f32 %v1384, %v1345
    %v1386 = vadd.f32 %v1385, %v1346
    %v1387 = vadd.f32 %v1386, %v1347
    %v1388 = vadd.f32 %v1387, %v1348
    %v1389 = vrot.slane %v1388, 4
    %v1390 = vadd.f32 %v1388, %v1389
    %v1391 = vrot.slane %v1390, 2
    %v1392 = vadd.f32 %v1390, %v1391
    %v1393 = vrot.slane %v1392, 1
    %v1394 = vadd.f32 %v1392, %v1393
    %v1395 = vrsqrt.pop %v1371
    %v1396 = vmul.f32 %v1371, %v1395
    %vm1397 = vcmp.eq.f32.partialorder %v1371, inf
    %v1398 = vsel %vm1397, %v1371, %v1396
    %vm1399 = vcmp.eq.f32.partialorder %v1371, 0.0
    %v1400 = vand.u32 %v1371, 2147483648
    %v1401 = vsel %vm1399, %v1400, %v1398
    %v1402 = vrsqrt.pop %v1394
    %v1403 = vmul.f32 %v1394, %v1402
    %vm1404 = vcmp.eq.f32.partialorder %v1394, inf
    %v1405 = vsel %vm1404, %v1394, %v1403
    %vm1406 = vcmp.eq.f32.partialorder %v1394, 0.0
    %v1407 = vand.u32 %v1394, 2147483648
    %v1408 = vsel %vm1406, %v1407, %v1405
    %v1409 = vmax.f32 %v1401, 1e-12
    %v1410 = vmax.f32 %v1408, 1e-12
    %v1411 = vrcp.pop %v1409
    %v1412 = vrcp.pop %v1410
    %v1413 = vmul.f32 %v1099, %v1411
    %v1414 = vmul.f32 %v1104, %v1411
    %v1415 = vmul.f32 %v1109, %v1411
    %v1416 = vmul.f32 %v1114, %v1411
    %v1417 = vmul.f32 %v1119, %v1411
    %v1418 = vmul.f32 %v1124, %v1411
    %v1419 = vmul.f32 %v1129, %v1411
    %v1420 = vmul.f32 %v1134, %v1411
    %v1421 = vmul.f32 %v1139, %v1411
    %v1422 = vmul.f32 %v1144, %v1411
    %v1423 = vmul.f32 %v1149, %v1411
    %v1424 = vmul.f32 %v1154, %v1411
    %v1425 = vmul.f32 %v1159, %v1411
    %v1426 = vmul.f32 %v1164, %v1411
    %v1427 = vmul.f32 %v1169, %v1411
    %v1428 = vmul.f32 %v1174, %v1411
    %v1429 = vmul.f32 %v1179, %v1411
    %v1430 = vmul.f32 %v1184, %v1411
    %v1431 = vmul.f32 %v1189, %v1412
    %v1432 = vmul.f32 %v1194, %v1412
    %v1433 = vmul.f32 %v1199, %v1412
    %v1434 = vmul.f32 %v1204, %v1412
    %v1435 = vmul.f32 %v1209, %v1412
    %v1436 = vmul.f32 %v1214, %v1412
    %v1437 = vmul.f32 %v1219, %v1412
    %v1438 = vmul.f32 %v1224, %v1412
    %v1439 = vmul.f32 %v1229, %v1412
    %v1440 = vmul.f32 %v1234, %v1412
    %v1441 = vmul.f32 %v1239, %v1412
    %v1442 = vmul.f32 %v1244, %v1412
    %v1443 = vmul.f32 %v1249, %v1412
    %v1444 = vmul.f32 %v1254, %v1412
    %v1445 = vmul.f32 %v1259, %v1412
    %v1446 = vmul.f32 %v1264, %v1412
    %v1447 = vmul.f32 %v1269, %v1412
    %v1448 = vmul.f32 %v1274, %v1412
    %v1449 = vadd.f32 %v1413, %v1414
    %v1450 = vadd.f32 %v1449, %v1415
    %v1451 = vadd.f32 %v1450, %v1416
    %v1452 = vadd.f32 %v1451, %v1417
    %v1453 = vadd.f32 %v1452, %v1418
    %v1454 = vadd.f32 %v1453, %v1419
    %v1455 = vadd.f32 %v1454, %v1420
    %v1456 = vadd.f32 %v1455, %v1421
    %v1457 = vadd.f32 %v1456, %v1422
    %v1458 = vadd.f32 %v1457, %v1423
    %v1459 = vadd.f32 %v1458, %v1424
    %v1460 = vadd.f32 %v1459, %v1425
    %v1461 = vadd.f32 %v1460, %v1426
    %v1462 = vadd.f32 %v1461, %v1427
    %v1463 = vadd.f32 %v1462, %v1428
    %v1464 = vadd.f32 %v1463, %v1429
    %v1465 = vadd.f32 %v1464, %v1430
    %v1466 = vrot.slane %v1465, 4
    %v1467 = vadd.f32 %v1465, %v1466
    %v1468 = vrot.slane %v1467, 2
    %v1469 = vadd.f32 %v1467, %v1468
    %v1470 = vrot.slane %v1469, 1
    %v1471 = vadd.f32 %v1469, %v1470
    %v1472 = vadd.f32 %v1431, %v1432
    %v1473 = vadd.f32 %v1472, %v1433
    %v1474 = vadd.f32 %v1473, %v1434
    %v1475 = vadd.f32 %v1474, %v1435
    %v1476 = vadd.f32 %v1475, %v1436
    %v1477 = vadd.f32 %v1476, %v1437
    %v1478 = vadd.f32 %v1477, %v1438
    %v1479 = vadd.f32 %v1478, %v1439
    %v1480 = vadd.f32 %v1479, %v1440
    %v1481 = vadd.f32 %v1480, %v1441
    %v1482 = vadd.f32 %v1481, %v1442
    %v1483 = vadd.f32 %v1482, %v1443
    %v1484 = vadd.f32 %v1483, %v1444
    %v1485 = vadd.f32 %v1484, %v1445
    %v1486 = vadd.f32 %v1485, %v1446
    %v1487 = vadd.f32 %v1486, %v1447
    %v1488 = vadd.f32 %v1487, %v1448
    %v1489 = vrot.slane %v1488, 4
    %v1490 = vadd.f32 %v1488, %v1489
    %v1491 = vrot.slane %v1490, 2
    %v1492 = vadd.f32 %v1490, %v1491
    %v1493 = vrot.slane %v1492, 1
    %v1494 = vadd.f32 %v1492, %v1493
    %v1495 = vrcp.pop 144.0
    %v1496 = vmul.f32 %v1471, %v1495
    %v1497 = vmul.f32 %v1494, %v1495
    %v1498 = vld [vmem:[%s7] sm:$0xff]
    %v1499 = vld [vmem:[%s7 + $0x8] sm:$0xff]
    %v1500 = vld [vmem:[%s7 + $0x10] sm:$0xff]
    %v1501 = vld [vmem:[%s7 + $0x18] sm:$0xff]
    %v1502 = vld [vmem:[%s7 + $0x20] sm:$0xff]
    %v1503 = vld [vmem:[%s7 + $0x28] sm:$0xff]
    %v1504 = vld [vmem:[%s7 + $0x30] sm:$0xff]
    %v1505 = vld [vmem:[%s7 + $0x38] sm:$0xff]
    %v1506 = vld [vmem:[%s7 + $0x40] sm:$0xff]
    %v1507 = vld [vmem:[%s7 + $0x48] sm:$0xff]
    %v1508 = vld [vmem:[%s7 + $0x50] sm:$0xff]
    %v1509 = vld [vmem:[%s7 + $0x58] sm:$0xff]
    %v1510 = vld [vmem:[%s7 + $0x60] sm:$0xff]
    %v1511 = vld [vmem:[%s7 + $0x68] sm:$0xff]
    %v1512 = vld [vmem:[%s7 + $0x70] sm:$0xff]
    %v1513 = vld [vmem:[%s7 + $0x78] sm:$0xff]
    %v1514 = vld [vmem:[%s7 + $0x80] sm:$0xff]
    %v1515 = vld [vmem:[%s7 + $0x88] sm:$0xff]
    %v1516 = vld [vmem:[%s7 + $0x90] sm:$0xff]
    %v1517 = vld [vmem:[%s7 + $0x98] sm:$0xff]
    %v1518 = vld [vmem:[%s7 + $0xa0] sm:$0xff]
    %v1519 = vld [vmem:[%s7 + $0xa8] sm:$0xff]
    %v1520 = vld [vmem:[%s7 + $0xb0] sm:$0xff]
    %v1521 = vld [vmem:[%s7 + $0xb8] sm:$0xff]
    %v1522 = vld [vmem:[%s7 + $0xc0] sm:$0xff]
    %v1523 = vld [vmem:[%s7 + $0xc8] sm:$0xff]
    %v1524 = vld [vmem:[%s7 + $0xd0] sm:$0xff]
    %v1525 = vld [vmem:[%s7 + $0xd8] sm:$0xff]
    %v1526 = vld [vmem:[%s7 + $0xe0] sm:$0xff]
    %v1527 = vld [vmem:[%s7 + $0xe8] sm:$0xff]
    %v1528 = vld [vmem:[%s7 + $0xf0] sm:$0xff]
    %v1529 = vld [vmem:[%s7 + $0xf8] sm:$0xff]
    %vm1532 = vcmask 1041409
    %v1533 = vsel %vm1532, %v1497, %v1496
    %1535 = vmatprep.subr.mxu0 %v1499
    %1536 = vmatpush1.msra.mxu0 %v1498
    %1537 = vmatprep.subr.mxu0 %v1501
    %1538 = vmatpush1.msra.mxu0 %v1500
    %1539 = vmatprep.subr.mxu0 %v1503
    %1540 = vmatpush1.msra.mxu0 %v1502
    %1541 = vmatprep.subr.mxu0 %v1505
    %1542 = vmatpush1.msra.mxu0 %v1504
    %1543 = vmatprep.subr.mxu0 %v1507
    %1544 = vmatpush1.msra.mxu0 %v1506
    %1545 = vmatprep.subr.mxu0 %v1509
    %1546 = vmatpush1.msra.mxu0 %v1508
    %1547 = vmatprep.subr.mxu0 %v1511
    %1548 = vmatpush1.msra.mxu0 %v1510
    %1549 = vmatprep.subr.mxu0 %v1513
    %1550 = vmatpush1.msra.mxu0 %v1512
    %1551 = vmatprep.subr.mxu0 %v1515
    %1552 = vmatpush1.msra.mxu0 %v1514
    %1553 = vmatprep.subr.mxu0 %v1517
    %1554 = vmatpush1.msra.mxu0 %v1516
    %1555 = vmatprep.subr.mxu0 %v1519
    %1556 = vmatpush1.msra.mxu0 %v1518
    %1557 = vmatprep.subr.mxu0 %v1521
    %1558 = vmatpush1.msra.mxu0 %v1520
    %1559 = vmatprep.subr.mxu0 %v1523
    %1560 = vmatpush1.msra.mxu0 %v1522
    %1561 = vmatprep.subr.mxu0 %v1525
    %1562 = vmatpush1.msra.mxu0 %v1524
    %1563 = vmatprep.subr.mxu0 %v1527
    %1564 = vmatpush1.msra.mxu0 %v1526
    %1565 = vmatprep.subr.mxu0 %v1529
    %1566 = vmatpush1.msra.mxu0 %v1528
    %1567 = vmatprep.subr.mxu0 0.0
    %1568 = vmatpush1.msra.mxu0 0.0
    %1569 = vmatprep.subr.mxu0 0.0
    %1570 = vmatpush1.msra.mxu0 0.0
    %1571 = vmatprep.subr.mxu0 0.0
    %1572 = vmatpush1.msra.mxu0 0.0
    %1573 = vmatprep.subr.mxu0 0.0
    %1574 = vmatpush1.msra.mxu0 0.0
    %1575 = vmatprep.subr.mxu0 0.0
    %1576 = vmatpush1.msra.mxu0 0.0
    %1577 = vmatprep.subr.mxu0 0.0
    %1578 = vmatpush1.msra.mxu0 0.0
    %1579 = vmatprep.subr.mxu0 0.0
    %1580 = vmatpush1.msra.mxu0 0.0
    %1581 = vmatprep.subr.mxu0 0.0
    %1582 = vmatpush1.msra.mxu0 0.0
    %1583 = vmatprep.subr.mxu0 0.0
    %1584 = vmatpush1.msra.mxu0 0.0
    %1585 = vmatprep.subr.mxu0 0.0
    %1586 = vmatpush1.msra.mxu0 0.0
    %1587 = vmatprep.subr.mxu0 0.0
    %1588 = vmatpush1.msra.mxu0 0.0
    %1589 = vmatprep.subr.mxu0 0.0
    %1590 = vmatpush1.msra.mxu0 0.0
    %1591 = vmatprep.subr.mxu0 0.0
    %1592 = vmatpush1.msra.mxu0 0.0
    %1593 = vmatprep.subr.mxu0 0.0
    %1594 = vmatpush1.msra.mxu0 0.0
    %1595 = vmatprep.subr.mxu0 0.0
    %1596 = vmatpush1.msra.mxu0 0.0
    %1597 = vmatprep.subr.mxu0 0.0
    %1598 = vmatpush1.msra.mxu0 0.0
    %1599 = vmatprep.mubr.f32.mxu0 0.0
    %1600 = vmatmul.mubr.f32.gmra.mrb[0].mxu0 %v1533
    %v1601 = vpop.f32.mrb[0].mxu0
    %v1602 = vadd.f32 0.0, %v1601
    %v1603 = vpop.f32.mrb[0].mxu0
    %v1604 = vadd.f32 0.0, %v1603
    %1605 = vdwg.mxu0
    %v1608 = vcombine.low %v1602, %v1604
    %v1610 = vunpack.c.l.s4 1983009808
    %v1611 = vunpack.c.0.s8 %v1610
    %v1612 = vlaneseq
    %v1613 = vshrl.u32 %v1612, 7
    %v1614 = vsub.s32 %v1611, %v1613
    %v1615 = vrot.slane %v1608, %v1614
    %1617 = vst [vmem:[%s13] sm:$0xf] %v1615
    %v1618 = vld [vmem:[%s8] sm:$0xff]
    %v1619 = vld [vmem:[%s8 + $0x8] sm:$0xff]
    %v1620 = vld [vmem:[%s8 + $0x10] sm:$0xff]
    %v1621 = vld [vmem:[%s8 + $0x18] sm:$0xff]
    %v1622 = vld [vmem:[%s8 + $0x20] sm:$0xff]
    %v1623 = vld [vmem:[%s8 + $0x28] sm:$0xff]
    %v1624 = vld [vmem:[%s8 + $0x30] sm:$0xff]
    %v1625 = vld [vmem:[%s8 + $0x38] sm:$0xff]
    %v1626 = vld [vmem:[%s8 + $0x40] sm:$0xff]
    %v1627 = vld [vmem:[%s8 + $0x48] sm:$0xff]
    %v1628 = vld [vmem:[%s8 + $0x50] sm:$0xff]
    %v1629 = vld [vmem:[%s8 + $0x58] sm:$0xff]
    %v1630 = vld [vmem:[%s8 + $0x60] sm:$0xff]
    %v1631 = vld [vmem:[%s8 + $0x68] sm:$0xff]
    %v1632 = vld [vmem:[%s8 + $0x70] sm:$0xff]
    %v1633 = vld [vmem:[%s8 + $0x78] sm:$0xff]
    %1634 = vmatprep.subr.mxu0 0.0
    %1635 = vmatpush1.msra.mxu0 %v1618
    %1636 = vmatprep.subr.mxu0 0.0
    %1637 = vmatpush1.msra.mxu0 %v1619
    %1638 = vmatprep.subr.mxu0 0.0
    %1639 = vmatpush1.msra.mxu0 %v1620
    %1640 = vmatprep.subr.mxu0 0.0
    %1641 = vmatpush1.msra.mxu0 %v1621
    %1642 = vmatprep.subr.mxu0 0.0
    %1643 = vmatpush1.msra.mxu0 %v1622
    %1644 = vmatprep.subr.mxu0 0.0
    %1645 = vmatpush1.msra.mxu0 %v1623
    %1646 = vmatprep.subr.mxu0 0.0
    %1647 = vmatpush1.msra.mxu0 %v1624
    %1648 = vmatprep.subr.mxu0 0.0
    %1649 = vmatpush1.msra.mxu0 %v1625
    %1650 = vmatprep.subr.mxu0 0.0
    %1651 = vmatpush1.msra.mxu0 %v1626
    %1652 = vmatprep.subr.mxu0 0.0
    %1653 = vmatpush1.msra.mxu0 %v1627
    %1654 = vmatprep.subr.mxu0 0.0
    %1655 = vmatpush1.msra.mxu0 %v1628
    %1656 = vmatprep.subr.mxu0 0.0
    %1657 = vmatpush1.msra.mxu0 %v1629
    %1658 = vmatprep.subr.mxu0 0.0
    %1659 = vmatpush1.msra.mxu0 %v1630
    %1660 = vmatprep.subr.mxu0 0.0
    %1661 = vmatpush1.msra.mxu0 %v1631
    %1662 = vmatprep.subr.mxu0 0.0
    %1663 = vmatpush1.msra.mxu0 %v1632
    %1664 = vmatprep.subr.mxu0 0.0
    %1665 = vmatpush1.msra.mxu0 %v1633
    %1666 = vmatprep.subr.mxu0 0.0
    %1667 = vmatpush1.msra.mxu0 0.0
    %1668 = vmatprep.subr.mxu0 0.0
    %1669 = vmatpush1.msra.mxu0 0.0
    %1670 = vmatprep.subr.mxu0 0.0
    %1671 = vmatpush1.msra.mxu0 0.0
    %1672 = vmatprep.subr.mxu0 0.0
    %1673 = vmatpush1.msra.mxu0 0.0
    %1674 = vmatprep.subr.mxu0 0.0
    %1675 = vmatpush1.msra.mxu0 0.0
    %1676 = vmatprep.subr.mxu0 0.0
    %1677 = vmatpush1.msra.mxu0 0.0
    %1678 = vmatprep.subr.mxu0 0.0
    %1679 = vmatpush1.msra.mxu0 0.0
    %1680 = vmatprep.subr.mxu0 0.0
    %1681 = vmatpush1.msra.mxu0 0.0
    %1682 = vmatprep.subr.mxu0 0.0
    %1683 = vmatpush1.msra.mxu0 0.0
    %1684 = vmatprep.subr.mxu0 0.0
    %1685 = vmatpush1.msra.mxu0 0.0
    %1686 = vmatprep.subr.mxu0 0.0
    %1687 = vmatpush1.msra.mxu0 0.0
    %1688 = vmatprep.subr.mxu0 0.0
    %1689 = vmatpush1.msra.mxu0 0.0
    %1690 = vmatprep.subr.mxu0 0.0
    %1691 = vmatpush1.msra.mxu0 0.0
    %1692 = vmatprep.subr.mxu0 0.0
    %1693 = vmatpush1.msra.mxu0 0.0
    %1694 = vmatprep.subr.mxu0 0.0
    %1695 = vmatpush1.msra.mxu0 0.0
    %1696 = vmatprep.subr.mxu0 0.0
    %1697 = vmatpush1.msra.mxu0 0.0
    %1698 = vmatprep.mubr.f32.mxu0 0.0
    %1699 = vmatmul.mubr.f32.gmra.mrb[0].mxu0 %v1533
    %v1700 = vpop.f32.mrb[0].mxu0
    %v1701 = vadd.f32 0.0, %v1700
    %v1702 = vpop.f32.mrb[0].mxu0
    %1703 = vdwg.mxu0
    %vm1704 = vcmask 9216
    %v1705 = vsel %vm1704, %v1701, -inf
    %1706 = vmax.xlane.f32.xlu0 %v1705
    %v1707 = vpop.xlane.xlu0 %1706
    %v1708 = vsub.f32 %v1701, %v1707
    %v1709 = vmul.f32 %v1708, 1.442695
    %v1710 = vpow.pop %v1709
    %v1711 = vsel %vm1704, %v1710, 0.0
    %1712 = vadd.xlane.f32.xlu0 %v1711
    %v1713 = vpop.xlane.xlu0 %1712
    %v1714 = vrcp.pop %v1713
    %v1715 = vmul.f32 %v1710, %v1714
    %1716 = vadd.xlane.f32.xlu0 %v1413
    %v1717 = vpop.xlane.xlu0 %1716
    %1718 = vadd.xlane.f32.xlu0 %v1414
    %v1719 = vpop.xlane.xlu0 %1718
    %1720 = vadd.xlane.f32.xlu0 %v1415
    %v1721 = vpop.xlane.xlu0 %1720
    %1722 = vadd.xlane.f32.xlu0 %v1416
    %v1723 = vpop.xlane.xlu0 %1722
    %1724 = vadd.xlane.f32.xlu0 %v1417
    %v1725 = vpop.xlane.xlu0 %1724
    %1726 = vadd.xlane.f32.xlu0 %v1418
    %v1727 = vpop.xlane.xlu0 %1726
    %1728 = vadd.xlane.f32.xlu0 %v1419
    %v1729 = vpop.xlane.xlu0 %1728
    %1730 = vadd.xlane.f32.xlu0 %v1420
    %v1731 = vpop.xlane.xlu0 %1730
    %1732 = vadd.xlane.f32.xlu0 %v1421
    %v1733 = vpop.xlane.xlu0 %1732
    %1734 = vadd.xlane.f32.xlu0 %v1422
    %v1735 = vpop.xlane.xlu0 %1734
    %1736 = vadd.xlane.f32.xlu0 %v1423
    %v1737 = vpop.xlane.xlu0 %1736
    %1738 = vadd.xlane.f32.xlu0 %v1424
    %v1739 = vpop.xlane.xlu0 %1738
    %1740 = vadd.xlane.f32.xlu0 %v1425
    %v1741 = vpop.xlane.xlu0 %1740
    %1742 = vadd.xlane.f32.xlu0 %v1426
    %v1743 = vpop.xlane.xlu0 %1742
    %1744 = vadd.xlane.f32.xlu0 %v1427
    %v1745 = vpop.xlane.xlu0 %1744
    %1746 = vadd.xlane.f32.xlu0 %v1428
    %v1747 = vpop.xlane.xlu0 %1746
    %1748 = vadd.xlane.f32.xlu0 %v1429
    %v1749 = vpop.xlane.xlu0 %1748
    %1750 = vadd.xlane.f32.xlu0 %v1430
    %v1751 = vpop.xlane.xlu0 %1750
    %1752 = vadd.xlane.f32.xlu0 %v1431
    %v1753 = vpop.xlane.xlu0 %1752
    %1754 = vadd.xlane.f32.xlu0 %v1432
    %v1755 = vpop.xlane.xlu0 %1754
    %1756 = vadd.xlane.f32.xlu0 %v1433
    %v1757 = vpop.xlane.xlu0 %1756
    %1758 = vadd.xlane.f32.xlu0 %v1434
    %v1759 = vpop.xlane.xlu0 %1758
    %1760 = vadd.xlane.f32.xlu0 %v1435
    %v1761 = vpop.xlane.xlu0 %1760
    %1762 = vadd.xlane.f32.xlu0 %v1436
    %v1763 = vpop.xlane.xlu0 %1762
    %1764 = vadd.xlane.f32.xlu0 %v1437
    %v1765 = vpop.xlane.xlu0 %1764
    %1766 = vadd.xlane.f32.xlu0 %v1438
    %v1767 = vpop.xlane.xlu0 %1766
    %1768 = vadd.xlane.f32.xlu0 %v1439
    %v1769 = vpop.xlane.xlu0 %1768
    %1770 = vadd.xlane.f32.xlu0 %v1440
    %v1771 = vpop.xlane.xlu0 %1770
    %1772 = vadd.xlane.f32.xlu0 %v1441
    %v1773 = vpop.xlane.xlu0 %1772
    %1774 = vadd.xlane.f32.xlu0 %v1442
    %v1775 = vpop.xlane.xlu0 %1774
    %1776 = vadd.xlane.f32.xlu0 %v1443
    %v1777 = vpop.xlane.xlu0 %1776
    %1778 = vadd.xlane.f32.xlu0 %v1444
    %v1779 = vpop.xlane.xlu0 %1778
    %1780 = vadd.xlane.f32.xlu0 %v1445
    %v1781 = vpop.xlane.xlu0 %1780
    %1782 = vadd.xlane.f32.xlu0 %v1446
    %v1783 = vpop.xlane.xlu0 %1782
    %1784 = vadd.xlane.f32.xlu0 %v1447
    %v1785 = vpop.xlane.xlu0 %1784
    %1786 = vadd.xlane.f32.xlu0 %v1448
    %v1787 = vpop.xlane.xlu0 %1786
    %v1788 = vrcp.pop 128.0
    %v1789 = vmul.f32 %v1717, %v1788
    %v1790 = vmul.f32 %v1719, %v1788
    %v1791 = vmul.f32 %v1721, %v1788
    %v1792 = vmul.f32 %v1723, %v1788
    %v1793 = vmul.f32 %v1725, %v1788
    %v1794 = vmul.f32 %v1727, %v1788
    %v1795 = vmul.f32 %v1729, %v1788
    %v1796 = vmul.f32 %v1731, %v1788
    %v1797 = vmul.f32 %v1733, %v1788
    %v1798 = vmul.f32 %v1735, %v1788
    %v1799 = vmul.f32 %v1737, %v1788
    %v1800 = vmul.f32 %v1739, %v1788
    %v1801 = vmul.f32 %v1741, %v1788
    %v1802 = vmul.f32 %v1743, %v1788
    %v1803 = vmul.f32 %v1745, %v1788
    %v1804 = vmul.f32 %v1747, %v1788
    %v1805 = vmul.f32 %v1749, %v1788
    %v1806 = vmul.f32 %v1751, %v1788
    %v1807 = vmul.f32 %v1753, %v1788
    %v1808 = vmul.f32 %v1755, %v1788
    %v1809 = vmul.f32 %v1757, %v1788
    %v1810 = vmul.f32 %v1759, %v1788
    %v1811 = vmul.f32 %v1761, %v1788
    %v1812 = vmul.f32 %v1763, %v1788
    %v1813 = vmul.f32 %v1765, %v1788
    %v1814 = vmul.f32 %v1767, %v1788
    %v1815 = vmul.f32 %v1769, %v1788
    %v1816 = vmul.f32 %v1771, %v1788
    %v1817 = vmul.f32 %v1773, %v1788
    %v1818 = vmul.f32 %v1775, %v1788
    %v1819 = vmul.f32 %v1777, %v1788
    %v1820 = vmul.f32 %v1779, %v1788
    %v1821 = vmul.f32 %v1781, %v1788
    %v1822 = vmul.f32 %v1783, %v1788
    %v1823 = vmul.f32 %v1785, %v1788
    %v1824 = vmul.f32 %v1787, %v1788
    %v1861 = vlaneseq
    %v1862 = vand.u32 %v1861, 127
    %v1863 = vlaneseq
    %v1864 = vshrl.u32 %v1863, 7
    %v1865 = vsub.s32 %v1862, %v1864
    %v1866 = vrot.slane %v1789, %v1865
    %v1867 = vadd.s32 %v1862, 4294967288
    %v1868 = vlaneseq
    %v1869 = vshrl.u32 %v1868, 7
    %v1870 = vsub.s32 %v1867, %v1869
    %v1871 = vrot.slane %v1790, %v1870
    %vm1872 = vcmask 130112
    %v1873 = vsel %vm1872, %v1871, %v1866
    %v1874 = vadd.s32 %v1862, 4294967280
    %v1875 = vlaneseq
    %v1876 = vshrl.u32 %v1875, 7
    %v1877 = vsub.s32 %v1874, %v1876
    %v1878 = vrot.slane %v1791, %v1877
    %vm1879 = vcmask 195712
    %v1880 = vsel %vm1879, %v1878, %v1873
    %v1881 = vadd.s32 %v1862, 4294967272
    %v1882 = vlaneseq
    %v1883 = vshrl.u32 %v1882, 7
    %v1884 = vsub.s32 %v1881, %v1883
    %v1885 = vrot.slane %v1792, %v1884
    %vm1886 = vcmask 261312
    %v1887 = vsel %vm1886, %v1885, %v1880
    %v1888 = vadd.s32 %v1862, 4294967264
    %v1889 = vlaneseq
    %v1890 = vshrl.u32 %v1889, 7
    %v1891 = vsub.s32 %v1888, %v1890
    %v1892 = vrot.slane %v1793, %v1891
    %vm1893 = vcmask 326912
    %v1894 = vsel %vm1893, %v1892, %v1887
    %v1895 = vadd.s32 %v1862, 4294967256
    %v1896 = vlaneseq
    %v1897 = vshrl.u32 %v1896, 7
    %v1898 = vsub.s32 %v1895, %v1897
    %v1899 = vrot.slane %v1794, %v1898
    %vm1900 = vcmask 392512
    %v1901 = vsel %vm1900, %v1899, %v1894
    %v1902 = vadd.s32 %v1862, 4294967248
    %v1903 = vlaneseq
    %v1904 = vshrl.u32 %v1903, 7
    %v1905 = vsub.s32 %v1902, %v1904
    %v1906 = vrot.slane %v1795, %v1905
    %vm1907 = vcmask 458112
    %v1908 = vsel %vm1907, %v1906, %v1901
    %v1909 = vadd.s32 %v1862, 4294967240
    %v1910 = vlaneseq
    %v1911 = vshrl.u32 %v1910, 7
    %v1912 = vsub.s32 %v1909, %v1911
    %v1913 = vrot.slane %v1796, %v1912
    %vm1914 = vcmask 523712
    %v1915 = vsel %vm1914, %v1913, %v1908
    %v1916 = vadd.s32 %v1862, 4294967232
    %v1917 = vlaneseq
    %v1918 = vshrl.u32 %v1917, 7
    %v1919 = vsub.s32 %v1916, %v1918
    %v1920 = vrot.slane %v1797, %v1919
    %vm1921 = vcmask 589312
    %v1922 = vsel %vm1921, %v1920, %v1915
    %v1923 = vadd.s32 %v1862, 4294967224
    %v1924 = vlaneseq
    %v1925 = vshrl.u32 %v1924, 7
    %v1926 = vsub.s32 %v1923, %v1925
    %v1927 = vrot.slane %v1798, %v1926
    %vm1928 = vcmask 654912
    %v1929 = vsel %vm1928, %v1927, %v1922
    %v1930 = vadd.s32 %v1862, 4294967216
    %v1931 = vlaneseq
    %v1932 = vshrl.u32 %v1931, 7
    %v1933 = vsub.s32 %v1930, %v1932
    %v1934 = vrot.slane %v1799, %v1933
    %vm1935 = vcmask 720512
    %v1936 = vsel %vm1935, %v1934, %v1929
    %v1937 = vadd.s32 %v1862, 4294967208
    %v1938 = vlaneseq
    %v1939 = vshrl.u32 %v1938, 7
    %v1940 = vsub.s32 %v1937, %v1939
    %v1941 = vrot.slane %v1800, %v1940
    %vm1942 = vcmask 786112
    %v1943 = vsel %vm1942, %v1941, %v1936
    %v1944 = vadd.s32 %v1862, 4294967200
    %v1945 = vlaneseq
    %v1946 = vshrl.u32 %v1945, 7
    %v1947 = vsub.s32 %v1944, %v1946
    %v1948 = vrot.slane %v1801, %v1947
    %vm1949 = vcmask 851712
    %v1950 = vsel %vm1949, %v1948, %v1943
    %v1951 = vadd.s32 %v1862, 4294967192
    %v1952 = vlaneseq
    %v1953 = vshrl.u32 %v1952, 7
    %v1954 = vsub.s32 %v1951, %v1953
    %v1955 = vrot.slane %v1802, %v1954
    %vm1956 = vcmask 917312
    %v1957 = vsel %vm1956, %v1955, %v1950
    %v1958 = vadd.s32 %v1862, 4294967184
    %v1959 = vlaneseq
    %v1960 = vshrl.u32 %v1959, 7
    %v1961 = vsub.s32 %v1958, %v1960
    %v1962 = vrot.slane %v1803, %v1961
    %vm1963 = vcmask 982912
    %v1964 = vsel %vm1963, %v1962, %v1957
    %v1965 = vadd.s32 %v1862, 4294967176
    %v1966 = vlaneseq
    %v1967 = vshrl.u32 %v1966, 7
    %v1968 = vsub.s32 %v1965, %v1967
    %v1969 = vrot.slane %v1804, %v1968
    %vm1970 = vcmask 1048512
    %v1971 = vsel %vm1970, %v1969, %v1964
    %v1972 = vlaneseq
    %v1973 = vshrl.u32 %v1972, 7
    %v1974 = vsub.s32 %v1862, %v1973
    %v1975 = vrot.slane %v1805, %v1974
    %v1976 = vlaneseq
    %v1977 = vshrl.u32 %v1976, 7
    %v1978 = vsub.s32 %v1867, %v1977
    %v1979 = vrot.slane %v1806, %v1978
    %v1980 = vsel %vm1872, %v1979, %v1975
    %v1981 = vlaneseq
    %v1982 = vshrl.u32 %v1981, 7
    %v1983 = vsub.s32 %v1862, %v1982
    %v1984 = vrot.slane %v1807, %v1983
    %v1985 = vlaneseq
    %v1986 = vshrl.u32 %v1985, 7
    %v1987 = vsub.s32 %v1867, %v1986
    %v1988 = vrot.slane %v1808, %v1987
    %v1989 = vsel %vm1872, %v1988, %v1984
    %v1990 = vlaneseq
    %v1991 = vshrl.u32 %v1990, 7
    %v1992 = vsub.s32 %v1874, %v1991
    %v1993 = vrot.slane %v1809, %v1992
    %v1994 = vsel %vm1879, %v1993, %v1989
    %v1995 = vlaneseq
    %v1996 = vshrl.u32 %v1995, 7
    %v1997 = vsub.s32 %v1881, %v1996
    %v1998 = vrot.slane %v1810, %v1997
    %v1999 = vsel %vm1886, %v1998, %v1994
    %v2000 = vlaneseq
    %v2001 = vshrl.u32 %v2000, 7
    %v2002 = vsub.s32 %v1888, %v2001
    %v2003 = vrot.slane %v1811, %v2002
    %v2004 = vsel %vm1893, %v2003, %v1999
    %v2005 = vlaneseq
    %v2006 = vshrl.u32 %v2005, 7
    %v2007 = vsub.s32 %v1895, %v2006
    %v2008 = vrot.slane %v1812, %v2007
    %v2009 = vsel %vm1900, %v2008, %v2004
    %v2010 = vlaneseq
    %v2011 = vshrl.u32 %v2010, 7
    %v2012 = vsub.s32 %v1902, %v2011
    %v2013 = vrot.slane %v1813, %v2012
    %v2014 = vsel %vm1907, %v2013, %v2009
    %v2015 = vlaneseq
    %v2016 = vshrl.u32 %v2015, 7
    %v2017 = vsub.s32 %v1909, %v2016
    %v2018 = vrot.slane %v1814, %v2017
    %v2019 = vsel %vm1914, %v2018, %v2014
    %v2020 = vlaneseq
    %v2021 = vshrl.u32 %v2020, 7
    %v2022 = vsub.s32 %v1916, %v2021
    %v2023 = vrot.slane %v1815, %v2022
    %v2024 = vsel %vm1921, %v2023, %v2019
    %v2025 = vlaneseq
    %v2026 = vshrl.u32 %v2025, 7
    %v2027 = vsub.s32 %v1923, %v2026
    %v2028 = vrot.slane %v1816, %v2027
    %v2029 = vsel %vm1928, %v2028, %v2024
    %v2030 = vlaneseq
    %v2031 = vshrl.u32 %v2030, 7
    %v2032 = vsub.s32 %v1930, %v2031
    %v2033 = vrot.slane %v1817, %v2032
    %v2034 = vsel %vm1935, %v2033, %v2029
    %v2035 = vlaneseq
    %v2036 = vshrl.u32 %v2035, 7
    %v2037 = vsub.s32 %v1937, %v2036
    %v2038 = vrot.slane %v1818, %v2037
    %v2039 = vsel %vm1942, %v2038, %v2034
    %v2040 = vlaneseq
    %v2041 = vshrl.u32 %v2040, 7
    %v2042 = vsub.s32 %v1944, %v2041
    %v2043 = vrot.slane %v1819, %v2042
    %v2044 = vsel %vm1949, %v2043, %v2039
    %v2045 = vlaneseq
    %v2046 = vshrl.u32 %v2045, 7
    %v2047 = vsub.s32 %v1951, %v2046
    %v2048 = vrot.slane %v1820, %v2047
    %v2049 = vsel %vm1956, %v2048, %v2044
    %v2050 = vlaneseq
    %v2051 = vshrl.u32 %v2050, 7
    %v2052 = vsub.s32 %v1958, %v2051
    %v2053 = vrot.slane %v1821, %v2052
    %v2054 = vsel %vm1963, %v2053, %v2049
    %v2055 = vlaneseq
    %v2056 = vshrl.u32 %v2055, 7
    %v2057 = vsub.s32 %v1965, %v2056
    %v2058 = vrot.slane %v1822, %v2057
    %v2059 = vsel %vm1970, %v2058, %v2054
    %v2060 = vlaneseq
    %v2061 = vshrl.u32 %v2060, 7
    %v2062 = vsub.s32 %v1862, %v2061
    %v2063 = vrot.slane %v1823, %v2062
    %v2064 = vlaneseq
    %v2065 = vshrl.u32 %v2064, 7
    %v2066 = vsub.s32 %v1867, %v2065
    %v2067 = vrot.slane %v1824, %v2066
    %v2068 = vsel %vm1872, %v2067, %v2063
    %v2069 = vsel %vm1532, %v2059, %v1971
    %v2070 = vsel %vm1532, %v2068, %v1980
    %vm2073 = vcmask 1041408
    %v2074 = vsel %vm2073, %v2069, -inf
    %vm2075 = vcmask 123904
    %v2076 = vsel %vm2075, %v2070, -inf
    %v2077 = vmax.f32 %v2074, %v2076
    %2078 = vmax.xlane.f32.xlu0 %v2077
    %v2079 = vpop.xlane.xlu0 %2078
    %v2081 = vlaneseq
    %v2082 = vshrl.u32 %v2081, 7
    %v2083 = vsub.s32 0, %v2082
    %v2084 = vrot.slane %v2079, %v2083
    %v2085 = vlaneseq
    %v2086 = vshrl.u32 %v2085, 7
    %v2087 = vsub.s32 1, %v2086
    %v2088 = vrot.slane %v2079, %v2087
    %v2091 = vsub.f32 %v1789, %v2084
    %v2092 = vsub.f32 %v1790, %v2084
    %v2093 = vsub.f32 %v1791, %v2084
    %v2094 = vsub.f32 %v1792, %v2084
    %v2095 = vsub.f32 %v1793, %v2084
    %v2096 = vsub.f32 %v1794, %v2084
    %v2097 = vsub.f32 %v1795, %v2084
    %v2098 = vsub.f32 %v1796, %v2084
    %v2099 = vsub.f32 %v1797, %v2084
    %v2100 = vsub.f32 %v1798, %v2084
    %v2101 = vsub.f32 %v1799, %v2084
    %v2102 = vsub.f32 %v1800, %v2084
    %v2103 = vsub.f32 %v1801, %v2084
    %v2104 = vsub.f32 %v1802, %v2084
    %v2105 = vsub.f32 %v1803, %v2084
    %v2106 = vsub.f32 %v1804, %v2084
    %v2107 = vsub.f32 %v1805, %v2084
    %v2108 = vsub.f32 %v1806, %v2084
    %v2109 = vsub.f32 %v1807, %v2088
    %v2110 = vsub.f32 %v1808, %v2088
    %v2111 = vsub.f32 %v1809, %v2088
    %v2112 = vsub.f32 %v1810, %v2088
    %v2113 = vsub.f32 %v1811, %v2088
    %v2114 = vsub.f32 %v1812, %v2088
    %v2115 = vsub.f32 %v1813, %v2088
    %v2116 = vsub.f32 %v1814, %v2088
    %v2117 = vsub.f32 %v1815, %v2088
    %v2118 = vsub.f32 %v1816, %v2088
    %v2119 = vsub.f32 %v1817, %v2088
    %v2120 = vsub.f32 %v1818, %v2088
    %v2121 = vsub.f32 %v1819, %v2088
    %v2122 = vsub.f32 %v1820, %v2088
    %v2123 = vsub.f32 %v1821, %v2088
    %v2124 = vsub.f32 %v1822, %v2088
    %v2125 = vsub.f32 %v1823, %v2088
    %v2126 = vsub.f32 %v1824, %v2088
    %v2127 = vmul.f32 %v2091, 1.442695
    %v2128 = vpow.pop %v2127
    %v2129 = vmul.f32 %v2092, 1.442695
    %v2130 = vpow.pop %v2129
    %v2131 = vmul.f32 %v2093, 1.442695
    %v2132 = vpow.pop %v2131
    %v2133 = vmul.f32 %v2094, 1.442695
    %v2134 = vpow.pop %v2133
    %v2135 = vmul.f32 %v2095, 1.442695
    %v2136 = vpow.pop %v2135
    %v2137 = vmul.f32 %v2096, 1.442695
    %v2138 = vpow.pop %v2137
    %v2139 = vmul.f32 %v2097, 1.442695
    %v2140 = vpow.pop %v2139
    %v2141 = vmul.f32 %v2098, 1.442695
    %v2142 = vpow.pop %v2141
    %v2143 = vmul.f32 %v2099, 1.442695
    %v2144 = vpow.pop %v2143
    %v2145 = vmul.f32 %v2100, 1.442695
    %v2146 = vpow.pop %v2145
    %v2147 = vmul.f32 %v2101, 1.442695
    %v2148 = vpow.pop %v2147
    %v2149 = vmul.f32 %v2102, 1.442695
    %v2150 = vpow.pop %v2149
    %v2151 = vmul.f32 %v2103, 1.442695
    %v2152 = vpow.pop %v2151
    %v2153 = vmul.f32 %v2104, 1.442695
    %v2154 = vpow.pop %v2153
    %v2155 = vmul.f32 %v2105, 1.442695
    %v2156 = vpow.pop %v2155
    %v2157 = vmul.f32 %v2106, 1.442695
    %v2158 = vpow.pop %v2157
    %v2159 = vmul.f32 %v2107, 1.442695
    %v2160 = vpow.pop %v2159
    %v2161 = vmul.f32 %v2108, 1.442695
    %v2162 = vpow.pop %v2161
    %v2163 = vmul.f32 %v2109, 1.442695
    %v2164 = vpow.pop %v2163
    %v2165 = vmul.f32 %v2110, 1.442695
    %v2166 = vpow.pop %v2165
    %v2167 = vmul.f32 %v2111, 1.442695
    %v2168 = vpow.pop %v2167
    %v2169 = vmul.f32 %v2112, 1.442695
    %v2170 = vpow.pop %v2169
    %v2171 = vmul.f32 %v2113, 1.442695
    %v2172 = vpow.pop %v2171
    %v2173 = vmul.f32 %v2114, 1.442695
    %v2174 = vpow.pop %v2173
    %v2175 = vmul.f32 %v2115, 1.442695
    %v2176 = vpow.pop %v2175
    %v2177 = vmul.f32 %v2116, 1.442695
    %v2178 = vpow.pop %v2177
    %v2179 = vmul.f32 %v2117, 1.442695
    %v2180 = vpow.pop %v2179
    %v2181 = vmul.f32 %v2118, 1.442695
    %v2182 = vpow.pop %v2181
    %v2183 = vmul.f32 %v2119, 1.442695
    %v2184 = vpow.pop %v2183
    %v2185 = vmul.f32 %v2120, 1.442695
    %v2186 = vpow.pop %v2185
    %v2187 = vmul.f32 %v2121, 1.442695
    %v2188 = vpow.pop %v2187
    %v2189 = vmul.f32 %v2122, 1.442695
    %v2190 = vpow.pop %v2189
    %v2191 = vmul.f32 %v2123, 1.442695
    %v2192 = vpow.pop %v2191
    %v2193 = vmul.f32 %v2124, 1.442695
    %v2194 = vpow.pop %v2193
    %v2195 = vmul.f32 %v2125, 1.442695
    %v2196 = vpow.pop %v2195
    %v2197 = vmul.f32 %v2126, 1.442695
    %v2198 = vpow.pop %v2197
    %2235 = vset.pattern.permute.xlu0 0
    %2236 = vperm.xlu0 %2235, %v2128
    %v2237 = vpop.permute.xlu0 %2236
    %2238 = vset.pattern.permute.xlu0 0
    %2239 = vperm.xlu0 %2238, %v2130
    %v2240 = vpop.permute.xlu0 %2239
    %2241 = vset.pattern.permute.xlu0 0
    %2242 = vperm.xlu0 %2241, %v2132
    %v2243 = vpop.permute.xlu0 %2242
    %2244 = vset.pattern.permute.xlu0 0
    %2245 = vperm.xlu0 %2244, %v2134
    %v2246 = vpop.permute.xlu0 %2245
    %2247 = vset.pattern.permute.xlu0 0
    %2248 = vperm.xlu0 %2247, %v2136
    %v2249 = vpop.permute.xlu0 %2248
    %2250 = vset.pattern.permute.xlu0 0
    %2251 = vperm.xlu0 %2250, %v2138
    %v2252 = vpop.permute.xlu0 %2251
    %2253 = vset.pattern.permute.xlu0 0
    %2254 = vperm.xlu0 %2253, %v2140
    %v2255 = vpop.permute.xlu0 %2254
    %2256 = vset.pattern.permute.xlu0 0
    %2257 = vperm.xlu0 %2256, %v2142
    %v2258 = vpop.permute.xlu0 %2257
    %2259 = vset.pattern.permute.xlu0 0
    %2260 = vperm.xlu0 %2259, %v2144
    %v2261 = vpop.permute.xlu0 %2260
    %2262 = vset.pattern.permute.xlu0 0
    %2263 = vperm.xlu0 %2262, %v2146
    %v2264 = vpop.permute.xlu0 %2263
    %2265 = vset.pattern.permute.xlu0 0
    %2266 = vperm.xlu0 %2265, %v2148
    %v2267 = vpop.permute.xlu0 %2266
    %2268 = vset.pattern.permute.xlu0 0
    %2269 = vperm.xlu0 %2268, %v2150
    %v2270 = vpop.permute.xlu0 %2269
    %2271 = vset.pattern.permute.xlu0 0
    %2272 = vperm.xlu0 %2271, %v2152
    %v2273 = vpop.permute.xlu0 %2272
    %2274 = vset.pattern.permute.xlu0 0
    %2275 = vperm.xlu0 %2274, %v2154
    %v2276 = vpop.permute.xlu0 %2275
    %2277 = vset.pattern.permute.xlu0 0
    %2278 = vperm.xlu0 %2277, %v2156
    %v2279 = vpop.permute.xlu0 %2278
    %2280 = vset.pattern.permute.xlu0 0
    %2281 = vperm.xlu0 %2280, %v2158
    %v2282 = vpop.permute.xlu0 %2281
    %2283 = vset.pattern.permute.xlu0 0
    %2284 = vperm.xlu0 %2283, %v2160
    %v2285 = vpop.permute.xlu0 %2284
    %2286 = vset.pattern.permute.xlu0 0
    %2287 = vperm.xlu0 %2286, %v2162
    %v2288 = vpop.permute.xlu0 %2287
    %2289 = vset.pattern.permute.xlu0 0
    %2290 = vperm.xlu0 %2289, %v2164
    %v2291 = vpop.permute.xlu0 %2290
    %2292 = vset.pattern.permute.xlu0 0
    %2293 = vperm.xlu0 %2292, %v2166
    %v2294 = vpop.permute.xlu0 %2293
    %2295 = vset.pattern.permute.xlu0 0
    %2296 = vperm.xlu0 %2295, %v2168
    %v2297 = vpop.permute.xlu0 %2296
    %2298 = vset.pattern.permute.xlu0 0
    %2299 = vperm.xlu0 %2298, %v2170
    %v2300 = vpop.permute.xlu0 %2299
    %2301 = vset.pattern.permute.xlu0 0
    %2302 = vperm.xlu0 %2301, %v2172
    %v2303 = vpop.permute.xlu0 %2302
    %2304 = vset.pattern.permute.xlu0 0
    %2305 = vperm.xlu0 %2304, %v2174
    %v2306 = vpop.permute.xlu0 %2305
    %2307 = vset.pattern.permute.xlu0 0
    %2308 = vperm.xlu0 %2307, %v2176
    %v2309 = vpop.permute.xlu0 %2308
    %2310 = vset.pattern.permute.xlu0 0
    %2311 = vperm.xlu0 %2310, %v2178
    %v2312 = vpop.permute.xlu0 %2311
    %2313 = vset.pattern.permute.xlu0 0
    %2314 = vperm.xlu0 %2313, %v2180
    %v2315 = vpop.permute.xlu0 %2314
    %2316 = vset.pattern.permute.xlu0 0
    %2317 = vperm.xlu0 %2316, %v2182
    %v2318 = vpop.permute.xlu0 %2317
    %2319 = vset.pattern.permute.xlu0 0
    %2320 = vperm.xlu0 %2319, %v2184
    %v2321 = vpop.permute.xlu0 %2320
    %2322 = vset.pattern.permute.xlu0 0
    %2323 = vperm.xlu0 %2322, %v2186
    %v2324 = vpop.permute.xlu0 %2323
    %2325 = vset.pattern.permute.xlu0 0
    %2326 = vperm.xlu0 %2325, %v2188
    %v2327 = vpop.permute.xlu0 %2326
    %2328 = vset.pattern.permute.xlu0 0
    %2329 = vperm.xlu0 %2328, %v2190
    %v2330 = vpop.permute.xlu0 %2329
    %2331 = vset.pattern.permute.xlu0 0
    %2332 = vperm.xlu0 %2331, %v2192
    %v2333 = vpop.permute.xlu0 %2332
    %2334 = vset.pattern.permute.xlu0 0
    %2335 = vperm.xlu0 %2334, %v2194
    %v2336 = vpop.permute.xlu0 %2335
    %2337 = vset.pattern.permute.xlu0 0
    %2338 = vperm.xlu0 %2337, %v2196
    %v2339 = vpop.permute.xlu0 %2338
    %2340 = vset.pattern.permute.xlu0 0
    %2341 = vperm.xlu0 %2340, %v2198
    %v2342 = vpop.permute.xlu0 %2341
    %v2343 = vlaneseq
    %v2344 = vshrl.u32 %v2343, 7
    %v2345 = vsub.s32 %v1862, %v2344
    %v2346 = vrot.slane %v2237, %v2345
    %v2347 = vlaneseq
    %v2348 = vshrl.u32 %v2347, 7
    %v2349 = vsub.s32 %v1867, %v2348
    %v2350 = vrot.slane %v2240, %v2349
    %v2351 = vsel %vm1872, %v2350, %v2346
    %v2352 = vlaneseq
    %v2353 = vshrl.u32 %v2352, 7
    %v2354 = vsub.s32 %v1874, %v2353
    %v2355 = vrot.slane %v2243, %v2354
    %v2356 = vsel %vm1879, %v2355, %v2351
    %v2357 = vlaneseq
    %v2358 = vshrl.u32 %v2357, 7
    %v2359 = vsub.s32 %v1881, %v2358
    %v2360 = vrot.slane %v2246, %v2359
    %v2361 = vsel %vm1886, %v2360, %v2356
    %v2362 = vlaneseq
    %v2363 = vshrl.u32 %v2362, 7
    %v2364 = vsub.s32 %v1888, %v2363
    %v2365 = vrot.slane %v2249, %v2364
    %v2366 = vsel %vm1893, %v2365, %v2361
    %v2367 = vlaneseq
    %v2368 = vshrl.u32 %v2367, 7
    %v2369 = vsub.s32 %v1895, %v2368
    %v2370 = vrot.slane %v2252, %v2369
    %v2371 = vsel %vm1900, %v2370, %v2366
    %v2372 = vlaneseq
    %v2373 = vshrl.u32 %v2372, 7
    %v2374 = vsub.s32 %v1902, %v2373
    %v2375 = vrot.slane %v2255, %v2374
    %v2376 = vsel %vm1907, %v2375, %v2371
    %v2377 = vlaneseq
    %v2378 = vshrl.u32 %v2377, 7
    %v2379 = vsub.s32 %v1909, %v2378
    %v2380 = vrot.slane %v2258, %v2379
    %v2381 = vsel %vm1914, %v2380, %v2376
    %v2382 = vlaneseq
    %v2383 = vshrl.u32 %v2382, 7
    %v2384 = vsub.s32 %v1916, %v2383
    %v2385 = vrot.slane %v2261, %v2384
    %v2386 = vsel %vm1921, %v2385, %v2381
    %v2387 = vlaneseq
    %v2388 = vshrl.u32 %v2387, 7
    %v2389 = vsub.s32 %v1923, %v2388
    %v2390 = vrot.slane %v2264, %v2389
    %v2391 = vsel %vm1928, %v2390, %v2386
    %v2392 = vlaneseq
    %v2393 = vshrl.u32 %v2392, 7
    %v2394 = vsub.s32 %v1930, %v2393
    %v2395 = vrot.slane %v2267, %v2394
    %v2396 = vsel %vm1935, %v2395, %v2391
    %v2397 = vlaneseq
    %v2398 = vshrl.u32 %v2397, 7
    %v2399 = vsub.s32 %v1937, %v2398
    %v2400 = vrot.slane %v2270, %v2399
    %v2401 = vsel %vm1942, %v2400, %v2396
    %v2402 = vlaneseq
    %v2403 = vshrl.u32 %v2402, 7
    %v2404 = vsub.s32 %v1944, %v2403
    %v2405 = vrot.slane %v2273, %v2404
    %v2406 = vsel %vm1949, %v2405, %v2401
    %v2407 = vlaneseq
    %v2408 = vshrl.u32 %v2407, 7
    %v2409 = vsub.s32 %v1951, %v2408
    %v2410 = vrot.slane %v2276, %v2409
    %v2411 = vsel %vm1956, %v2410, %v2406
    %v2412 = vlaneseq
    %v2413 = vshrl.u32 %v2412, 7
    %v2414 = vsub.s32 %v1958, %v2413
    %v2415 = vrot.slane %v2279, %v2414
    %v2416 = vsel %vm1963, %v2415, %v2411
    %v2417 = vlaneseq
    %v2418 = vshrl.u32 %v2417, 7
    %v2419 = vsub.s32 %v1965, %v2418
    %v2420 = vrot.slane %v2282, %v2419
    %v2421 = vsel %vm1970, %v2420, %v2416
    %v2422 = vlaneseq
    %v2423 = vshrl.u32 %v2422, 7
    %v2424 = vsub.s32 %v1862, %v2423
    %v2425 = vrot.slane %v2285, %v2424
    %v2426 = vlaneseq
    %v2427 = vshrl.u32 %v2426, 7
    %v2428 = vsub.s32 %v1867, %v2427
    %v2429 = vrot.slane %v2288, %v2428
    %v2430 = vsel %vm1872, %v2429, %v2425
    %v2431 = vlaneseq
    %v2432 = vshrl.u32 %v2431, 7
    %v2433 = vsub.s32 %v1862, %v2432
    %v2434 = vrot.slane %v2291, %v2433
    %v2435 = vlaneseq
    %v2436 = vshrl.u32 %v2435, 7
    %v2437 = vsub.s32 %v1867, %v2436
    %v2438 = vrot.slane %v2294, %v2437
    %v2439 = vsel %vm1872, %v2438, %v2434
    %v2440 = vlaneseq
    %v2441 = vshrl.u32 %v2440, 7
    %v2442 = vsub.s32 %v1874, %v2441
    %v2443 = vrot.slane %v2297, %v2442
    %v2444 = vsel %vm1879, %v2443, %v2439
    %v2445 = vlaneseq
    %v2446 = vshrl.u32 %v2445, 7
    %v2447 = vsub.s32 %v1881, %v2446
    %v2448 = vrot.slane %v2300, %v2447
    %v2449 = vsel %vm1886, %v2448, %v2444
    %v2450 = vlaneseq
    %v2451 = vshrl.u32 %v2450, 7
    %v2452 = vsub.s32 %v1888, %v2451
    %v2453 = vrot.slane %v2303, %v2452
    %v2454 = vsel %vm1893, %v2453, %v2449
    %v2455 = vlaneseq
    %v2456 = vshrl.u32 %v2455, 7
    %v2457 = vsub.s32 %v1895, %v2456
    %v2458 = vrot.slane %v2306, %v2457
    %v2459 = vsel %vm1900, %v2458, %v2454
    %v2460 = vlaneseq
    %v2461 = vshrl.u32 %v2460, 7
    %v2462 = vsub.s32 %v1902, %v2461
    %v2463 = vrot.slane %v2309, %v2462
    %v2464 = vsel %vm1907, %v2463, %v2459
    %v2465 = vlaneseq
    %v2466 = vshrl.u32 %v2465, 7
    %v2467 = vsub.s32 %v1909, %v2466
    %v2468 = vrot.slane %v2312, %v2467
    %v2469 = vsel %vm1914, %v2468, %v2464
    %v2470 = vlaneseq
    %v2471 = vshrl.u32 %v2470, 7
    %v2472 = vsub.s32 %v1916, %v2471
    %v2473 = vrot.slane %v2315, %v2472
    %v2474 = vsel %vm1921, %v2473, %v2469
    %v2475 = vlaneseq
    %v2476 = vshrl.u32 %v2475, 7
    %v2477 = vsub.s32 %v1923, %v2476
    %v2478 = vrot.slane %v2318, %v2477
    %v2479 = vsel %vm1928, %v2478, %v2474
    %v2480 = vlaneseq
    %v2481 = vshrl.u32 %v2480, 7
    %v2482 = vsub.s32 %v1930, %v2481
    %v2483 = vrot.slane %v2321, %v2482
    %v2484 = vsel %vm1935, %v2483, %v2479
    %v2485 = vlaneseq
    %v2486 = vshrl.u32 %v2485, 7
    %v2487 = vsub.s32 %v1937, %v2486
    %v2488 = vrot.slane %v2324, %v2487
    %v2489 = vsel %vm1942, %v2488, %v2484
    %v2490 = vlaneseq
    %v2491 = vshrl.u32 %v2490, 7
    %v2492 = vsub.s32 %v1944, %v2491
    %v2493 = vrot.slane %v2327, %v2492
    %v2494 = vsel %vm1949, %v2493, %v2489
    %v2495 = vlaneseq
    %v2496 = vshrl.u32 %v2495, 7
    %v2497 = vsub.s32 %v1951, %v2496
    %v2498 = vrot.slane %v2330, %v2497
    %v2499 = vsel %vm1956, %v2498, %v2494
    %v2500 = vlaneseq
    %v2501 = vshrl.u32 %v2500, 7
    %v2502 = vsub.s32 %v1958, %v2501
    %v2503 = vrot.slane %v2333, %v2502
    %v2504 = vsel %vm1963, %v2503, %v2499
    %v2505 = vlaneseq
    %v2506 = vshrl.u32 %v2505, 7
    %v2507 = vsub.s32 %v1965, %v2506
    %v2508 = vrot.slane %v2336, %v2507
    %v2509 = vsel %vm1970, %v2508, %v2504
    %v2510 = vlaneseq
    %v2511 = vshrl.u32 %v2510, 7
    %v2512 = vsub.s32 %v1862, %v2511
    %v2513 = vrot.slane %v2339, %v2512
    %v2514 = vlaneseq
    %v2515 = vshrl.u32 %v2514, 7
    %v2516 = vsub.s32 %v1867, %v2515
    %v2517 = vrot.slane %v2342, %v2516
    %v2518 = vsel %vm1872, %v2517, %v2513
    %v2519 = vsel %vm1532, %v2509, %v2421
    %v2520 = vsel %vm1532, %v2518, %v2430
    %v2523 = vsel %vm2073, %v2519, 0.0
    %v2524 = vsel %vm2075, %v2520, 0.0
    %v2525 = vadd.f32 %v2523, %v2524
    %2526 = vadd.xlane.f32.xlu0 %v2525
    %v2527 = vpop.xlane.xlu0 %2526
    %v2528 = vrcp.pop %v2527
    %v2530 = vlaneseq
    %v2531 = vshrl.u32 %v2530, 7
    %v2532 = vsub.s32 0, %v2531
    %v2533 = vrot.slane %v2528, %v2532
    %v2534 = vlaneseq
    %v2535 = vshrl.u32 %v2534, 7
    %v2536 = vsub.s32 1, %v2535
    %v2537 = vrot.slane %v2528, %v2536
    %v2540 = vmul.f32 %v2128, %v2533
    %v2541 = vmul.f32 %v2130, %v2533
    %v2542 = vmul.f32 %v2132, %v2533
    %v2543 = vmul.f32 %v2134, %v2533
    %v2544 = vmul.f32 %v2136, %v2533
    %v2545 = vmul.f32 %v2138, %v2533
    %v2546 = vmul.f32 %v2140, %v2533
    %v2547 = vmul.f32 %v2142, %v2533
    %v2548 = vmul.f32 %v2144, %v2533
    %v2549 = vmul.f32 %v2146, %v2533
    %v2550 = vmul.f32 %v2148, %v2533
    %v2551 = vmul.f32 %v2150, %v2533
    %v2552 = vmul.f32 %v2152, %v2533
    %v2553 = vmul.f32 %v2154, %v2533
    %v2554 = vmul.f32 %v2156, %v2533
    %v2555 = vmul.f32 %v2158, %v2533
    %v2556 = vmul.f32 %v2160, %v2533
    %v2557 = vmul.f32 %v2162, %v2533
    %v2558 = vmul.f32 %v2164, %v2537
    %v2559 = vmul.f32 %v2166, %v2537
    %v2560 = vmul.f32 %v2168, %v2537
    %v2561 = vmul.f32 %v2170, %v2537
    %v2562 = vmul.f32 %v2172, %v2537
    %v2563 = vmul.f32 %v2174, %v2537
    %v2564 = vmul.f32 %v2176, %v2537
    %v2565 = vmul.f32 %v2178, %v2537
    %v2566 = vmul.f32 %v2180, %v2537
    %v2567 = vmul.f32 %v2182, %v2537
    %v2568 = vmul.f32 %v2184, %v2537
    %v2569 = vmul.f32 %v2186, %v2537
    %v2570 = vmul.f32 %v2188, %v2537
    %v2571 = vmul.f32 %v2190, %v2537
    %v2572 = vmul.f32 %v2192, %v2537
    %v2573 = vmul.f32 %v2194, %v2537
    %v2574 = vmul.f32 %v2196, %v2537
    %v2575 = vmul.f32 %v2198, %v2537
    %v2576 = vmax.f32 %v2540, 0.0
    %v2577 = vmax.f32 %v2541, 0.0
    %v2578 = vmax.f32 %v2542, 0.0
    %v2579 = vmax.f32 %v2543, 0.0
    %v2580 = vmax.f32 %v2544, 0.0
    %v2581 = vmax.f32 %v2545, 0.0
    %v2582 = vmax.f32 %v2546, 0.0
    %v2583 = vmax.f32 %v2547, 0.0
    %v2584 = vmax.f32 %v2548, 0.0
    %v2585 = vmax.f32 %v2549, 0.0
    %v2586 = vmax.f32 %v2550, 0.0
    %v2587 = vmax.f32 %v2551, 0.0
    %v2588 = vmax.f32 %v2552, 0.0
    %v2589 = vmax.f32 %v2553, 0.0
    %v2590 = vmax.f32 %v2554, 0.0
    %v2591 = vmax.f32 %v2555, 0.0
    %v2592 = vmax.f32 %v2556, 0.0
    %v2593 = vmax.f32 %v2557, 0.0
    %v2594 = vmax.f32 %v2558, 0.0
    %v2595 = vmax.f32 %v2559, 0.0
    %v2596 = vmax.f32 %v2560, 0.0
    %v2597 = vmax.f32 %v2561, 0.0
    %v2598 = vmax.f32 %v2562, 0.0
    %v2599 = vmax.f32 %v2563, 0.0
    %v2600 = vmax.f32 %v2564, 0.0
    %v2601 = vmax.f32 %v2565, 0.0
    %v2602 = vmax.f32 %v2566, 0.0
    %v2603 = vmax.f32 %v2567, 0.0
    %v2604 = vmax.f32 %v2568, 0.0
    %v2605 = vmax.f32 %v2569, 0.0
    %v2606 = vmax.f32 %v2570, 0.0
    %v2607 = vmax.f32 %v2571, 0.0
    %v2608 = vmax.f32 %v2572, 0.0
    %v2609 = vmax.f32 %v2573, 0.0
    %v2610 = vmax.f32 %v2574, 0.0
    %v2611 = vmax.f32 %v2575, 0.0
    %v2612 = vld [vmem:[%s9] sm:$0xff]
    %v2613 = vld [vmem:[%s9 + $0x8] sm:$0xff]
    %v2614 = vld [vmem:[%s9 + $0x10] sm:$0xff]
    %v2615 = vld [vmem:[%s9 + $0x18] sm:$0xff]
    %v2616 = vld [vmem:[%s9 + $0x20] sm:$0xff]
    %v2617 = vld [vmem:[%s9 + $0x28] sm:$0xff]
    %v2618 = vld [vmem:[%s9 + $0x30] sm:$0xff]
    %v2619 = vld [vmem:[%s9 + $0x38] sm:$0xff]
    %v2620 = vld [vmem:[%s9 + $0x40] sm:$0xff]
    %v2621 = vld [vmem:[%s9 + $0x48] sm:$0xff]
    %v2622 = vld [vmem:[%s9 + $0x50] sm:$0xff]
    %v2623 = vld [vmem:[%s9 + $0x58] sm:$0xff]
    %v2624 = vld [vmem:[%s9 + $0x60] sm:$0xff]
    %v2625 = vld [vmem:[%s9 + $0x68] sm:$0xff]
    %v2626 = vld [vmem:[%s9 + $0x70] sm:$0xff]
    %v2627 = vld [vmem:[%s9 + $0x78] sm:$0xff]
    %v2628 = vld [vmem:[%s9 + $0x80] sm:$0xff]
    %v2629 = vld [vmem:[%s9 + $0x88] sm:$0xff]
    %v2630 = vld [vmem:[%s10] sm:$0x1]
    %v2632 = vlaneseq
    %v2633 = vshrl.u32 %v2632, 7
    %v2634 = vsub.s32 0, %v2633
    %v2635 = vrot.slane %v2630, %v2634
    %2673 = vset.pattern.permute.xlu0 0
    %2674 = vperm.xlu0 %2673, %v2576
    %v2675 = vpop.permute.xlu0 %2674
    %2676 = vset.pattern.permute.xlu0 0
    %2677 = vperm.xlu0 %2676, %v2577
    %v2678 = vpop.permute.xlu0 %2677
    %2679 = vset.pattern.permute.xlu0 0
    %2680 = vperm.xlu0 %2679, %v2578
    %v2681 = vpop.permute.xlu0 %2680
    %2682 = vset.pattern.permute.xlu0 0
    %2683 = vperm.xlu0 %2682, %v2579
    %v2684 = vpop.permute.xlu0 %2683
    %2685 = vset.pattern.permute.xlu0 0
    %2686 = vperm.xlu0 %2685, %v2580
    %v2687 = vpop.permute.xlu0 %2686
    %2688 = vset.pattern.permute.xlu0 0
    %2689 = vperm.xlu0 %2688, %v2581
    %v2690 = vpop.permute.xlu0 %2689
    %2691 = vset.pattern.permute.xlu0 0
    %2692 = vperm.xlu0 %2691, %v2582
    %v2693 = vpop.permute.xlu0 %2692
    %2694 = vset.pattern.permute.xlu0 0
    %2695 = vperm.xlu0 %2694, %v2583
    %v2696 = vpop.permute.xlu0 %2695
    %2697 = vset.pattern.permute.xlu0 0
    %2698 = vperm.xlu0 %2697, %v2584
    %v2699 = vpop.permute.xlu0 %2698
    %2700 = vset.pattern.permute.xlu0 0
    %2701 = vperm.xlu0 %2700, %v2585
    %v2702 = vpop.permute.xlu0 %2701
    %2703 = vset.pattern.permute.xlu0 0
    %2704 = vperm.xlu0 %2703, %v2586
    %v2705 = vpop.permute.xlu0 %2704
    %2706 = vset.pattern.permute.xlu0 0
    %2707 = vperm.xlu0 %2706, %v2587
    %v2708 = vpop.permute.xlu0 %2707
    %2709 = vset.pattern.permute.xlu0 0
    %2710 = vperm.xlu0 %2709, %v2588
    %v2711 = vpop.permute.xlu0 %2710
    %2712 = vset.pattern.permute.xlu0 0
    %2713 = vperm.xlu0 %2712, %v2589
    %v2714 = vpop.permute.xlu0 %2713
    %2715 = vset.pattern.permute.xlu0 0
    %2716 = vperm.xlu0 %2715, %v2590
    %v2717 = vpop.permute.xlu0 %2716
    %2718 = vset.pattern.permute.xlu0 0
    %2719 = vperm.xlu0 %2718, %v2591
    %v2720 = vpop.permute.xlu0 %2719
    %2721 = vset.pattern.permute.xlu0 0
    %2722 = vperm.xlu0 %2721, %v2592
    %v2723 = vpop.permute.xlu0 %2722
    %2724 = vset.pattern.permute.xlu0 0
    %2725 = vperm.xlu0 %2724, %v2593
    %v2726 = vpop.permute.xlu0 %2725
    %2727 = vset.pattern.permute.xlu0 0
    %2728 = vperm.xlu0 %2727, %v2594
    %v2729 = vpop.permute.xlu0 %2728
    %2730 = vset.pattern.permute.xlu0 0
    %2731 = vperm.xlu0 %2730, %v2595
    %v2732 = vpop.permute.xlu0 %2731
    %2733 = vset.pattern.permute.xlu0 0
    %2734 = vperm.xlu0 %2733, %v2596
    %v2735 = vpop.permute.xlu0 %2734
    %2736 = vset.pattern.permute.xlu0 0
    %2737 = vperm.xlu0 %2736, %v2597
    %v2738 = vpop.permute.xlu0 %2737
    %2739 = vset.pattern.permute.xlu0 0
    %2740 = vperm.xlu0 %2739, %v2598
    %v2741 = vpop.permute.xlu0 %2740
    %2742 = vset.pattern.permute.xlu0 0
    %2743 = vperm.xlu0 %2742, %v2599
    %v2744 = vpop.permute.xlu0 %2743
    %2745 = vset.pattern.permute.xlu0 0
    %2746 = vperm.xlu0 %2745, %v2600
    %v2747 = vpop.permute.xlu0 %2746
    %2748 = vset.pattern.permute.xlu0 0
    %2749 = vperm.xlu0 %2748, %v2601
    %v2750 = vpop.permute.xlu0 %2749
    %2751 = vset.pattern.permute.xlu0 0
    %2752 = vperm.xlu0 %2751, %v2602
    %v2753 = vpop.permute.xlu0 %2752
    %2754 = vset.pattern.permute.xlu0 0
    %2755 = vperm.xlu0 %2754, %v2603
    %v2756 = vpop.permute.xlu0 %2755
    %2757 = vset.pattern.permute.xlu0 0
    %2758 = vperm.xlu0 %2757, %v2604
    %v2759 = vpop.permute.xlu0 %2758
    %2760 = vset.pattern.permute.xlu0 0
    %2761 = vperm.xlu0 %2760, %v2605
    %v2762 = vpop.permute.xlu0 %2761
    %2763 = vset.pattern.permute.xlu0 0
    %2764 = vperm.xlu0 %2763, %v2606
    %v2765 = vpop.permute.xlu0 %2764
    %2766 = vset.pattern.permute.xlu0 0
    %2767 = vperm.xlu0 %2766, %v2607
    %v2768 = vpop.permute.xlu0 %2767
    %2769 = vset.pattern.permute.xlu0 0
    %2770 = vperm.xlu0 %2769, %v2608
    %v2771 = vpop.permute.xlu0 %2770
    %2772 = vset.pattern.permute.xlu0 0
    %2773 = vperm.xlu0 %2772, %v2609
    %v2774 = vpop.permute.xlu0 %2773
    %2775 = vset.pattern.permute.xlu0 0
    %2776 = vperm.xlu0 %2775, %v2610
    %v2777 = vpop.permute.xlu0 %2776
    %2778 = vset.pattern.permute.xlu0 0
    %2779 = vperm.xlu0 %2778, %v2611
    %v2780 = vpop.permute.xlu0 %2779
    %v2781 = vlaneseq
    %v2782 = vshrl.u32 %v2781, 7
    %v2783 = vsub.s32 %v1862, %v2782
    %v2784 = vrot.slane %v2675, %v2783
    %v2785 = vlaneseq
    %v2786 = vshrl.u32 %v2785, 7
    %v2787 = vsub.s32 %v1867, %v2786
    %v2788 = vrot.slane %v2678, %v2787
    %v2789 = vsel %vm1872, %v2788, %v2784
    %v2790 = vlaneseq
    %v2791 = vshrl.u32 %v2790, 7
    %v2792 = vsub.s32 %v1874, %v2791
    %v2793 = vrot.slane %v2681, %v2792
    %v2794 = vsel %vm1879, %v2793, %v2789
    %v2795 = vlaneseq
    %v2796 = vshrl.u32 %v2795, 7
    %v2797 = vsub.s32 %v1881, %v2796
    %v2798 = vrot.slane %v2684, %v2797
    %v2799 = vsel %vm1886, %v2798, %v2794
    %v2800 = vlaneseq
    %v2801 = vshrl.u32 %v2800, 7
    %v2802 = vsub.s32 %v1888, %v2801
    %v2803 = vrot.slane %v2687, %v2802
    %v2804 = vsel %vm1893, %v2803, %v2799
    %v2805 = vlaneseq
    %v2806 = vshrl.u32 %v2805, 7
    %v2807 = vsub.s32 %v1895, %v2806
    %v2808 = vrot.slane %v2690, %v2807
    %v2809 = vsel %vm1900, %v2808, %v2804
    %v2810 = vlaneseq
    %v2811 = vshrl.u32 %v2810, 7
    %v2812 = vsub.s32 %v1902, %v2811
    %v2813 = vrot.slane %v2693, %v2812
    %v2814 = vsel %vm1907, %v2813, %v2809
    %v2815 = vlaneseq
    %v2816 = vshrl.u32 %v2815, 7
    %v2817 = vsub.s32 %v1909, %v2816
    %v2818 = vrot.slane %v2696, %v2817
    %v2819 = vsel %vm1914, %v2818, %v2814
    %v2820 = vlaneseq
    %v2821 = vshrl.u32 %v2820, 7
    %v2822 = vsub.s32 %v1916, %v2821
    %v2823 = vrot.slane %v2699, %v2822
    %v2824 = vsel %vm1921, %v2823, %v2819
    %v2825 = vlaneseq
    %v2826 = vshrl.u32 %v2825, 7
    %v2827 = vsub.s32 %v1923, %v2826
    %v2828 = vrot.slane %v2702, %v2827
    %v2829 = vsel %vm1928, %v2828, %v2824
    %v2830 = vlaneseq
    %v2831 = vshrl.u32 %v2830, 7
    %v2832 = vsub.s32 %v1930, %v2831
    %v2833 = vrot.slane %v2705, %v2832
    %v2834 = vsel %vm1935, %v2833, %v2829
    %v2835 = vlaneseq
    %v2836 = vshrl.u32 %v2835, 7
    %v2837 = vsub.s32 %v1937, %v2836
    %v2838 = vrot.slane %v2708, %v2837
    %v2839 = vsel %vm1942, %v2838, %v2834
    %v2840 = vlaneseq
    %v2841 = vshrl.u32 %v2840, 7
    %v2842 = vsub.s32 %v1944, %v2841
    %v2843 = vrot.slane %v2711, %v2842
    %v2844 = vsel %vm1949, %v2843, %v2839
    %v2845 = vlaneseq
    %v2846 = vshrl.u32 %v2845, 7
    %v2847 = vsub.s32 %v1951, %v2846
    %v2848 = vrot.slane %v2714, %v2847
    %v2849 = vsel %vm1956, %v2848, %v2844
    %v2850 = vlaneseq
    %v2851 = vshrl.u32 %v2850, 7
    %v2852 = vsub.s32 %v1958, %v2851
    %v2853 = vrot.slane %v2717, %v2852
    %v2854 = vsel %vm1963, %v2853, %v2849
    %v2855 = vlaneseq
    %v2856 = vshrl.u32 %v2855, 7
    %v2857 = vsub.s32 %v1965, %v2856
    %v2858 = vrot.slane %v2720, %v2857
    %v2859 = vsel %vm1970, %v2858, %v2854
    %v2860 = vlaneseq
    %v2861 = vshrl.u32 %v2860, 7
    %v2862 = vsub.s32 %v1862, %v2861
    %v2863 = vrot.slane %v2723, %v2862
    %v2864 = vlaneseq
    %v2865 = vshrl.u32 %v2864, 7
    %v2866 = vsub.s32 %v1867, %v2865
    %v2867 = vrot.slane %v2726, %v2866
    %v2868 = vsel %vm1872, %v2867, %v2863
    %v2869 = vlaneseq
    %v2870 = vshrl.u32 %v2869, 7
    %v2871 = vsub.s32 %v1862, %v2870
    %v2872 = vrot.slane %v2729, %v2871
    %v2873 = vlaneseq
    %v2874 = vshrl.u32 %v2873, 7
    %v2875 = vsub.s32 %v1867, %v2874
    %v2876 = vrot.slane %v2732, %v2875
    %v2877 = vsel %vm1872, %v2876, %v2872
    %v2878 = vlaneseq
    %v2879 = vshrl.u32 %v2878, 7
    %v2880 = vsub.s32 %v1874, %v2879
    %v2881 = vrot.slane %v2735, %v2880
    %v2882 = vsel %vm1879, %v2881, %v2877
    %v2883 = vlaneseq
    %v2884 = vshrl.u32 %v2883, 7
    %v2885 = vsub.s32 %v1881, %v2884
    %v2886 = vrot.slane %v2738, %v2885
    %v2887 = vsel %vm1886, %v2886, %v2882
    %v2888 = vlaneseq
    %v2889 = vshrl.u32 %v2888, 7
    %v2890 = vsub.s32 %v1888, %v2889
    %v2891 = vrot.slane %v2741, %v2890
    %v2892 = vsel %vm1893, %v2891, %v2887
    %v2893 = vlaneseq
    %v2894 = vshrl.u32 %v2893, 7
    %v2895 = vsub.s32 %v1895, %v2894
    %v2896 = vrot.slane %v2744, %v2895
    %v2897 = vsel %vm1900, %v2896, %v2892
    %v2898 = vlaneseq
    %v2899 = vshrl.u32 %v2898, 7
    %v2900 = vsub.s32 %v1902, %v2899
    %v2901 = vrot.slane %v2747, %v2900
    %v2902 = vsel %vm1907, %v2901, %v2897
    %v2903 = vlaneseq
    %v2904 = vshrl.u32 %v2903, 7
    %v2905 = vsub.s32 %v1909, %v2904
    %v2906 = vrot.slane %v2750, %v2905
    %v2907 = vsel %vm1914, %v2906, %v2902
    %v2908 = vlaneseq
    %v2909 = vshrl.u32 %v2908, 7
    %v2910 = vsub.s32 %v1916, %v2909
    %v2911 = vrot.slane %v2753, %v2910
    %v2912 = vsel %vm1921, %v2911, %v2907
    %v2913 = vlaneseq
    %v2914 = vshrl.u32 %v2913, 7
    %v2915 = vsub.s32 %v1923, %v2914
    %v2916 = vrot.slane %v2756, %v2915
    %v2917 = vsel %vm1928, %v2916, %v2912
    %v2918 = vlaneseq
    %v2919 = vshrl.u32 %v2918, 7
    %v2920 = vsub.s32 %v1930, %v2919
    %v2921 = vrot.slane %v2759, %v2920
    %v2922 = vsel %vm1935, %v2921, %v2917
    %v2923 = vlaneseq
    %v2924 = vshrl.u32 %v2923, 7
    %v2925 = vsub.s32 %v1937, %v2924
    %v2926 = vrot.slane %v2762, %v2925
    %v2927 = vsel %vm1942, %v2926, %v2922
    %v2928 = vlaneseq
    %v2929 = vshrl.u32 %v2928, 7
    %v2930 = vsub.s32 %v1944, %v2929
    %v2931 = vrot.slane %v2765, %v2930
    %v2932 = vsel %vm1949, %v2931, %v2927
    %v2933 = vlaneseq
    %v2934 = vshrl.u32 %v2933, 7
    %v2935 = vsub.s32 %v1951, %v2934
    %v2936 = vrot.slane %v2768, %v2935
    %v2937 = vsel %vm1956, %v2936, %v2932
    %v2938 = vlaneseq
    %v2939 = vshrl.u32 %v2938, 7
    %v2940 = vsub.s32 %v1958, %v2939
    %v2941 = vrot.slane %v2771, %v2940
    %v2942 = vsel %vm1963, %v2941, %v2937
    %v2943 = vlaneseq
    %v2944 = vshrl.u32 %v2943, 7
    %v2945 = vsub.s32 %v1965, %v2944
    %v2946 = vrot.slane %v2774, %v2945
    %v2947 = vsel %vm1970, %v2946, %v2942
    %v2948 = vlaneseq
    %v2949 = vshrl.u32 %v2948, 7
    %v2950 = vsub.s32 %v1862, %v2949
    %v2951 = vrot.slane %v2777, %v2950
    %v2952 = vlaneseq
    %v2953 = vshrl.u32 %v2952, 7
    %v2954 = vsub.s32 %v1867, %v2953
    %v2955 = vrot.slane %v2780, %v2954
    %v2956 = vsel %vm1872, %v2955, %v2951
    %v2957 = vsel %vm1532, %v2947, %v2859
    %v2958 = vsel %vm1532, %v2956, %v2868
    %vm2960 = vcmask 130048
    %v2961 = vsel %vm2960, %v2958, 0
    %2963 = vmatprep.subr.mxu0 0.0
    %2964 = vmatpush1.msra.mxu0 %v2612
    %2965 = vmatprep.subr.mxu0 0.0
    %2966 = vmatpush1.msra.mxu0 %v2613
    %2967 = vmatprep.subr.mxu0 0.0
    %2968 = vmatpush1.msra.mxu0 %v2614
    %2969 = vmatprep.subr.mxu0 0.0
    %2970 = vmatpush1.msra.mxu0 %v2615
    %2971 = vmatprep.subr.mxu0 0.0
    %2972 = vmatpush1.msra.mxu0 %v2616
    %2973 = vmatprep.subr.mxu0 0.0
    %2974 = vmatpush1.msra.mxu0 %v2617
    %2975 = vmatprep.subr.mxu0 0.0
    %2976 = vmatpush1.msra.mxu0 %v2618
    %2977 = vmatprep.subr.mxu0 0.0
    %2978 = vmatpush1.msra.mxu0 %v2619
    %2979 = vmatprep.subr.mxu0 0.0
    %2980 = vmatpush1.msra.mxu0 %v2620
    %2981 = vmatprep.subr.mxu0 0.0
    %2982 = vmatpush1.msra.mxu0 %v2621
    %2983 = vmatprep.subr.mxu0 0.0
    %2984 = vmatpush1.msra.mxu0 %v2622
    %2985 = vmatprep.subr.mxu0 0.0
    %2986 = vmatpush1.msra.mxu0 %v2623
    %2987 = vmatprep.subr.mxu0 0.0
    %2988 = vmatpush1.msra.mxu0 %v2624
    %2989 = vmatprep.subr.mxu0 0.0
    %2990 = vmatpush1.msra.mxu0 %v2625
    %2991 = vmatprep.subr.mxu0 0.0
    %2992 = vmatpush1.msra.mxu0 %v2626
    %2993 = vmatprep.subr.mxu0 0.0
    %2994 = vmatpush1.msra.mxu0 %v2627
    %2995 = vmatprep.subr.mxu0 0.0
    %2996 = vmatpush1.msra.mxu0 %v2628
    %2997 = vmatprep.subr.mxu0 0.0
    %2998 = vmatpush1.msra.mxu0 %v2629
    %2999 = vmatprep.subr.mxu0 0.0
    %3000 = vmatpush1.msra.mxu0 0.0
    %3001 = vmatprep.subr.mxu0 0.0
    %3002 = vmatpush1.msra.mxu0 0.0
    %3003 = vmatprep.subr.mxu0 0.0
    %3004 = vmatpush1.msra.mxu0 0.0
    %3005 = vmatprep.subr.mxu0 0.0
    %3006 = vmatpush1.msra.mxu0 0.0
    %3007 = vmatprep.subr.mxu0 0.0
    %3008 = vmatpush1.msra.mxu0 0.0
    %3009 = vmatprep.subr.mxu0 0.0
    %3010 = vmatpush1.msra.mxu0 0.0
    %3011 = vmatprep.subr.mxu0 0.0
    %3012 = vmatpush1.msra.mxu0 0.0
    %3013 = vmatprep.subr.mxu0 0.0
    %3014 = vmatpush1.msra.mxu0 0.0
    %3015 = vmatprep.subr.mxu0 0.0
    %3016 = vmatpush1.msra.mxu0 0.0
    %3017 = vmatprep.subr.mxu0 0.0
    %3018 = vmatpush1.msra.mxu0 0.0
    %3019 = vmatprep.subr.mxu0 0.0
    %3020 = vmatpush1.msra.mxu0 0.0
    %3021 = vmatprep.subr.mxu0 0.0
    %3022 = vmatpush1.msra.mxu0 0.0
    %3023 = vmatprep.subr.mxu0 0.0
    %3024 = vmatpush1.msra.mxu0 0.0
    %3025 = vmatprep.subr.mxu0 0.0
    %3026 = vmatpush1.msra.mxu0 0.0
    %3027 = vmatprep.mubr.f32.mxu0 %v2961
    %3028 = vmatmul.mubr.f32.gmra.mrb[0].mxu0 %v2957
    %v3029 = vpop.f32.mrb[0].mxu0
    %v3030 = vadd.f32 %v2635, %v3029
    %v3031 = vpop.f32.mrb[0].mxu0
    %3032 = vdwg.mxu0
    %v3033 = vmax.f32 %v3030, 0.0
    %s3034 = sld [smem:[#allocation2]]
    %v3035 = vstv %s3034
    %v3036 = vmul.f32 %v3035, %v1715
    %s3037 = ssub.f32 1.0, %s3034
    %v3038 = vstv %s3037
    %v3039 = vmul.f32 %v3038, %v3033
    %v3040 = vadd.f32 %v3036, %v3039
    %3041 = vst.msk [vmem:[%s14] sm:$0x3] %vm1704, %v3040
    // Predicated region
    $region50: #{eprl_forward.1} parent=1 // pred_check
      _
    $region51: #{eprl_forward.1} parent=1 // pred_check_branch
      %3043 = sbr.rel (0) target = $region53
    $region52: #{eprl_forward.1} parent=1 // pred_region
      %s3045 = ssub.s32 4608, 4608
      %3046 = vsyncadd [#allocation4], %s3045
      %s3047 = sshll.u32 [#allocation3], 4
      %s3048 = int_to_ptr.vmem [resolvable:$true] %s3047
      %3053 = dma.vmem_to_hbm [thread:$0]  %s3048, 4608, %s12, [#allocation4], 128, 128, 8
    $region53: #{eprl_forward.1} parent=1 // pred_fallthru
      _
    // Predicated region
    $region54: #{eprl_forward.1} parent=1 // pred_check
      _
    $region55: #{eprl_forward.1} parent=1 // pred_check_branch
      %3055 = sbr.rel (0) target = $region57
    $region56: #{eprl_forward.1} parent=1 // pred_region
      _
    $region57: #{eprl_forward.1} parent=1 // pred_fallthru
      _
    // Predicated region
    $region58: #{eprl_forward.1} parent=1 // pred_check
      _
    $region59: #{eprl_forward.1} parent=1 // pred_check_branch
      %3057 = sbr.rel (0) target = $region61
    $region60: #{eprl_forward.1} parent=1 // pred_region
      _
    $region61: #{eprl_forward.1} parent=1 // pred_fallthru
      _
    // Predicated region
    $region62: #{eprl_forward.1} parent=1 // pred_check
      _
    $region63: #{eprl_forward.1} parent=1 // pred_check_branch
      %3059 = sbr.rel (0) target = $region65
    $region64: #{eprl_forward.1} parent=1 // pred_region
      %3060 = dma.done [#allocation4], 4608
    $region65: #{eprl_forward.1} parent=1 // pred_fallthru
      _
    // Predicated region
    $region66: #{eprl_forward.1} parent=1 // pred_check
      _
    $region67: #{eprl_forward.1} parent=1 // pred_check_branch
      %3062 = sbr.rel (0) target = $region69
    $region68: #{eprl_forward.1} parent=1 // pred_region
      _
    $region69: #{eprl_forward.1} parent=1 // pred_fallthru
      _
    // Predicated region
    $region70: #{eprl_forward.1} parent=1 // pred_check
      _
    $region71: #{eprl_forward.1} parent=1 // pred_check_branch
      %3064 = sbr.rel (0) target = $region73
    $region72: #{eprl_forward.1} parent=1 // pred_region
      _
    $region73: #{eprl_forward.1} parent=1 // pred_fallthru
      _
    %3065 = vsyncpa [#allocation4], 1

</llo_original>
